<compile_context>
chip_gen: v6e
topology: v6e:2x2x1
jax: 0.10.0
libtpu: 0.0.40
codegen_flags: <defaults>
</compile_context>

<pallas_src>
import jax
import jax.numpy as jnp
from jax import lax
from jax.experimental import pallas as pl
from jax.experimental.pallas import tpu as pltpu


def rpn_head_kernel(x_ref, w3_ref, wh_ref, bh_ref, out_ref):
    """One (batch, H-tile) slab per grid step.

    x_ref  : (1, (TH+2)*Wp, C)  flattened NHWC slab; the +-1 H halo rows and
                                zero W-padding (left 1, right >=1, Wp % 8 == 0)
                                are baked in by the wrapper.
    w3_ref : (3, 3, C, C)       3x3 conv weights, (di, dj, C_in, C_out).
    wh_ref : (C, KP)            fused [cls | reg] 1x1 weights, zero-padded lanes.
    bh_ref : (1, KP)            fused head bias with the 3x3 bias folded in (f32).
    out_ref: (1, TH*Wp, KP)     lane-dense fused output (padded W columns kept).
    """
    rows_in = x_ref.shape[1]
    rows = out_ref.shape[1]
    wp = (rows_in - rows) // 2            # padded W (the H halo is exactly 2 rows)

    x_flat = x_ref[0]                     # ((TH+2)*Wp, C) resident VMEM tile
    w3 = w3_ref[...]                      # (3, 3, C, C)

    acc = jnp.zeros((rows, w3.shape[3]), jnp.float32)
    for dj in range(3):                   # W taps via XLU sublane rotation
        shift = (1 - dj) % rows_in
        xs = pltpu.roll(x_flat, shift=shift, axis=0) if shift != 0 else x_flat
        for di in range(3):               # H taps via sublane-aligned slices
            patch = xs[di * wp:di * wp + rows]
            acc = acc + jnp.dot(patch, w3[di, dj],
                                preferred_element_type=jnp.float32)

    # Fused cls|reg 1x1 convs: one MXU pass, one lane-dense (rows, KP) store.
    head = jnp.dot(acc.astype(x_ref.dtype), wh_ref[...],
                   preferred_element_type=jnp.float32)
    out_ref[0] = (head + bh_ref[0]).astype(out_ref.dtype)


def _round_up(x, m):
    return (x + m - 1) // m * m


def _vmem_limit_bytes():
    """3/4 of physical VMEM, capped at 96 MiB (v5e/v6e: 96 of 128 MiB; v7x: 48
    of 64 MiB).  Conservative 48 MiB fallback if the query is unavailable."""
    cap = None
    try:
        cap = getattr(pltpu.get_tpu_info(), "vmem_capacity_bytes", None)
    except Exception:
        cap = None
    if not cap:
        cap = 64 * 1024 * 1024
    return min(int(cap) * 3 // 4, 96 * 1024 * 1024)


def _pick_tile_rows(H, Wp, N, max_rows):
    """Largest TH dividing H whose (TH*Wp) tile fits the row budget, preferring
    choices that give the grid >= 2 steps (so both v7x TensorCores get work)."""
    divisors = [th for th in range(1, H + 1) if H % th == 0]
    fitting = [th for th in divisors if th * Wp <= max_rows] or [1]
    multi = [th for th in fitting if N * (H // th) >= 2]
    return max(multi if multi else fitting)


def rpn_head_forward(x_nchw, params, tile_rows=None, compute_dtype=jnp.bfloat16):
    """Forward pass matching RPNHead.forward(): returns {'cls','reg'} in NCHW."""
    N, C, H, W = x_nchw.shape
    K = params["wcls"].shape[0]
    KP = _round_up(2 * K, 128)            # lane-dense fused cls|reg width
    Wp = _round_up(W + 2, 8)              # padded W: +-1 halo, sublane-aligned

    vmem_limit = _vmem_limit_bytes()
    if tile_rows is None:
        # Rough per-row bytes: double-buffered bf16 input + f32 acc + roll
        # temps (~12C) and double-buffered bf16 output + f32 head temp (~8*KP).
        max_rows = max(256, min(8192, (vmem_limit // 2) // (12 * C + 8 * KP)))
        TH = _pick_tile_rows(H, Wp, N, max_rows)
    else:
        TH = tile_rows
    assert H % TH == 0, "tile_rows must divide H"
    num_th = H // TH
    NT = N * num_th

    cd = compute_dtype
    # ---- operand packing (single pad pass; no W-shift duplication) ----------
    x = jnp.transpose(x_nchw, (0, 2, 3, 1)).astype(cd)            # NCHW -> NHWC
    xp = jnp.pad(x, ((0, 0), (1, 1), (1, Wp - W - 1), (0, 0)))    # H/W zero pad
    if num_th == 1:
        xt = xp
    else:
        # H tiles with the 1-row halo baked in (extra copy only when H splits).
        # TODO(synk): replace with an in-kernel halo DMA (memory_space=pl.ANY)
        # to avoid this extra HBM copy for very large feature maps.
        xt = jnp.stack([xp[:, t * TH:t * TH + TH + 2] for t in range(num_th)],
                       axis=1)
    xt = xt.reshape(NT, (TH + 2) * Wp, C)

    # 3x3 weights: torch (C_out, C_in, 3, 3) -> (di, dj, C_in, C_out).
    w3 = jnp.transpose(params["w3"], (2, 3, 1, 0)).astype(cd)

    # Fused cls|reg 1x1 weights (zero-padded to KP lanes); fold the 3x3 bias
    # into the head bias:  (a + b3) @ Wh + bh  ==  a @ Wh + (b3 @ Wh + bh).
    wh2 = jnp.concatenate([params["wcls"].T, params["wreg"].T], axis=1)  # (C,2K)
    bh2 = jnp.concatenate([params["bcls"], params["breg"]]) + params["b3"] @ wh2
    wh = jnp.pad(wh2, ((0, 0), (0, KP - 2 * K))).astype(cd)
    bh = jnp.pad(bh2, (0, KP - 2 * K)).reshape(1, KP).astype(jnp.float32)

    out = pl.pallas_call(
        rpn_head_kernel,
        out_shape=jax.ShapeDtypeStruct((NT, TH * Wp, KP), cd),
        grid=(NT,),
        in_specs=[
            pl.BlockSpec((1, (TH + 2) * Wp, C), lambda i: (i, 0, 0)),
            pl.BlockSpec((3, 3, C, C), lambda i: (0, 0, 0, 0)),
            pl.BlockSpec((C, KP), lambda i: (0, 0)),
            pl.BlockSpec((1, KP), lambda i: (0, 0)),
        ],
        out_specs=pl.BlockSpec((1, TH * Wp, KP), lambda i: (i, 0, 0)),
        compiler_params=pltpu.CompilerParams(
            dimension_semantics=("parallel",),
            vmem_limit_bytes=vmem_limit),
    )(xt, w3, wh, bh)

    # (NT, TH*Wp, KP) -> (N, H, Wp, KP); keep only the real W columns [1, W+1).
    out = out.reshape(N, H, Wp, KP)[:, :, 1:W + 1, :].astype(x_nchw.dtype)
    # TODO(synk): if the mostly-zero 128-lane store ever dominates traces, pack
    # floor(128 / 2K) pixels per output row via block-diagonal head weights;
    # likewise zero-pad C to a multiple of 128 for non-aligned real heads.
    return {"cls": jnp.transpose(out[..., :K], (0, 3, 1, 2)),        # NCHW
            "reg": jnp.transpose(out[..., K:2 * K], (0, 3, 1, 2))}


def init_params(key, in_channels, k):
    """normal(0, 0.01) weights, zero biases (mirrors the torch __init__ intent),
    stored in PyTorch conv layouts."""
    k1, k2, k3 = jax.random.split(key, 3)
    C = in_channels
    return {
        "w3":   0.01 * jax.random.normal(k1, (C, C, 3, 3), jnp.float32),
        "b3":   jnp.zeros((C,), jnp.float32),
        "wcls": 0.01 * jax.random.normal(k2, (k, C), jnp.float32),
        "bcls": jnp.zeros((k,), jnp.float32),
        "wreg": 0.01 * jax.random.normal(k3, (k, C), jnp.float32),
        "breg": jnp.zeros((k,), jnp.float32),
    }


def reference_forward(x_nchw, params):
    """Pure-JAX reference using lax.conv (correctness check only)."""
    x = jnp.transpose(x_nchw, (0, 2, 3, 1))                          # NHWC
    w3_hwio = jnp.transpose(params["w3"], (2, 3, 1, 0))              # (kh,kw,Ci,Co)
    dn = lax.conv_dimension_numbers(x.shape, w3_hwio.shape, ("NHWC", "HWIO", "NHWC"))
    a = lax.conv_general_dilated(x, w3_hwio, (1, 1), "SAME",
                                 dimension_numbers=dn,
                                 precision=lax.Precision.HIGHEST) + params["b3"]
    cls = jnp.einsum("nhwc,kc->nhwk", a, params["wcls"],
                     precision=lax.Precision.HIGHEST) + params["bcls"]
    reg = jnp.einsum("nhwc,kc->nhwk", a, params["wreg"],
                     precision=lax.Precision.HIGHEST) + params["breg"]
    return {"cls": jnp.transpose(cls, (0, 3, 1, 2)),
            "reg": jnp.transpose(reg, (0, 3, 1, 2))}


if __name__ == "__main__":
    key = jax.random.PRNGKey(0)
    kx, kp = jax.random.split(key)

    N, C, H, W, K = 2, 4, 16, 16, 3          # batch, channels, spatial, anchors
    feature_map = jax.random.normal(kx, (N, C, H, W), jnp.float32)   # NCHW
    params = init_params(kp, C, K)

    ref = reference_forward(feature_map, params)

    # f32 compute path: tighter algorithmic check (default tiling -> NT == 2).
    out32 = rpn_head_forward(feature_map, params, compute_dtype=jnp.float32)
    jax.block_until_ready(out32["cls"])
    jax.block_until_ready(out32["reg"])
    assert out32["cls"].shape == (N, K, H, W) and out32["reg"].shape == (N, K, H, W)
    assert jnp.allclose(out32["cls"], ref["cls"], rtol=2e-2, atol=5e-4)
    assert jnp.allclose(out32["reg"], ref["reg"], rtol=2e-2, atol=5e-4)

    # bf16 MXU path (default performance configuration).
    out = rpn_head_forward(feature_map, params)
    jax.block_until_ready(out["cls"])
    jax.block_until_ready(out["reg"])
    assert out["cls"].shape == (N, K, H, W) and out["reg"].shape == (N, K, H, W)
    assert jnp.allclose(out["cls"], ref["cls"], rtol=6e-2, atol=2e-3)
    assert jnp.allclose(out["reg"], ref["reg"], rtol=6e-2, atol=2e-3)

    # bf16 + explicit multi-tile spatial grid (TH=8 -> 2 H tiles, NT == 4).
    out_t = rpn_head_forward(feature_map, params, tile_rows=8)
    jax.block_until_ready(out_t["cls"])
    jax.block_until_ready(out_t["reg"])
    assert jnp.allclose(out_t["cls"], ref["cls"], rtol=6e-2, atol=2e-3)
    assert jnp.allclose(out_t["reg"], ref["reg"], rtol=6e-2, atol=2e-3)

    print("KERNEL_OK")
</pallas_src>

<mosaic_0001>
module attributes {stable_mosaic.version = 11 : i64} {
  func.func @rpn_head_kernel(%arg0: i32, %arg1: memref<1x432x4xf32, #tpu.memory_space<vmem>>, %arg2: memref<3x3x4x4xf32, #tpu.memory_space<vmem>>, %arg3: memref<4x128xf32, #tpu.memory_space<vmem>>, %arg4: memref<1x128xf32, #tpu.memory_space<vmem>>, %arg5: memref<1x384x128xf32, #tpu.memory_space<vmem>>) attributes {dimension_semantics = [#tpu.dimension_semantics<parallel>], iteration_bounds = array<i64: 2>, scalar_prefetch = 0 : i64, scratch_operands = 0 : i64, tpu.core_type = #tpu.core_type<tc>, window_params = [{transform_indices = @transform_0, window_bounds = array<i64: 1, 432, 4>}, {pipeline_mode = #tpu.pipeline_mode<synchronous>, transform_indices = @transform_1, window_bounds = array<i64: 3, 3, 4, 4>}, {pipeline_mode = #tpu.pipeline_mode<synchronous>, transform_indices = @transform_2, window_bounds = array<i64: 4, 128>}, {pipeline_mode = #tpu.pipeline_mode<synchronous>, transform_indices = @transform_3, window_bounds = array<i64: 1, 128>}, {transform_indices = @transform_4, window_bounds = array<i64: 1, 384, 128>}]} {
    %c0 = arith.constant 0 : index
    %c0_0 = arith.constant 0 : index
    %c0_1 = arith.constant 0 : index
    %0 = vector.load %arg1[%c0, %c0_0, %c0_1] : memref<1x432x4xf32, #tpu.memory_space<vmem>>, vector<1x432x4xf32>
    %1 = vector.shape_cast %0 : vector<1x432x4xf32> to vector<432x4xf32>
    %c0_2 = arith.constant 0 : index
    %c0_3 = arith.constant 0 : index
    %c0_4 = arith.constant 0 : index
    %c0_5 = arith.constant 0 : index
    %2 = vector.load %arg2[%c0_2, %c0_3, %c0_4, %c0_5] : memref<3x3x4x4xf32, #tpu.memory_space<vmem>>, vector<3x3x4x4xf32>
    %cst = arith.constant 0.000000e+00 : f32
    %3 = vector.broadcast %cst : f32 to vector<384x4xf32>
    %c1_i32 = arith.constant 1 : i32
    %4 = tpu.dynamic_rotate %1 by %c1_i32 dim 0 : vector<432x4xf32>, i32 -> vector<432x4xf32>
    %5 = vector.extract_strided_slice %4 {offsets = [0, 0], sizes = [384, 4], strides = [1, 1]} : vector<432x4xf32> to vector<384x4xf32>
    %6 = vector.extract_strided_slice %2 {offsets = [0, 0, 0, 0], sizes = [1, 1, 4, 4], strides = [1, 1, 1, 1]} : vector<3x3x4x4xf32> to vector<1x1x4x4xf32>
    %7 = vector.shape_cast %6 : vector<1x1x4x4xf32> to vector<4x4xf32>
    %cst_6 = arith.constant dense<0.000000e+00> : vector<384x4xf32>
    %8 = tpu.matmul %5, %7, %cst_6 {dimension_numbers = #tpu.dot_dimension_numbers<[1], [0], [0], [1], [0, 0, 1, 1], [], []>} : vector<384x4xf32>, vector<4x4xf32>, vector<384x4xf32> -> vector<384x4xf32>
    %9 = arith.addf %3, %8 : vector<384x4xf32>
    %10 = vector.extract_strided_slice %4 {offsets = [24, 0], sizes = [384, 4], strides = [1, 1]} : vector<432x4xf32> to vector<384x4xf32>
    %11 = vector.extract_strided_slice %2 {offsets = [1, 0, 0, 0], sizes = [1, 1, 4, 4], strides = [1, 1, 1, 1]} : vector<3x3x4x4xf32> to vector<1x1x4x4xf32>
    %12 = vector.shape_cast %11 : vector<1x1x4x4xf32> to vector<4x4xf32>
    %cst_7 = arith.constant dense<0.000000e+00> : vector<384x4xf32>
    %13 = tpu.matmul %10, %12, %cst_7 {dimension_numbers = #tpu.dot_dimension_numbers<[1], [0], [0], [1], [0, 0, 1, 1], [], []>} : vector<384x4xf32>, vector<4x4xf32>, vector<384x4xf32> -> vector<384x4xf32>
    %14 = arith.addf %9, %13 : vector<384x4xf32>
    %15 = vector.extract_strided_slice %4 {offsets = [48, 0], sizes = [384, 4], strides = [1, 1]} : vector<432x4xf32> to vector<384x4xf32>
    %16 = vector.extract_strided_slice %2 {offsets = [2, 0, 0, 0], sizes = [1, 1, 4, 4], strides = [1, 1, 1, 1]} : vector<3x3x4x4xf32> to vector<1x1x4x4xf32>
    %17 = vector.shape_cast %16 : vector<1x1x4x4xf32> to vector<4x4xf32>
    %cst_8 = arith.constant dense<0.000000e+00> : vector<384x4xf32>
    %18 = tpu.matmul %15, %17, %cst_8 {dimension_numbers = #tpu.dot_dimension_numbers<[1], [0], [0], [1], [0, 0, 1, 1], [], []>} : vector<384x4xf32>, vector<4x4xf32>, vector<384x4xf32> -> vector<384x4xf32>
    %19 = arith.addf %14, %18 : vector<384x4xf32>
    %20 = vector.extract_strided_slice %1 {offsets = [0, 0], sizes = [384, 4], strides = [1, 1]} : vector<432x4xf32> to vector<384x4xf32>
    %21 = vector.extract_strided_slice %2 {offsets = [0, 1, 0, 0], sizes = [1, 1, 4, 4], strides = [1, 1, 1, 1]} : vector<3x3x4x4xf32> to vector<1x1x4x4xf32>
    %22 = vector.shape_cast %21 : vector<1x1x4x4xf32> to vector<4x4xf32>
    %cst_9 = arith.constant dense<0.000000e+00> : vector<384x4xf32>
    %23 = tpu.matmul %20, %22, %cst_9 {dimension_numbers = #tpu.dot_dimension_numbers<[1], [0], [0], [1], [0, 0, 1, 1], [], []>} : vector<384x4xf32>, vector<4x4xf32>, vector<384x4xf32> -> vector<384x4xf32>
    %24 = arith.addf %19, %23 : vector<384x4xf32>
    %25 = vector.extract_strided_slice %1 {offsets = [24, 0], sizes = [384, 4], strides = [1, 1]} : vector<432x4xf32> to vector<384x4xf32>
    %26 = vector.extract_strided_slice %2 {offsets = [1, 1, 0, 0], sizes = [1, 1, 4, 4], strides = [1, 1, 1, 1]} : vector<3x3x4x4xf32> to vector<1x1x4x4xf32>
    %27 = vector.shape_cast %26 : vector<1x1x4x4xf32> to vector<4x4xf32>
    %cst_10 = arith.constant dense<0.000000e+00> : vector<384x4xf32>
    %28 = tpu.matmul %25, %27, %cst_10 {dimension_numbers = #tpu.dot_dimension_numbers<[1], [0], [0], [1], [0, 0, 1, 1], [], []>} : vector<384x4xf32>, vector<4x4xf32>, vector<384x4xf32> -> vector<384x4xf32>
    %29 = arith.addf %24, %28 : vector<384x4xf32>
    %30 = vector.extract_strided_slice %1 {offsets = [48, 0], sizes = [384, 4], strides = [1, 1]} : vector<432x4xf32> to vector<384x4xf32>
    %31 = vector.extract_strided_slice %2 {offsets = [2, 1, 0, 0], sizes = [1, 1, 4, 4], strides = [1, 1, 1, 1]} : vector<3x3x4x4xf32> to vector<1x1x4x4xf32>
    %32 = vector.shape_cast %31 : vector<1x1x4x4xf32> to vector<4x4xf32>
    %cst_11 = arith.constant dense<0.000000e+00> : vector<384x4xf32>
    %33 = tpu.matmul %30, %32, %cst_11 {dimension_numbers = #tpu.dot_dimension_numbers<[1], [0], [0], [1], [0, 0, 1, 1], [], []>} : vector<384x4xf32>, vector<4x4xf32>, vector<384x4xf32> -> vector<384x4xf32>
    %34 = arith.addf %29, %33 : vector<384x4xf32>
    %c431_i32 = arith.constant 431 : i32
    %35 = tpu.dynamic_rotate %1 by %c431_i32 dim 0 : vector<432x4xf32>, i32 -> vector<432x4xf32>
    %36 = vector.extract_strided_slice %35 {offsets = [0, 0], sizes = [384, 4], strides = [1, 1]} : vector<432x4xf32> to vector<384x4xf32>
    %37 = vector.extract_strided_slice %2 {offsets = [0, 2, 0, 0], sizes = [1, 1, 4, 4], strides = [1, 1, 1, 1]} : vector<3x3x4x4xf32> to vector<1x1x4x4xf32>
    %38 = vector.shape_cast %37 : vector<1x1x4x4xf32> to vector<4x4xf32>
    %cst_12 = arith.constant dense<0.000000e+00> : vector<384x4xf32>
    %39 = tpu.matmul %36, %38, %cst_12 {dimension_numbers = #tpu.dot_dimension_numbers<[1], [0], [0], [1], [0, 0, 1, 1], [], []>} : vector<384x4xf32>, vector<4x4xf32>, vector<384x4xf32> -> vector<384x4xf32>
    %40 = arith.addf %34, %39 : vector<384x4xf32>
    %41 = vector.extract_strided_slice %35 {offsets = [24, 0], sizes = [384, 4], strides = [1, 1]} : vector<432x4xf32> to vector<384x4xf32>
    %42 = vector.extract_strided_slice %2 {offsets = [1, 2, 0, 0], sizes = [1, 1, 4, 4], strides = [1, 1, 1, 1]} : vector<3x3x4x4xf32> to vector<1x1x4x4xf32>
    %43 = vector.shape_cast %42 : vector<1x1x4x4xf32> to vector<4x4xf32>
    %cst_13 = arith.constant dense<0.000000e+00> : vector<384x4xf32>
    %44 = tpu.matmul %41, %43, %cst_13 {dimension_numbers = #tpu.dot_dimension_numbers<[1], [0], [0], [1], [0, 0, 1, 1], [], []>} : vector<384x4xf32>, vector<4x4xf32>, vector<384x4xf32> -> vector<384x4xf32>
    %45 = arith.addf %40, %44 : vector<384x4xf32>
    %46 = vector.extract_strided_slice %35 {offsets = [48, 0], sizes = [384, 4], strides = [1, 1]} : vector<432x4xf32> to vector<384x4xf32>
    %47 = vector.extract_strided_slice %2 {offsets = [2, 2, 0, 0], sizes = [1, 1, 4, 4], strides = [1, 1, 1, 1]} : vector<3x3x4x4xf32> to vector<1x1x4x4xf32>
    %48 = vector.shape_cast %47 : vector<1x1x4x4xf32> to vector<4x4xf32>
    %cst_14 = arith.constant dense<0.000000e+00> : vector<384x4xf32>
    %49 = tpu.matmul %46, %48, %cst_14 {dimension_numbers = #tpu.dot_dimension_numbers<[1], [0], [0], [1], [0, 0, 1, 1], [], []>} : vector<384x4xf32>, vector<4x4xf32>, vector<384x4xf32> -> vector<384x4xf32>
    %50 = arith.addf %45, %49 : vector<384x4xf32>
    %c0_15 = arith.constant 0 : index
    %c0_16 = arith.constant 0 : index
    %51 = vector.load %arg3[%c0_15, %c0_16] : memref<4x128xf32, #tpu.memory_space<vmem>>, vector<4x128xf32>
    %cst_17 = arith.constant dense<0.000000e+00> : vector<384x128xf32>
    %52 = tpu.matmul %50, %51, %cst_17 {dimension_numbers = #tpu.dot_dimension_numbers<[1], [0], [0], [1], [0, 0, 1, 1], [], []>} : vector<384x4xf32>, vector<4x128xf32>, vector<384x128xf32> -> vector<384x128xf32>
    %c0_18 = arith.constant 0 : index
    %c0_19 = arith.constant 0 : index
    %53 = vector.load %arg4[%c0_18, %c0_19] : memref<1x128xf32, #tpu.memory_space<vmem>>, vector<1x128xf32>
    %54 = vector.shape_cast %53 : vector<1x128xf32> to vector<128xf32>
    %55 = vector.shape_cast %54 : vector<128xf32> to vector<1x128xf32>
    %56 = vector.broadcast %55 : vector<1x128xf32> to vector<384x128xf32>
    %57 = arith.addf %52, %56 : vector<384x128xf32>
    %c0_20 = arith.constant 0 : index
    %c0_21 = arith.constant 0 : index
    %c0_22 = arith.constant 0 : index
    %58 = vector.load %arg5[%c0_20, %c0_21, %c0_22] : memref<1x384x128xf32, #tpu.memory_space<vmem>>, vector<1x384x128xf32>
    %59 = vector.shape_cast %58 : vector<1x384x128xf32> to vector<384x128xf32>
    %60 = vector.shape_cast %57 : vector<384x128xf32> to vector<1x384x128xf32>
    tpu.vector_store %arg5[%c0_20, %c0_21, %c0_22], %60 {strides = array<i32>} : memref<1x384x128xf32, #tpu.memory_space<vmem>>, vector<1x384x128xf32>,
    return
  }
  func.func @transform_0(%arg0: i32) -> (i32, i32, i32) {
    %c0_i32 = arith.constant 0 : i32
    %c0_i32_0 = arith.constant 0 : i32
    %c0_i32_1 = arith.constant 0 : i32
    return %arg0, %c0_i32, %c0_i32_0 : i32, i32, i32
  }
  func.func @transform_1(%arg0: i32) -> (i32, i32, i32, i32) {
    %c0_i32 = arith.constant 0 : i32
    %c0_i32_0 = arith.constant 0 : i32
    %c0_i32_1 = arith.constant 0 : i32
    %c0_i32_2 = arith.constant 0 : i32
    %c0_i32_3 = arith.constant 0 : i32
    return %c0_i32, %c0_i32_0, %c0_i32_1, %c0_i32_2 : i32, i32, i32, i32
  }
  func.func @transform_2(%arg0: i32) -> (i32, i32) {
    %c0_i32 = arith.constant 0 : i32
    %c0_i32_0 = arith.constant 0 : i32
    %c0_i32_1 = arith.constant 0 : i32
    return %c0_i32, %c0_i32_0 : i32, i32
  }
  func.func @transform_3(%arg0: i32) -> (i32, i32) {
    %c0_i32 = arith.constant 0 : i32
    %c0_i32_0 = arith.constant 0 : i32
    %c0_i32_1 = arith.constant 0 : i32
    return %c0_i32, %c0_i32_0 : i32, i32
  }
  func.func @transform_4(%arg0: i32) -> (i32, i32, i32) {
    %c0_i32 = arith.constant 0 : i32
    %c0_i32_0 = arith.constant 0 : i32
    %c0_i32_1 = arith.constant 0 : i32
    return %arg0, %c0_i32, %c0_i32_0 : i32, i32, i32
  }
}

</mosaic_0001>

<llo_original>
// kernel: tpu_custom_call.1
$region0: #{tpu_custom_call.1}
  #allocation0 [shape = 'u32[]', space=smem, size = 0x4, offset = 0x4, fixed_abs, tag = 'smem constant byte address 0x4 - core index']
  #allocation1 [shape = 'u32[144,128]{1,0:T(1,128)}', space=vmem, size = 0x12000, scoped, tag = 'internal scratch']
  %s0 = inlined_call_operand.vmem [shape: f32[2,432,4], index: 0, kind: input, shape index: {}]
  %s1 = inlined_call_operand.vmem [shape: f32[3,3,4,4], index: 1, kind: input, shape index: {}]
  %s2 = inlined_call_operand.vmem [shape: f32[4,128], index: 2, kind: input, shape index: {}]
  %s3 = inlined_call_operand.vmem [shape: f32[1,128], index: 3, kind: input, shape index: {}]
  %s4 = inlined_call_operand.hbm [shape: f32[2,384,128], index: 4, kind: output, shape index: {}]
  %s5 = sld [smem:[#allocation0]]
  $region49: #{tpu_custom_call.1} parent=0
    _
  %s7 = ssub.s32 1, %s5
  %s8 = scalar_select 0, %s7, %s5
  $region1: #{tpu_custom_call.1} parent=0
    #allocation2 [shape = 'u8[393216]{0}', space=vmem, size = 0x60000, scoped, tag = 'output window, operand 0']
    #allocation3 [shape = 's32[2]{0}', space=sflag, size = 0x8, scoped, tag = 'scoped memory for tpu_custom_call.1']
    %9 = vsyncpa [#allocation3], 0
    %s10 = scalar_lea.sflag [#allocation3], 1
    %11 = vsyncpa %s10, 0
    loop: start=0, step=1, limit=4
    $region2: #{tpu_custom_call.1} parent=1 // loop_pre_header
      _
    $region3: #{tpu_custom_call.1} parent=1 // loop_header
      %s13 = sphi 0, %s17
      %p14 = scmp.ge.s32.totalorder %s13, 4
      %s23 = sphi 0, %s25
      %s26 = sphi 0, %s23
      %s27 = sphi 0, %s26
      %s43 = sphi 0, %s27
      %s47 = sphi 0, %s47
      %s49 = sphi 0, %s47
      %s50 = sphi 0, %s49
      %s64 = sphi 0, %s50
      %s68 = sphi 0, %s68
      %s70 = sphi 0, %s68
      %s71 = sphi 0, %s70
      %s85 = sphi 0, %s71
      %s89 = sphi 0, %s89
      %s91 = sphi 0, %s89
      %s92 = sphi 0, %s91
      %s106 = sphi 0, %s92
      %s112 = sphi 0, %s114
      %s115 = sphi 0, %s112
      %s116 = sphi 0, %s115
      %s132 = sphi 0, %s116
    $region4: #{tpu_custom_call.1} parent=1 // loop_header_branch
      %16 = sbr.rel (%p14) target = $region8
    $region5: #{tpu_custom_call.1} parent=1 // loop_body
      %s18 = ssub.s32 %s13, 1
      %s19 = ssub.s32 %s13, 2
      %s20 = sadd.s32 %s13, 1
      %s21 = ssub.s32 %s13, %s20
      %p22 = scmp.eq.s32.totalorder %s21, 0
      %s24 = sadd.s32 %s23, 1
      %s25 = scalar_select %p22, %s23, %s24
      %p28 = pneg %p22
      %p29 = scmp.eq.s32.totalorder %s13, 1
      %p30 = por %p28, %p29
      %p31 = scmp.ne.s32.totalorder %s23, %s26
      %p32 = scmp.eq.s32.totalorder %s13, 0
      %p33 = por %p31, %p32
      %p34 = scmp.ne.s32.totalorder %s23, %s26
      %p35 = scmp.eq.s32.totalorder %s18, 1
      %p36 = por %p34, %p35
      %p37 = scmp.ne.s32.totalorder %s26, %s27
      %p38 = scmp.eq.s32.totalorder %s18, 0
      %p39 = por %p37, %p38
      %p40 = scmp.ne.s32.totalorder %s26, %s27
      %p41 = scmp.eq.s32.totalorder %s19, 1
      %p42 = por %p40, %p41
      %p44 = scmp.ne.s32.totalorder %s27, %s43
      %p45 = scmp.eq.s32.totalorder %s19, 0
      %p46 = por %p44, %p45
      %s48 = sadd.s32 %s47, 1
      %p51 = scmp.eq.s32.totalorder %s13, 1
      %p52 = scmp.ne.s32.totalorder %s47, %s49
      %p53 = scmp.eq.s32.totalorder %s13, 0
      %p54 = por %p52, %p53
      %p55 = scmp.ne.s32.totalorder %s47, %s49
      %p56 = scmp.eq.s32.totalorder %s18, 1
      %p57 = por %p55, %p56
      %p58 = scmp.ne.s32.totalorder %s49, %s50
      %p59 = scmp.eq.s32.totalorder %s18, 0
      %p60 = por %p58, %p59
      %p61 = scmp.ne.s32.totalorder %s49, %s50
      %p62 = scmp.eq.s32.totalorder %s19, 1
      %p63 = por %p61, %p62
      %p65 = scmp.ne.s32.totalorder %s50, %s64
      %p66 = scmp.eq.s32.totalorder %s19, 0
      %p67 = por %p65, %p66
      %s69 = sadd.s32 %s68, 1
      %p72 = scmp.eq.s32.totalorder %s13, 1
      %p73 = scmp.ne.s32.totalorder %s68, %s70
      %p74 = scmp.eq.s32.totalorder %s13, 0
      %p75 = por %p73, %p74
      %p76 = scmp.ne.s32.totalorder %s68, %s70
      %p77 = scmp.eq.s32.totalorder %s18, 1
      %p78 = por %p76, %p77
      %p79 = scmp.ne.s32.totalorder %s70, %s71
      %p80 = scmp.eq.s32.totalorder %s18, 0
      %p81 = por %p79, %p80
      %p82 = scmp.ne.s32.totalorder %s70, %s71
      %p83 = scmp.eq.s32.totalorder %s19, 1
      %p84 = por %p82, %p83
      %p86 = scmp.ne.s32.totalorder %s71, %s85
      %p87 = scmp.eq.s32.totalorder %s19, 0
      %p88 = por %p86, %p87
      %s90 = sadd.s32 %s89, 1
      %p93 = scmp.eq.s32.totalorder %s13, 1
      %p94 = scmp.ne.s32.totalorder %s89, %s91
      %p95 = scmp.eq.s32.totalorder %s13, 0
      %p96 = por %p94, %p95
      %p97 = scmp.ne.s32.totalorder %s89, %s91
      %p98 = scmp.eq.s32.totalorder %s18, 1
      %p99 = por %p97, %p98
      %p100 = scmp.ne.s32.totalorder %s91, %s92
      %p101 = scmp.eq.s32.totalorder %s18, 0
      %p102 = por %p100, %p101
      %p103 = scmp.ne.s32.totalorder %s91, %s92
      %p104 = scmp.eq.s32.totalorder %s19, 1
      %p105 = por %p103, %p104
      %p107 = scmp.ne.s32.totalorder %s92, %s106
      %p108 = scmp.eq.s32.totalorder %s19, 0
      %p109 = por %p107, %p108
      %s110 = ssub.s32 %s13, %s20
      %p111 = scmp.eq.s32.totalorder %s110, 0
      %s113 = sadd.s32 %s112, 1
      %s114 = scalar_select %p111, %s112, %s113
      %p117 = pneg %p111
      %p118 = scmp.eq.s32.totalorder %s13, 1
      %p119 = por %p117, %p118
      %p120 = scmp.ne.s32.totalorder %s112, %s115
      %p121 = scmp.eq.s32.totalorder %s13, 0
      %p122 = por %p120, %p121
      %p123 = scmp.ne.s32.totalorder %s112, %s115
      %p124 = scmp.eq.s32.totalorder %s18, 1
      %p125 = por %p123, %p124
      %p126 = scmp.ne.s32.totalorder %s115, %s116
      %p127 = scmp.eq.s32.totalorder %s18, 0
      %p128 = por %p126, %p127
      %p129 = scmp.ne.s32.totalorder %s115, %s116
      %p130 = scmp.eq.s32.totalorder %s19, 1
      %p131 = por %p129, %p130
      %p133 = scmp.ne.s32.totalorder %s116, %s132
      %p134 = scmp.eq.s32.totalorder %s19, 0
      %p135 = por %p133, %p134
      %p136 = scmp.le.s32.totalorder 1, %s13
      %p137 = scmp.lt.s32.totalorder %s13, 3
      %p138 = pnand %p136, %p137
      %p139 = pneg %p138
      // Predicated region
      $region9: #{tpu_custom_call.1} parent=5 // pred_check
        _
      $region10: #{tpu_custom_call.1} parent=5 // pred_check_branch
        %141 = sbr.rel (%p138) target = $region12
      $region11: #{tpu_custom_call.1} parent=5 // pred_region
        %s142 = ssub.s32 %s13, 1
        // Predicated region
        $region13: #{tpu_custom_call.1} parent=11 // pred_check
          %p143 = pneg %p60
        $region14: #{tpu_custom_call.1} parent=11 // pred_check_branch
          %145 = sbr.rel (%p143) target = $region16
        $region15: #{tpu_custom_call.1} parent=11 // pred_region
          _
        $region16: #{tpu_custom_call.1} parent=11 // pred_fallthru
          _
        // Predicated region
        $region17: #{tpu_custom_call.1} parent=11 // pred_check
          %p146 = pneg %p81
        $region18: #{tpu_custom_call.1} parent=11 // pred_check_branch
          %148 = sbr.rel (%p146) target = $region20
        $region19: #{tpu_custom_call.1} parent=11 // pred_region
          _
        $region20: #{tpu_custom_call.1} parent=11 // pred_fallthru
          _
        // Predicated region
        $region21: #{tpu_custom_call.1} parent=11 // pred_check
          %p149 = pneg %p102
        $region22: #{tpu_custom_call.1} parent=11 // pred_check_branch
          %151 = sbr.rel (%p149) target = $region24
        $region23: #{tpu_custom_call.1} parent=11 // pred_region
          _
        $region24: #{tpu_custom_call.1} parent=11 // pred_fallthru
          _
      $region12: #{tpu_custom_call.1} parent=5 // pred_fallthru
        _
      %p152 = scmp.lt.s32.totalorder %s13, 2
      // Predicated region
      $region25: #{tpu_custom_call.1} parent=5 // pred_check
        %p153 = pneg %p152
      $region26: #{tpu_custom_call.1} parent=5 // pred_check_branch
        %155 = sbr.rel (%p153) target = $region28
      $region27: #{tpu_custom_call.1} parent=5 // pred_region
        // Predicated region
        $region29: #{tpu_custom_call.1} parent=27 // pred_check
          %p156 = pneg %p33
        $region30: #{tpu_custom_call.1} parent=27 // pred_check_branch
          %158 = sbr.rel (%p156) target = $region32
        $region31: #{tpu_custom_call.1} parent=27 // pred_region
          %p159 = scmp.lt.s32.totalorder %s13, 1
          %s160 = scalar_select %p159, %s13, 1
          %s161 = smul.addr %s160, 54
          %s162 = smul.addr %s161, 8
          %s163 = scalar_lea.vmem %s0, %s162
        $region32: #{tpu_custom_call.1} parent=27 // pred_fallthru
          _
      $region28: #{tpu_custom_call.1} parent=5 // pred_fallthru
        _
      %p164 = scmp.le.s32.totalorder 1, %s13
      %p165 = scmp.lt.s32.totalorder %s13, 3
      %p166 = pnand %p164, %p165
      %p167 = pneg %p166
      // Predicated region
      $region33: #{tpu_custom_call.1} parent=5 // pred_check
        _
      $region34: #{tpu_custom_call.1} parent=5 // pred_check_branch
        %169 = sbr.rel (%p166) target = $region36
      $region35: #{tpu_custom_call.1} parent=5 // pred_region
        %s170 = ssub.s32 %s13, 1
        %p171 = scmp.lt.s32.totalorder %s18, 1
        %s172 = scalar_select %p171, %s18, 1
        %s173 = smul.addr %s172, 54
        %s174 = smul.addr %s173, 8
        %s175 = scalar_lea.vmem %s0, %s174
        %p176 = pneg %p39
        %p177 = pneg %p36
        %p178 = pneg %p60
        %p179 = pneg %p57
        %p180 = pneg %p81
        %p181 = pneg %p78
        %p182 = pneg %p102
        %p183 = pneg %p99
        %p184 = pneg %p128
        %p185 = pneg %p125
        %s186 = sand.u32 %s115, 1
        %s187 = scalar_lea.sflag [#allocation3], %s186
        %s188 = sand.u32 %s115, 1
        %s189 = smul.addr %s188, 384
        %s190 = scalar_lea.vmem [#allocation2], %s189
        %p191 = scmp.lt.s32.totalorder %s18, 1
        %s192 = scalar_select %p191, %s18, 1
        %s193 = smul.addr %s192, 54
        %s194 = smul.addr %s193, 8
        %s195 = scalar_lea.vmem %s0, %s194
        %v196 = vld [vmem:[%s195] sm:$0xff]
        %v197 = vld [vmem:[%s195 + $0x8] sm:$0xff]
        %v198 = vld [vmem:[%s195 + $0x10] sm:$0xff]
        %v199 = vld [vmem:[%s195 + $0x18] sm:$0xff]
        %v200 = vld [vmem:[%s195 + $0x20] sm:$0xff]
        %v201 = vld [vmem:[%s195 + $0x28] sm:$0xff]
        %v202 = vld [vmem:[%s195 + $0x30] sm:$0xff]
        %v203 = vld [vmem:[%s195 + $0x38] sm:$0xff]
        %v204 = vld [vmem:[%s195 + $0x40] sm:$0xff]
        %v205 = vld [vmem:[%s195 + $0x48] sm:$0xff]
        %v206 = vld [vmem:[%s195 + $0x50] sm:$0xff]
        %v207 = vld [vmem:[%s195 + $0x58] sm:$0xff]
        %v208 = vld [vmem:[%s195 + $0x60] sm:$0xff]
        %v209 = vld [vmem:[%s195 + $0x68] sm:$0xff]
        %v210 = vld [vmem:[%s195 + $0x70] sm:$0xff]
        %v211 = vld [vmem:[%s195 + $0x78] sm:$0xff]
        %v212 = vld [vmem:[%s195 + $0x80] sm:$0xff]
        %v213 = vld [vmem:[%s195 + $0x88] sm:$0xff]
        %v214 = vld [vmem:[%s195 + $0x90] sm:$0xff]
        %v215 = vld [vmem:[%s195 + $0x98] sm:$0xff]
        %v216 = vld [vmem:[%s195 + $0xa0] sm:$0xff]
        %v217 = vld [vmem:[%s195 + $0xa8] sm:$0xff]
        %v218 = vld [vmem:[%s195 + $0xb0] sm:$0xff]
        %v219 = vld [vmem:[%s195 + $0xb8] sm:$0xff]
        %v220 = vld [vmem:[%s195 + $0xc0] sm:$0xff]
        %v221 = vld [vmem:[%s195 + $0xc8] sm:$0xff]
        %v222 = vld [vmem:[%s195 + $0xd0] sm:$0xff]
        %v223 = vld [vmem:[%s195 + $0xd8] sm:$0xff]
        %v224 = vld [vmem:[%s195 + $0xe0] sm:$0xff]
        %v225 = vld [vmem:[%s195 + $0xe8] sm:$0xff]
        %v226 = vld [vmem:[%s195 + $0xf0] sm:$0xff]
        %v227 = vld [vmem:[%s195 + $0xf8] sm:$0xff]
        %v228 = vld [vmem:[%s195 + $0x100] sm:$0xff]
        %v229 = vld [vmem:[%s195 + $0x108] sm:$0xff]
        %v230 = vld [vmem:[%s195 + $0x110] sm:$0xff]
        %v231 = vld [vmem:[%s195 + $0x118] sm:$0xff]
        %v232 = vld [vmem:[%s195 + $0x120] sm:$0xff]
        %v233 = vld [vmem:[%s195 + $0x128] sm:$0xff]
        %v234 = vld [vmem:[%s195 + $0x130] sm:$0xff]
        %v235 = vld [vmem:[%s195 + $0x138] sm:$0xff]
        %v236 = vld [vmem:[%s195 + $0x140] sm:$0xff]
        %v237 = vld [vmem:[%s195 + $0x148] sm:$0xff]
        %v238 = vld [vmem:[%s195 + $0x150] sm:$0xff]
        %v239 = vld [vmem:[%s195 + $0x158] sm:$0xff]
        %v240 = vld [vmem:[%s195 + $0x160] sm:$0xff]
        %v241 = vld [vmem:[%s195 + $0x168] sm:$0xff]
        %v242 = vld [vmem:[%s195 + $0x170] sm:$0xff]
        %v243 = vld [vmem:[%s195 + $0x178] sm:$0xff]
        %v244 = vld [vmem:[%s195 + $0x180] sm:$0xff]
        %v245 = vld [vmem:[%s195 + $0x188] sm:$0xff]
        %v246 = vld [vmem:[%s195 + $0x190] sm:$0xff]
        %v247 = vld [vmem:[%s195 + $0x198] sm:$0xff]
        %v248 = vld [vmem:[%s195 + $0x1a0] sm:$0xff]
        %v249 = vld [vmem:[%s195 + $0x1a8] sm:$0xff]
        %v250 = vld [vmem:[%s1] sm:$0xf]
        %v251 = vld [vmem:[%s1 + $0x4] sm:$0xf]
        %v252 = vld [vmem:[%s1 + $0x8] sm:$0xf]
        %v253 = vld [vmem:[%s1 + $0xc] sm:$0xf]
        %v254 = vld [vmem:[%s1 + $0x10] sm:$0xf]
        %v255 = vld [vmem:[%s1 + $0x14] sm:$0xf]
        %v256 = vld [vmem:[%s1 + $0x18] sm:$0xf]
        %v257 = vld [vmem:[%s1 + $0x1c] sm:$0xf]
        %v258 = vld [vmem:[%s1 + $0x20] sm:$0xf]
        %v259 = vrot.slane %v196, 7
        %v260 = vrot.slane %v197, 7
        %v261 = vrot.slane %v198, 7
        %v262 = vrot.slane %v199, 7
        %v263 = vrot.slane %v200, 7
        %v264 = vrot.slane %v201, 7
        %v265 = vrot.slane %v202, 7
        %v266 = vrot.slane %v203, 7
        %v267 = vrot.slane %v204, 7
        %v268 = vrot.slane %v205, 7
        %v269 = vrot.slane %v206, 7
        %v270 = vrot.slane %v207, 7
        %v271 = vrot.slane %v208, 7
        %v272 = vrot.slane %v209, 7
        %v273 = vrot.slane %v210, 7
        %v274 = vrot.slane %v211, 7
        %v275 = vrot.slane %v212, 7
        %v276 = vrot.slane %v213, 7
        %v277 = vrot.slane %v214, 7
        %v278 = vrot.slane %v215, 7
        %v279 = vrot.slane %v216, 7
        %v280 = vrot.slane %v217, 7
        %v281 = vrot.slane %v218, 7
        %v282 = vrot.slane %v219, 7
        %v283 = vrot.slane %v220, 7
        %v284 = vrot.slane %v221, 7
        %v285 = vrot.slane %v222, 7
        %v286 = vrot.slane %v223, 7
        %v287 = vrot.slane %v224, 7
        %v288 = vrot.slane %v225, 7
        %v289 = vrot.slane %v226, 7
        %v290 = vrot.slane %v227, 7
        %v291 = vrot.slane %v228, 7
        %v292 = vrot.slane %v229, 7
        %v293 = vrot.slane %v230, 7
        %v294 = vrot.slane %v231, 7
        %v295 = vrot.slane %v232, 7
        %v296 = vrot.slane %v233, 7
        %v297 = vrot.slane %v234, 7
        %v298 = vrot.slane %v235, 7
        %v299 = vrot.slane %v236, 7
        %v300 = vrot.slane %v237, 7
        %v301 = vrot.slane %v238, 7
        %v302 = vrot.slane %v239, 7
        %v303 = vrot.slane %v240, 7
        %v304 = vrot.slane %v241, 7
        %v305 = vrot.slane %v242, 7
        %v306 = vrot.slane %v243, 7
        %v307 = vrot.slane %v244, 7
        %v308 = vrot.slane %v245, 7
        %v309 = vrot.slane %v246, 7
        %v310 = vrot.slane %v247, 7
        %v311 = vrot.slane %v248, 7
        %v312 = vrot.slane %v249, 7
        %v313 = vlaneseq
        %v314 = vshrl.u32 %v313, 7
        %vm315 = vcmp.lt.s32.totalorder %v314, 1
        %v316 = vsel %vm315, %v311, %v312
        %v317 = vsel %vm315, %v310, %v311
        %v318 = vsel %vm315, %v309, %v310
        %v319 = vsel %vm315, %v308, %v309
        %v320 = vsel %vm315, %v307, %v308
        %v321 = vsel %vm315, %v306, %v307
        %v322 = vsel %vm315, %v305, %v306
        %v323 = vsel %vm315, %v304, %v305
        %v324 = vsel %vm315, %v303, %v304
        %v325 = vsel %vm315, %v302, %v303
        %v326 = vsel %vm315, %v301, %v302
        %v327 = vsel %vm315, %v300, %v301
        %v328 = vsel %vm315, %v299, %v300
        %v329 = vsel %vm315, %v298, %v299
        %v330 = vsel %vm315, %v297, %v298
        %v331 = vsel %vm315, %v296, %v297
        %v332 = vsel %vm315, %v295, %v296
        %v333 = vsel %vm315, %v294, %v295
        %v334 = vsel %vm315, %v293, %v294
        %v335 = vsel %vm315, %v292, %v293
        %v336 = vsel %vm315, %v291, %v292
        %v337 = vsel %vm315, %v290, %v291
        %v338 = vsel %vm315, %v289, %v290
        %v339 = vsel %vm315, %v288, %v289
        %v340 = vsel %vm315, %v287, %v288
        %v341 = vsel %vm315, %v286, %v287
        %v342 = vsel %vm315, %v285, %v286
        %v343 = vsel %vm315, %v284, %v285
        %v344 = vsel %vm315, %v283, %v284
        %v345 = vsel %vm315, %v282, %v283
        %v346 = vsel %vm315, %v281, %v282
        %v347 = vsel %vm315, %v280, %v281
        %v348 = vsel %vm315, %v279, %v280
        %v349 = vsel %vm315, %v278, %v279
        %v350 = vsel %vm315, %v277, %v278
        %v351 = vsel %vm315, %v276, %v277
        %v352 = vsel %vm315, %v275, %v276
        %v353 = vsel %vm315, %v274, %v275
        %v354 = vsel %vm315, %v273, %v274
        %v355 = vsel %vm315, %v272, %v273
        %v356 = vsel %vm315, %v271, %v272
        %v357 = vsel %vm315, %v270, %v271
        %v358 = vsel %vm315, %v269, %v270
        %v359 = vsel %vm315, %v268, %v269
        %v360 = vsel %vm315, %v267, %v268
        %v361 = vsel %vm315, %v266, %v267
        %v362 = vsel %vm315, %v265, %v266
        %v363 = vsel %vm315, %v264, %v265
        %v364 = vsel %vm315, %v263, %v264
        %v365 = vsel %vm315, %v262, %v263
        %v366 = vsel %vm315, %v261, %v262
        %v367 = vsel %vm315, %v260, %v261
        %v368 = vsel %vm315, %v259, %v260
        %v369 = vsel %vm315, %v312, %v259
        %vm370 = vcmask 31744
        %v372 = vsel %vm370, %v366, 0
        %v375 = vsel %vm370, %v365, 0
        %v378 = vsel %vm370, %v364, 0
        %v381 = vsel %vm370, %v363, 0
        %v384 = vsel %vm370, %v362, 0
        %v387 = vsel %vm370, %v361, 0
        %v390 = vsel %vm370, %v360, 0
        %v393 = vsel %vm370, %v359, 0
        %v396 = vsel %vm370, %v358, 0
        %v399 = vsel %vm370, %v357, 0
        %v402 = vsel %vm370, %v356, 0
        %v405 = vsel %vm370, %v355, 0
        %v408 = vsel %vm370, %v354, 0
        %v411 = vsel %vm370, %v353, 0
        %v414 = vsel %vm370, %v352, 0
        %v417 = vsel %vm370, %v351, 0
        %v420 = vsel %vm370, %v350, 0
        %v423 = vsel %vm370, %v349, 0
        %v426 = vsel %vm370, %v348, 0
        %v429 = vsel %vm370, %v347, 0
        %v432 = vsel %vm370, %v346, 0
        %v435 = vsel %vm370, %v345, 0
        %v438 = vsel %vm370, %v344, 0
        %v441 = vsel %vm370, %v343, 0
        %v444 = vsel %vm370, %v342, 0
        %v447 = vsel %vm370, %v341, 0
        %v450 = vsel %vm370, %v340, 0
        %v453 = vsel %vm370, %v339, 0
        %v456 = vsel %vm370, %v338, 0
        %v459 = vsel %vm370, %v337, 0
        %v462 = vsel %vm370, %v336, 0
        %v465 = vsel %vm370, %v335, 0
        %v468 = vsel %vm370, %v334, 0
        %v471 = vsel %vm370, %v333, 0
        %v474 = vsel %vm370, %v332, 0
        %v477 = vsel %vm370, %v331, 0
        %v480 = vsel %vm370, %v330, 0
        %v483 = vsel %vm370, %v329, 0
        %v486 = vsel %vm370, %v328, 0
        %v489 = vsel %vm370, %v327, 0
        %v492 = vsel %vm370, %v326, 0
        %v495 = vsel %vm370, %v325, 0
        %v498 = vsel %vm370, %v324, 0
        %v501 = vsel %vm370, %v323, 0
        %v504 = vsel %vm370, %v322, 0
        %v507 = vsel %vm370, %v321, 0
        %v510 = vsel %vm370, %v320, 0
        %v513 = vsel %vm370, %v319, 0
        %vm515 = vcmask 1043456
        %v517 = vsel %vm515, %v253, 0
        %519 = vmatprep.subr.mxu0 0.0
        %520 = vmatpush1.msra.mxu0 0.0
        %521 = vmatprep.subr.mxu0 0.0
        %522 = vmatpush1.msra.mxu0 0.0
        %523 = vmatprep.subr.mxu0 0.0
        %524 = vmatpush1.msra.mxu0 0.0
        %525 = vmatprep.subr.mxu0 0.0
        %526 = vmatpush1.msra.mxu0 0.0
        %527 = vmatprep.subr.mxu0 0.0
        %528 = vmatpush1.msra.mxu0 0.0
        %529 = vmatprep.subr.mxu0 0.0
        %530 = vmatpush1.msra.mxu0 0.0
        %531 = vmatprep.subr.mxu0 0.0
        %532 = vmatpush1.msra.mxu0 0.0
        %533 = vmatprep.subr.mxu0 0.0
        %534 = vmatpush1.msra.mxu0 0.0
        %535 = vmatprep.subr.mxu0 0.0
        %536 = vmatpush1.msra.mxu0 0.0
        %537 = vmatprep.subr.mxu0 0.0
        %538 = vmatpush1.msra.mxu0 0.0
        %539 = vmatprep.subr.mxu0 0.0
        %540 = vmatpush1.msra.mxu0 0.0
        %541 = vmatprep.subr.mxu0 0.0
        %542 = vmatpush1.msra.mxu0 0.0
        %543 = vmatprep.subr.mxu0 0.0
        %544 = vmatpush1.msra.mxu0 0.0
        %545 = vmatprep.subr.mxu0 0.0
        %546 = vmatpush1.msra.mxu0 0.0
        %547 = vmatprep.subr.mxu0 0.0
        %548 = vmatpush1.msra.mxu0 0.0
        %549 = vmatprep.subr.mxu0 0.0
        %550 = vmatpush1.msra.mxu0 %v517
        %551 = vmatprep.subr.mxu0 0.0
        %552 = vmatpush2.msra.mxu0 0.0
        %553 = vmatprep.subr.mxu0 0.0
        %554 = vmatpush2.msra.mxu0 0.0
        %555 = vmatprep.subr.mxu0 0.0
        %556 = vmatpush2.msra.mxu0 0.0
        %557 = vmatprep.subr.mxu0 0.0
        %558 = vmatpush2.msra.mxu0 0.0
        %559 = vmatprep.subr.mxu0 0.0
        %560 = vmatpush2.msra.mxu0 0.0
        %561 = vmatprep.subr.mxu0 0.0
        %562 = vmatpush2.msra.mxu0 0.0
        %563 = vmatprep.subr.mxu0 0.0
        %564 = vmatpush2.msra.mxu0 0.0
        %565 = vmatprep.subr.mxu0 0.0
        %566 = vmatpush2.msra.mxu0 0.0
        %567 = vmatprep.subr.mxu0 0.0
        %568 = vmatpush2.msra.mxu0 0.0
        %569 = vmatprep.subr.mxu0 0.0
        %570 = vmatpush2.msra.mxu0 0.0
        %571 = vmatprep.subr.mxu0 0.0
        %572 = vmatpush2.msra.mxu0 0.0
        %573 = vmatprep.subr.mxu0 0.0
        %574 = vmatpush2.msra.mxu0 0.0
        %575 = vmatprep.subr.mxu0 0.0
        %576 = vmatpush2.msra.mxu0 0.0
        %577 = vmatprep.subr.mxu0 0.0
        %578 = vmatpush2.msra.mxu0 0.0
        %579 = vmatprep.subr.mxu0 0.0
        %580 = vmatpush2.msra.mxu0 0.0
        %581 = vmatprep.subr.mxu0 0.0
        %582 = vmatpush2.msra.mxu0 0.0
        %583 = vmatprep.mubr.f32.mxu0 0.0
        %584 = vmatmul.mubr.f32.gmra.mxu0 %v372
        %v585 = vpop.f32.mrf.mxu0
        %v586 = vadd.f32 0.0, %v585
        %v587 = vpop.f32.mrf.mxu0
        %588 = vmatprep.mubr.f32.mxu0 0.0
        %589 = vmatmul.mubr.f32.gmra.mxu0 %v375
        %v590 = vpop.f32.mrf.mxu0
        %v591 = vadd.f32 0.0, %v590
        %v592 = vpop.f32.mrf.mxu0
        %593 = vmatprep.mubr.f32.mxu0 0.0
        %594 = vmatmul.mubr.f32.gmra.mxu0 %v378
        %v595 = vpop.f32.mrf.mxu0
        %v596 = vadd.f32 0.0, %v595
        %v597 = vpop.f32.mrf.mxu0
        %598 = vmatprep.mubr.f32.mxu0 0.0
        %599 = vmatmul.mubr.f32.gmra.mxu0 %v381
        %v600 = vpop.f32.mrf.mxu0
        %v601 = vadd.f32 0.0, %v600
        %v602 = vpop.f32.mrf.mxu0
        %603 = vmatprep.mubr.f32.mxu0 0.0
        %604 = vmatmul.mubr.f32.gmra.mxu0 %v384
        %v605 = vpop.f32.mrf.mxu0
        %v606 = vadd.f32 0.0, %v605
        %v607 = vpop.f32.mrf.mxu0
        %608 = vmatprep.mubr.f32.mxu0 0.0
        %609 = vmatmul.mubr.f32.gmra.mxu0 %v387
        %v610 = vpop.f32.mrf.mxu0
        %v611 = vadd.f32 0.0, %v610
        %v612 = vpop.f32.mrf.mxu0
        %613 = vmatprep.mubr.f32.mxu0 0.0
        %614 = vmatmul.mubr.f32.gmra.mxu0 %v390
        %v615 = vpop.f32.mrf.mxu0
        %v616 = vadd.f32 0.0, %v615
        %v617 = vpop.f32.mrf.mxu0
        %618 = vmatprep.mubr.f32.mxu0 0.0
        %619 = vmatmul.mubr.f32.gmra.mxu0 %v393
        %v620 = vpop.f32.mrf.mxu0
        %v621 = vadd.f32 0.0, %v620
        %v622 = vpop.f32.mrf.mxu0
        %623 = vmatprep.mubr.f32.mxu0 0.0
        %624 = vmatmul.mubr.f32.gmra.mxu0 %v396
        %v625 = vpop.f32.mrf.mxu0
        %v626 = vadd.f32 0.0, %v625
        %v627 = vpop.f32.mrf.mxu0
        %628 = vmatprep.mubr.f32.mxu0 0.0
        %629 = vmatmul.mubr.f32.gmra.mxu0 %v399
        %v630 = vpop.f32.mrf.mxu0
        %v631 = vadd.f32 0.0, %v630
        %v632 = vpop.f32.mrf.mxu0
        %633 = vmatprep.mubr.f32.mxu0 0.0
        %634 = vmatmul.mubr.f32.gmra.mxu0 %v402
        %v635 = vpop.f32.mrf.mxu0
        %v636 = vadd.f32 0.0, %v635
        %v637 = vpop.f32.mrf.mxu0
        %638 = vmatprep.mubr.f32.mxu0 0.0
        %639 = vmatmul.mubr.f32.gmra.mxu0 %v405
        %v640 = vpop.f32.mrf.mxu0
        %v641 = vadd.f32 0.0, %v640
        %v642 = vpop.f32.mrf.mxu0
        %643 = vmatprep.mubr.f32.mxu0 0.0
        %644 = vmatmul.mubr.f32.gmra.mxu0 %v408
        %v645 = vpop.f32.mrf.mxu0
        %v646 = vadd.f32 0.0, %v645
        %v647 = vpop.f32.mrf.mxu0
        %648 = vmatprep.mubr.f32.mxu0 0.0
        %649 = vmatmul.mubr.f32.gmra.mxu0 %v411
        %v650 = vpop.f32.mrf.mxu0
        %v651 = vadd.f32 0.0, %v650
        %v652 = vpop.f32.mrf.mxu0
        %653 = vmatprep.mubr.f32.mxu0 0.0
        %654 = vmatmul.mubr.f32.gmra.mxu0 %v414
        %v655 = vpop.f32.mrf.mxu0
        %v656 = vadd.f32 0.0, %v655
        %v657 = vpop.f32.mrf.mxu0
        %658 = vmatprep.mubr.f32.mxu0 0.0
        %659 = vmatmul.mubr.f32.gmra.mxu0 %v417
        %v660 = vpop.f32.mrf.mxu0
        %v661 = vadd.f32 0.0, %v660
        %v662 = vpop.f32.mrf.mxu0
        %663 = vmatprep.mubr.f32.mxu0 0.0
        %664 = vmatmul.mubr.f32.gmra.mxu0 %v420
        %v665 = vpop.f32.mrf.mxu0
        %v666 = vadd.f32 0.0, %v665
        %v667 = vpop.f32.mrf.mxu0
        %668 = vmatprep.mubr.f32.mxu0 0.0
        %669 = vmatmul.mubr.f32.gmra.mxu0 %v423
        %v670 = vpop.f32.mrf.mxu0
        %v671 = vadd.f32 0.0, %v670
        %v672 = vpop.f32.mrf.mxu0
        %673 = vmatprep.mubr.f32.mxu0 0.0
        %674 = vmatmul.mubr.f32.gmra.mxu0 %v426
        %v675 = vpop.f32.mrf.mxu0
        %v676 = vadd.f32 0.0, %v675
        %v677 = vpop.f32.mrf.mxu0
        %678 = vmatprep.mubr.f32.mxu0 0.0
        %679 = vmatmul.mubr.f32.gmra.mxu0 %v429
        %v680 = vpop.f32.mrf.mxu0
        %v681 = vadd.f32 0.0, %v680
        %v682 = vpop.f32.mrf.mxu0
        %683 = vmatprep.mubr.f32.mxu0 0.0
        %684 = vmatmul.mubr.f32.gmra.mxu0 %v432
        %v685 = vpop.f32.mrf.mxu0
        %v686 = vadd.f32 0.0, %v685
        %v687 = vpop.f32.mrf.mxu0
        %688 = vmatprep.mubr.f32.mxu0 0.0
        %689 = vmatmul.mubr.f32.gmra.mxu0 %v435
        %v690 = vpop.f32.mrf.mxu0
        %v691 = vadd.f32 0.0, %v690
        %v692 = vpop.f32.mrf.mxu0
        %693 = vmatprep.mubr.f32.mxu0 0.0
        %694 = vmatmul.mubr.f32.gmra.mxu0 %v438
        %v695 = vpop.f32.mrf.mxu0
        %v696 = vadd.f32 0.0, %v695
        %v697 = vpop.f32.mrf.mxu0
        %698 = vmatprep.mubr.f32.mxu0 0.0
        %699 = vmatmul.mubr.f32.gmra.mxu0 %v441
        %v700 = vpop.f32.mrf.mxu0
        %v701 = vadd.f32 0.0, %v700
        %v702 = vpop.f32.mrf.mxu0
        %703 = vmatprep.mubr.f32.mxu0 0.0
        %704 = vmatmul.mubr.f32.gmra.mxu0 %v444
        %v705 = vpop.f32.mrf.mxu0
        %v706 = vadd.f32 0.0, %v705
        %v707 = vpop.f32.mrf.mxu0
        %708 = vmatprep.mubr.f32.mxu0 0.0
        %709 = vmatmul.mubr.f32.gmra.mxu0 %v447
        %v710 = vpop.f32.mrf.mxu0
        %v711 = vadd.f32 0.0, %v710
        %v712 = vpop.f32.mrf.mxu0
        %713 = vmatprep.mubr.f32.mxu0 0.0
        %714 = vmatmul.mubr.f32.gmra.mxu0 %v450
        %v715 = vpop.f32.mrf.mxu0
        %v716 = vadd.f32 0.0, %v715
        %v717 = vpop.f32.mrf.mxu0
        %718 = vmatprep.mubr.f32.mxu0 0.0
        %719 = vmatmul.mubr.f32.gmra.mxu0 %v453
        %v720 = vpop.f32.mrf.mxu0
        %v721 = vadd.f32 0.0, %v720
        %v722 = vpop.f32.mrf.mxu0
        %723 = vmatprep.mubr.f32.mxu0 0.0
        %724 = vmatmul.mubr.f32.gmra.mxu0 %v456
        %v725 = vpop.f32.mrf.mxu0
        %v726 = vadd.f32 0.0, %v725
        %v727 = vpop.f32.mrf.mxu0
        %728 = vmatprep.mubr.f32.mxu0 0.0
        %729 = vmatmul.mubr.f32.gmra.mxu0 %v459
        %v730 = vpop.f32.mrf.mxu0
        %v731 = vadd.f32 0.0, %v730
        %v732 = vpop.f32.mrf.mxu0
        %733 = vmatprep.mubr.f32.mxu0 0.0
        %734 = vmatmul.mubr.f32.gmra.mxu0 %v462
        %v735 = vpop.f32.mrf.mxu0
        %v736 = vadd.f32 0.0, %v735
        %v737 = vpop.f32.mrf.mxu0
        %738 = vmatprep.mubr.f32.mxu0 0.0
        %739 = vmatmul.mubr.f32.gmra.mxu0 %v465
        %v740 = vpop.f32.mrf.mxu0
        %v741 = vadd.f32 0.0, %v740
        %v742 = vpop.f32.mrf.mxu0
        %743 = vmatprep.mubr.f32.mxu0 0.0
        %744 = vmatmul.mubr.f32.gmra.mxu0 %v468
        %v745 = vpop.f32.mrf.mxu0
        %v746 = vadd.f32 0.0, %v745
        %v747 = vpop.f32.mrf.mxu0
        %748 = vmatprep.mubr.f32.mxu0 0.0
        %749 = vmatmul.mubr.f32.gmra.mxu0 %v471
        %v750 = vpop.f32.mrf.mxu0
        %v751 = vadd.f32 0.0, %v750
        %v752 = vpop.f32.mrf.mxu0
        %753 = vmatprep.mubr.f32.mxu0 0.0
        %754 = vmatmul.mubr.f32.gmra.mxu0 %v474
        %v755 = vpop.f32.mrf.mxu0
        %v756 = vadd.f32 0.0, %v755
        %v757 = vpop.f32.mrf.mxu0
        %758 = vmatprep.mubr.f32.mxu0 0.0
        %759 = vmatmul.mubr.f32.gmra.mxu0 %v477
        %v760 = vpop.f32.mrf.mxu0
        %v761 = vadd.f32 0.0, %v760
        %v762 = vpop.f32.mrf.mxu0
        %763 = vmatprep.mubr.f32.mxu0 0.0
        %764 = vmatmul.mubr.f32.gmra.mxu0 %v480
        %v765 = vpop.f32.mrf.mxu0
        %v766 = vadd.f32 0.0, %v765
        %v767 = vpop.f32.mrf.mxu0
        %768 = vmatprep.mubr.f32.mxu0 0.0
        %769 = vmatmul.mubr.f32.gmra.mxu0 %v483
        %v770 = vpop.f32.mrf.mxu0
        %v771 = vadd.f32 0.0, %v770
        %v772 = vpop.f32.mrf.mxu0
        %773 = vmatprep.mubr.f32.mxu0 0.0
        %774 = vmatmul.mubr.f32.gmra.mxu0 %v486
        %v775 = vpop.f32.mrf.mxu0
        %v776 = vadd.f32 0.0, %v775
        %v777 = vpop.f32.mrf.mxu0
        %778 = vmatprep.mubr.f32.mxu0 0.0
        %779 = vmatmul.mubr.f32.gmra.mxu0 %v489
        %v780 = vpop.f32.mrf.mxu0
        %v781 = vadd.f32 0.0, %v780
        %v782 = vpop.f32.mrf.mxu0
        %783 = vmatprep.mubr.f32.mxu0 0.0
        %784 = vmatmul.mubr.f32.gmra.mxu0 %v492
        %v785 = vpop.f32.mrf.mxu0
        %v786 = vadd.f32 0.0, %v785
        %v787 = vpop.f32.mrf.mxu0
        %788 = vmatprep.mubr.f32.mxu0 0.0
        %789 = vmatmul.mubr.f32.gmra.mxu0 %v495
        %v790 = vpop.f32.mrf.mxu0
        %v791 = vadd.f32 0.0, %v790
        %v792 = vpop.f32.mrf.mxu0
        %793 = vmatprep.mubr.f32.mxu0 0.0
        %794 = vmatmul.mubr.f32.gmra.mxu0 %v498
        %v795 = vpop.f32.mrf.mxu0
        %v796 = vadd.f32 0.0, %v795
        %v797 = vpop.f32.mrf.mxu0
        %798 = vmatprep.mubr.f32.mxu0 0.0
        %799 = vmatmul.mubr.f32.gmra.mxu0 %v501
        %v800 = vpop.f32.mrf.mxu0
        %v801 = vadd.f32 0.0, %v800
        %v802 = vpop.f32.mrf.mxu0
        %803 = vmatprep.mubr.f32.mxu0 0.0
        %804 = vmatmul.mubr.f32.gmra.mxu0 %v504
        %v805 = vpop.f32.mrf.mxu0
        %v806 = vadd.f32 0.0, %v805
        %v807 = vpop.f32.mrf.mxu0
        %808 = vmatprep.mubr.f32.mxu0 0.0
        %809 = vmatmul.mubr.f32.gmra.mxu0 %v507
        %v810 = vpop.f32.mrf.mxu0
        %v811 = vadd.f32 0.0, %v810
        %v812 = vpop.f32.mrf.mxu0
        %813 = vmatprep.mubr.f32.mxu0 0.0
        %814 = vmatmul.mubr.f32.gmra.mxu0 %v510
        %v815 = vpop.f32.mrf.mxu0
        %v816 = vadd.f32 0.0, %v815
        %v817 = vpop.f32.mrf.mxu0
        %818 = vmatprep.mubr.f32.mxu0 0.0
        %819 = vmatmul.mubr.f32.gmra.mxu0 %v513
        %v820 = vpop.f32.mrf.mxu0
        %v821 = vadd.f32 0.0, %v820
        %v822 = vpop.f32.mrf.mxu0
        %823 = vdwg.mxu0
        %v825 = vsel %vm370, %v369, 0
        %v828 = vsel %vm370, %v368, 0
        %v831 = vsel %vm370, %v367, 0
        %v834 = vsel %vm515, %v250, 0
        %836 = vmatprep.subr.mxu0 0.0
        %837 = vmatpush1.msra.mxu0 0.0
        %838 = vmatprep.subr.mxu0 0.0
        %839 = vmatpush1.msra.mxu0 0.0
        %840 = vmatprep.subr.mxu0 0.0
        %841 = vmatpush1.msra.mxu0 0.0
        %842 = vmatprep.subr.mxu0 0.0
        %843 = vmatpush1.msra.mxu0 0.0
        %844 = vmatprep.subr.mxu0 0.0
        %845 = vmatpush1.msra.mxu0 0.0
        %846 = vmatprep.subr.mxu0 0.0
        %847 = vmatpush1.msra.mxu0 0.0
        %848 = vmatprep.subr.mxu0 0.0
        %849 = vmatpush1.msra.mxu0 0.0
        %850 = vmatprep.subr.mxu0 0.0
        %851 = vmatpush1.msra.mxu0 0.0
        %852 = vmatprep.subr.mxu0 0.0
        %853 = vmatpush1.msra.mxu0 0.0
        %854 = vmatprep.subr.mxu0 0.0
        %855 = vmatpush1.msra.mxu0 0.0
        %856 = vmatprep.subr.mxu0 0.0
        %857 = vmatpush1.msra.mxu0 0.0
        %858 = vmatprep.subr.mxu0 0.0
        %859 = vmatpush1.msra.mxu0 0.0
        %860 = vmatprep.subr.mxu0 0.0
        %861 = vmatpush1.msra.mxu0 0.0
        %862 = vmatprep.subr.mxu0 0.0
        %863 = vmatpush1.msra.mxu0 0.0
        %864 = vmatprep.subr.mxu0 0.0
        %865 = vmatpush1.msra.mxu0 0.0
        %866 = vmatprep.subr.mxu0 0.0
        %867 = vmatpush1.msra.mxu0 %v834
        %868 = vmatprep.subr.mxu0 0.0
        %869 = vmatpush2.msra.mxu0 0.0
        %870 = vmatprep.subr.mxu0 0.0
        %871 = vmatpush2.msra.mxu0 0.0
        %872 = vmatprep.subr.mxu0 0.0
        %873 = vmatpush2.msra.mxu0 0.0
        %874 = vmatprep.subr.mxu0 0.0
        %875 = vmatpush2.msra.mxu0 0.0
        %876 = vmatprep.subr.mxu0 0.0
        %877 = vmatpush2.msra.mxu0 0.0
        %878 = vmatprep.subr.mxu0 0.0
        %879 = vmatpush2.msra.mxu0 0.0
        %880 = vmatprep.subr.mxu0 0.0
        %881 = vmatpush2.msra.mxu0 0.0
        %882 = vmatprep.subr.mxu0 0.0
        %883 = vmatpush2.msra.mxu0 0.0
        %884 = vmatprep.subr.mxu0 0.0
        %885 = vmatpush2.msra.mxu0 0.0
        %886 = vmatprep.subr.mxu0 0.0
        %887 = vmatpush2.msra.mxu0 0.0
        %888 = vmatprep.subr.mxu0 0.0
        %889 = vmatpush2.msra.mxu0 0.0
        %890 = vmatprep.subr.mxu0 0.0
        %891 = vmatpush2.msra.mxu0 0.0
        %892 = vmatprep.subr.mxu0 0.0
        %893 = vmatpush2.msra.mxu0 0.0
        %894 = vmatprep.subr.mxu0 0.0
        %895 = vmatpush2.msra.mxu0 0.0
        %896 = vmatprep.subr.mxu0 0.0
        %897 = vmatpush2.msra.mxu0 0.0
        %898 = vmatprep.subr.mxu0 0.0
        %899 = vmatpush2.msra.mxu0 0.0
        %900 = vmatprep.mubr.f32.mxu0 0.0
        %901 = vmatmul.mubr.f32.gmra.mxu0 %v825
        %v902 = vpop.f32.mrf.mxu0
        %v903 = vadd.f32 %v586, %v902
        %v904 = vpop.f32.mrf.mxu0
        %905 = vmatprep.mubr.f32.mxu0 0.0
        %906 = vmatmul.mubr.f32.gmra.mxu0 %v828
        %v907 = vpop.f32.mrf.mxu0
        %v908 = vadd.f32 %v591, %v907
        %v909 = vpop.f32.mrf.mxu0
        %910 = vmatprep.mubr.f32.mxu0 0.0
        %911 = vmatmul.mubr.f32.gmra.mxu0 %v831
        %v912 = vpop.f32.mrf.mxu0
        %v913 = vadd.f32 %v596, %v912
        %v914 = vpop.f32.mrf.mxu0
        %915 = vmatprep.mubr.f32.mxu0 0.0
        %916 = vmatmul.mubr.f32.gmra.mxu0 %v372
        %v917 = vpop.f32.mrf.mxu0
        %v918 = vadd.f32 %v601, %v917
        %v919 = vpop.f32.mrf.mxu0
        %920 = vmatprep.mubr.f32.mxu0 0.0
        %921 = vmatmul.mubr.f32.gmra.mxu0 %v375
        %v922 = vpop.f32.mrf.mxu0
        %v923 = vadd.f32 %v606, %v922
        %v924 = vpop.f32.mrf.mxu0
        %925 = vmatprep.mubr.f32.mxu0 0.0
        %926 = vmatmul.mubr.f32.gmra.mxu0 %v378
        %v927 = vpop.f32.mrf.mxu0
        %v928 = vadd.f32 %v611, %v927
        %v929 = vpop.f32.mrf.mxu0
        %930 = vmatprep.mubr.f32.mxu0 0.0
        %931 = vmatmul.mubr.f32.gmra.mxu0 %v381
        %v932 = vpop.f32.mrf.mxu0
        %v933 = vadd.f32 %v616, %v932
        %v934 = vpop.f32.mrf.mxu0
        %935 = vmatprep.mubr.f32.mxu0 0.0
        %936 = vmatmul.mubr.f32.gmra.mxu0 %v384
        %v937 = vpop.f32.mrf.mxu0
        %v938 = vadd.f32 %v621, %v937
        %v939 = vpop.f32.mrf.mxu0
        %940 = vmatprep.mubr.f32.mxu0 0.0
        %941 = vmatmul.mubr.f32.gmra.mxu0 %v387
        %v942 = vpop.f32.mrf.mxu0
        %v943 = vadd.f32 %v626, %v942
        %v944 = vpop.f32.mrf.mxu0
        %945 = vmatprep.mubr.f32.mxu0 0.0
        %946 = vmatmul.mubr.f32.gmra.mxu0 %v390
        %v947 = vpop.f32.mrf.mxu0
        %v948 = vadd.f32 %v631, %v947
        %v949 = vpop.f32.mrf.mxu0
        %950 = vmatprep.mubr.f32.mxu0 0.0
        %951 = vmatmul.mubr.f32.gmra.mxu0 %v393
        %v952 = vpop.f32.mrf.mxu0
        %v953 = vadd.f32 %v636, %v952
        %v954 = vpop.f32.mrf.mxu0
        %955 = vmatprep.mubr.f32.mxu0 0.0
        %956 = vmatmul.mubr.f32.gmra.mxu0 %v396
        %v957 = vpop.f32.mrf.mxu0
        %v958 = vadd.f32 %v641, %v957
        %v959 = vpop.f32.mrf.mxu0
        %960 = vmatprep.mubr.f32.mxu0 0.0
        %961 = vmatmul.mubr.f32.gmra.mxu0 %v399
        %v962 = vpop.f32.mrf.mxu0
        %v963 = vadd.f32 %v646, %v962
        %v964 = vpop.f32.mrf.mxu0
        %965 = vmatprep.mubr.f32.mxu0 0.0
        %966 = vmatmul.mubr.f32.gmra.mxu0 %v402
        %v967 = vpop.f32.mrf.mxu0
        %v968 = vadd.f32 %v651, %v967
        %v969 = vpop.f32.mrf.mxu0
        %970 = vmatprep.mubr.f32.mxu0 0.0
        %971 = vmatmul.mubr.f32.gmra.mxu0 %v405
        %v972 = vpop.f32.mrf.mxu0
        %v973 = vadd.f32 %v656, %v972
        %v974 = vpop.f32.mrf.mxu0
        %975 = vmatprep.mubr.f32.mxu0 0.0
        %976 = vmatmul.mubr.f32.gmra.mxu0 %v408
        %v977 = vpop.f32.mrf.mxu0
        %v978 = vadd.f32 %v661, %v977
        %v979 = vpop.f32.mrf.mxu0
        %980 = vmatprep.mubr.f32.mxu0 0.0
        %981 = vmatmul.mubr.f32.gmra.mxu0 %v411
        %v982 = vpop.f32.mrf.mxu0
        %v983 = vadd.f32 %v666, %v982
        %v984 = vpop.f32.mrf.mxu0
        %985 = vmatprep.mubr.f32.mxu0 0.0
        %986 = vmatmul.mubr.f32.gmra.mxu0 %v414
        %v987 = vpop.f32.mrf.mxu0
        %v988 = vadd.f32 %v671, %v987
        %v989 = vpop.f32.mrf.mxu0
        %990 = vmatprep.mubr.f32.mxu0 0.0
        %991 = vmatmul.mubr.f32.gmra.mxu0 %v417
        %v992 = vpop.f32.mrf.mxu0
        %v993 = vadd.f32 %v676, %v992
        %v994 = vpop.f32.mrf.mxu0
        %995 = vmatprep.mubr.f32.mxu0 0.0
        %996 = vmatmul.mubr.f32.gmra.mxu0 %v420
        %v997 = vpop.f32.mrf.mxu0
        %v998 = vadd.f32 %v681, %v997
        %v999 = vpop.f32.mrf.mxu0
        %1000 = vmatprep.mubr.f32.mxu0 0.0
        %1001 = vmatmul.mubr.f32.gmra.mxu0 %v423
        %v1002 = vpop.f32.mrf.mxu0
        %v1003 = vadd.f32 %v686, %v1002
        %v1004 = vpop.f32.mrf.mxu0
        %1005 = vmatprep.mubr.f32.mxu0 0.0
        %1006 = vmatmul.mubr.f32.gmra.mxu0 %v426
        %v1007 = vpop.f32.mrf.mxu0
        %v1008 = vadd.f32 %v691, %v1007
        %v1009 = vpop.f32.mrf.mxu0
        %1010 = vmatprep.mubr.f32.mxu0 0.0
        %1011 = vmatmul.mubr.f32.gmra.mxu0 %v429
        %v1012 = vpop.f32.mrf.mxu0
        %v1013 = vadd.f32 %v696, %v1012
        %v1014 = vpop.f32.mrf.mxu0
        %1015 = vmatprep.mubr.f32.mxu0 0.0
        %1016 = vmatmul.mubr.f32.gmra.mxu0 %v432
        %v1017 = vpop.f32.mrf.mxu0
        %v1018 = vadd.f32 %v701, %v1017
        %v1019 = vpop.f32.mrf.mxu0
        %1020 = vmatprep.mubr.f32.mxu0 0.0
        %1021 = vmatmul.mubr.f32.gmra.mxu0 %v435
        %v1022 = vpop.f32.mrf.mxu0
        %v1023 = vadd.f32 %v706, %v1022
        %v1024 = vpop.f32.mrf.mxu0
        %1025 = vmatprep.mubr.f32.mxu0 0.0
        %1026 = vmatmul.mubr.f32.gmra.mxu0 %v438
        %v1027 = vpop.f32.mrf.mxu0
        %v1028 = vadd.f32 %v711, %v1027
        %v1029 = vpop.f32.mrf.mxu0
        %1030 = vmatprep.mubr.f32.mxu0 0.0
        %1031 = vmatmul.mubr.f32.gmra.mxu0 %v441
        %v1032 = vpop.f32.mrf.mxu0
        %v1033 = vadd.f32 %v716, %v1032
        %v1034 = vpop.f32.mrf.mxu0
        %1035 = vmatprep.mubr.f32.mxu0 0.0
        %1036 = vmatmul.mubr.f32.gmra.mxu0 %v444
        %v1037 = vpop.f32.mrf.mxu0
        %v1038 = vadd.f32 %v721, %v1037
        %v1039 = vpop.f32.mrf.mxu0
        %1040 = vmatprep.mubr.f32.mxu0 0.0
        %1041 = vmatmul.mubr.f32.gmra.mxu0 %v447
        %v1042 = vpop.f32.mrf.mxu0
        %v1043 = vadd.f32 %v726, %v1042
        %v1044 = vpop.f32.mrf.mxu0
        %1045 = vmatprep.mubr.f32.mxu0 0.0
        %1046 = vmatmul.mubr.f32.gmra.mxu0 %v450
        %v1047 = vpop.f32.mrf.mxu0
        %v1048 = vadd.f32 %v731, %v1047
        %v1049 = vpop.f32.mrf.mxu0
        %1050 = vmatprep.mubr.f32.mxu0 0.0
        %1051 = vmatmul.mubr.f32.gmra.mxu0 %v453
        %v1052 = vpop.f32.mrf.mxu0
        %v1053 = vadd.f32 %v736, %v1052
        %v1054 = vpop.f32.mrf.mxu0
        %1055 = vmatprep.mubr.f32.mxu0 0.0
        %1056 = vmatmul.mubr.f32.gmra.mxu0 %v456
        %v1057 = vpop.f32.mrf.mxu0
        %v1058 = vadd.f32 %v741, %v1057
        %v1059 = vpop.f32.mrf.mxu0
        %1060 = vmatprep.mubr.f32.mxu0 0.0
        %1061 = vmatmul.mubr.f32.gmra.mxu0 %v459
        %v1062 = vpop.f32.mrf.mxu0
        %v1063 = vadd.f32 %v746, %v1062
        %v1064 = vpop.f32.mrf.mxu0
        %1065 = vmatprep.mubr.f32.mxu0 0.0
        %1066 = vmatmul.mubr.f32.gmra.mxu0 %v462
        %v1067 = vpop.f32.mrf.mxu0
        %v1068 = vadd.f32 %v751, %v1067
        %v1069 = vpop.f32.mrf.mxu0
        %1070 = vmatprep.mubr.f32.mxu0 0.0
        %1071 = vmatmul.mubr.f32.gmra.mxu0 %v465
        %v1072 = vpop.f32.mrf.mxu0
        %v1073 = vadd.f32 %v756, %v1072
        %v1074 = vpop.f32.mrf.mxu0
        %1075 = vmatprep.mubr.f32.mxu0 0.0
        %1076 = vmatmul.mubr.f32.gmra.mxu0 %v468
        %v1077 = vpop.f32.mrf.mxu0
        %v1078 = vadd.f32 %v761, %v1077
        %v1079 = vpop.f32.mrf.mxu0
        %1080 = vmatprep.mubr.f32.mxu0 0.0
        %1081 = vmatmul.mubr.f32.gmra.mxu0 %v471
        %v1082 = vpop.f32.mrf.mxu0
        %v1083 = vadd.f32 %v766, %v1082
        %v1084 = vpop.f32.mrf.mxu0
        %1085 = vmatprep.mubr.f32.mxu0 0.0
        %1086 = vmatmul.mubr.f32.gmra.mxu0 %v474
        %v1087 = vpop.f32.mrf.mxu0
        %v1088 = vadd.f32 %v771, %v1087
        %v1089 = vpop.f32.mrf.mxu0
        %1090 = vmatprep.mubr.f32.mxu0 0.0
        %1091 = vmatmul.mubr.f32.gmra.mxu0 %v477
        %v1092 = vpop.f32.mrf.mxu0
        %v1093 = vadd.f32 %v776, %v1092
        %v1094 = vpop.f32.mrf.mxu0
        %1095 = vmatprep.mubr.f32.mxu0 0.0
        %1096 = vmatmul.mubr.f32.gmra.mxu0 %v480
        %v1097 = vpop.f32.mrf.mxu0
        %v1098 = vadd.f32 %v781, %v1097
        %v1099 = vpop.f32.mrf.mxu0
        %1100 = vmatprep.mubr.f32.mxu0 0.0
        %1101 = vmatmul.mubr.f32.gmra.mxu0 %v483
        %v1102 = vpop.f32.mrf.mxu0
        %v1103 = vadd.f32 %v786, %v1102
        %v1104 = vpop.f32.mrf.mxu0
        %1105 = vmatprep.mubr.f32.mxu0 0.0
        %1106 = vmatmul.mubr.f32.gmra.mxu0 %v486
        %v1107 = vpop.f32.mrf.mxu0
        %v1108 = vadd.f32 %v791, %v1107
        %v1109 = vpop.f32.mrf.mxu0
        %1110 = vmatprep.mubr.f32.mxu0 0.0
        %1111 = vmatmul.mubr.f32.gmra.mxu0 %v489
        %v1112 = vpop.f32.mrf.mxu0
        %v1113 = vadd.f32 %v796, %v1112
        %v1114 = vpop.f32.mrf.mxu0
        %1115 = vmatprep.mubr.f32.mxu0 0.0
        %1116 = vmatmul.mubr.f32.gmra.mxu0 %v492
        %v1117 = vpop.f32.mrf.mxu0
        %v1118 = vadd.f32 %v801, %v1117
        %v1119 = vpop.f32.mrf.mxu0
        %1120 = vmatprep.mubr.f32.mxu0 0.0
        %1121 = vmatmul.mubr.f32.gmra.mxu0 %v495
        %v1122 = vpop.f32.mrf.mxu0
        %v1123 = vadd.f32 %v806, %v1122
        %v1124 = vpop.f32.mrf.mxu0
        %1125 = vmatprep.mubr.f32.mxu0 0.0
        %1126 = vmatmul.mubr.f32.gmra.mxu0 %v498
        %v1127 = vpop.f32.mrf.mxu0
        %v1128 = vadd.f32 %v811, %v1127
        %v1129 = vpop.f32.mrf.mxu0
        %1130 = vmatprep.mubr.f32.mxu0 0.0
        %1131 = vmatmul.mubr.f32.gmra.mxu0 %v501
        %v1132 = vpop.f32.mrf.mxu0
        %v1133 = vadd.f32 %v816, %v1132
        %v1134 = vpop.f32.mrf.mxu0
        %1135 = vmatprep.mubr.f32.mxu0 0.0
        %1136 = vmatmul.mubr.f32.gmra.mxu0 %v504
        %v1137 = vpop.f32.mrf.mxu0
        %v1138 = vadd.f32 %v821, %v1137
        %v1139 = vpop.f32.mrf.mxu0
        %1140 = vdwg.mxu0
        %v1142 = vsel %vm370, %v318, 0
        %v1145 = vsel %vm370, %v317, 0
        %v1148 = vsel %vm370, %v316, 0
        %v1151 = vsel %vm515, %v256, 0
        %1153 = vmatprep.subr.mxu0 0.0
        %1154 = vmatpush1.msra.mxu0 0.0
        %1155 = vmatprep.subr.mxu0 0.0
        %1156 = vmatpush1.msra.mxu0 0.0
        %1157 = vmatprep.subr.mxu0 0.0
        %1158 = vmatpush1.msra.mxu0 0.0
        %1159 = vmatprep.subr.mxu0 0.0
        %1160 = vmatpush1.msra.mxu0 0.0
        %1161 = vmatprep.subr.mxu0 0.0
        %1162 = vmatpush1.msra.mxu0 0.0
        %1163 = vmatprep.subr.mxu0 0.0
        %1164 = vmatpush1.msra.mxu0 0.0
        %1165 = vmatprep.subr.mxu0 0.0
        %1166 = vmatpush1.msra.mxu0 0.0
        %1167 = vmatprep.subr.mxu0 0.0
        %1168 = vmatpush1.msra.mxu0 0.0
        %1169 = vmatprep.subr.mxu0 0.0
        %1170 = vmatpush1.msra.mxu0 0.0
        %1171 = vmatprep.subr.mxu0 0.0
        %1172 = vmatpush1.msra.mxu0 0.0
        %1173 = vmatprep.subr.mxu0 0.0
        %1174 = vmatpush1.msra.mxu0 0.0
        %1175 = vmatprep.subr.mxu0 0.0
        %1176 = vmatpush1.msra.mxu0 0.0
        %1177 = vmatprep.subr.mxu0 0.0
        %1178 = vmatpush1.msra.mxu0 0.0
        %1179 = vmatprep.subr.mxu0 0.0
        %1180 = vmatpush1.msra.mxu0 0.0
        %1181 = vmatprep.subr.mxu0 0.0
        %1182 = vmatpush1.msra.mxu0 0.0
        %1183 = vmatprep.subr.mxu0 0.0
        %1184 = vmatpush1.msra.mxu0 %v1151
        %1185 = vmatprep.subr.mxu0 0.0
        %1186 = vmatpush2.msra.mxu0 0.0
        %1187 = vmatprep.subr.mxu0 0.0
        %1188 = vmatpush2.msra.mxu0 0.0
        %1189 = vmatprep.subr.mxu0 0.0
        %1190 = vmatpush2.msra.mxu0 0.0
        %1191 = vmatprep.subr.mxu0 0.0
        %1192 = vmatpush2.msra.mxu0 0.0
        %1193 = vmatprep.subr.mxu0 0.0
        %1194 = vmatpush2.msra.mxu0 0.0
        %1195 = vmatprep.subr.mxu0 0.0
        %1196 = vmatpush2.msra.mxu0 0.0
        %1197 = vmatprep.subr.mxu0 0.0
        %1198 = vmatpush2.msra.mxu0 0.0
        %1199 = vmatprep.subr.mxu0 0.0
        %1200 = vmatpush2.msra.mxu0 0.0
        %1201 = vmatprep.subr.mxu0 0.0
        %1202 = vmatpush2.msra.mxu0 0.0
        %1203 = vmatprep.subr.mxu0 0.0
        %1204 = vmatpush2.msra.mxu0 0.0
        %1205 = vmatprep.subr.mxu0 0.0
        %1206 = vmatpush2.msra.mxu0 0.0
        %1207 = vmatprep.subr.mxu0 0.0
        %1208 = vmatpush2.msra.mxu0 0.0
        %1209 = vmatprep.subr.mxu0 0.0
        %1210 = vmatpush2.msra.mxu0 0.0
        %1211 = vmatprep.subr.mxu0 0.0
        %1212 = vmatpush2.msra.mxu0 0.0
        %1213 = vmatprep.subr.mxu0 0.0
        %1214 = vmatpush2.msra.mxu0 0.0
        %1215 = vmatprep.subr.mxu0 0.0
        %1216 = vmatpush2.msra.mxu0 0.0
        %1217 = vmatprep.mubr.f32.mxu0 0.0
        %1218 = vmatmul.mubr.f32.gmra.mxu0 %v381
        %v1219 = vpop.f32.mrf.mxu0
        %v1220 = vadd.f32 0.0, %v1219
        %v1221 = vpop.f32.mrf.mxu0
        %1222 = vmatprep.mubr.f32.mxu0 0.0
        %1223 = vmatmul.mubr.f32.gmra.mxu0 %v384
        %v1224 = vpop.f32.mrf.mxu0
        %v1225 = vadd.f32 0.0, %v1224
        %v1226 = vpop.f32.mrf.mxu0
        %1227 = vmatprep.mubr.f32.mxu0 0.0
        %1228 = vmatmul.mubr.f32.gmra.mxu0 %v387
        %v1229 = vpop.f32.mrf.mxu0
        %v1230 = vadd.f32 0.0, %v1229
        %v1231 = vpop.f32.mrf.mxu0
        %1232 = vmatprep.mubr.f32.mxu0 0.0
        %1233 = vmatmul.mubr.f32.gmra.mxu0 %v390
        %v1234 = vpop.f32.mrf.mxu0
        %v1235 = vadd.f32 0.0, %v1234
        %v1236 = vpop.f32.mrf.mxu0
        %1237 = vmatprep.mubr.f32.mxu0 0.0
        %1238 = vmatmul.mubr.f32.gmra.mxu0 %v393
        %v1239 = vpop.f32.mrf.mxu0
        %v1240 = vadd.f32 0.0, %v1239
        %v1241 = vpop.f32.mrf.mxu0
        %1242 = vmatprep.mubr.f32.mxu0 0.0
        %1243 = vmatmul.mubr.f32.gmra.mxu0 %v396
        %v1244 = vpop.f32.mrf.mxu0
        %v1245 = vadd.f32 0.0, %v1244
        %v1246 = vpop.f32.mrf.mxu0
        %1247 = vmatprep.mubr.f32.mxu0 0.0
        %1248 = vmatmul.mubr.f32.gmra.mxu0 %v399
        %v1249 = vpop.f32.mrf.mxu0
        %v1250 = vadd.f32 0.0, %v1249
        %v1251 = vpop.f32.mrf.mxu0
        %1252 = vmatprep.mubr.f32.mxu0 0.0
        %1253 = vmatmul.mubr.f32.gmra.mxu0 %v402
        %v1254 = vpop.f32.mrf.mxu0
        %v1255 = vadd.f32 0.0, %v1254
        %v1256 = vpop.f32.mrf.mxu0
        %1257 = vmatprep.mubr.f32.mxu0 0.0
        %1258 = vmatmul.mubr.f32.gmra.mxu0 %v405
        %v1259 = vpop.f32.mrf.mxu0
        %v1260 = vadd.f32 0.0, %v1259
        %v1261 = vpop.f32.mrf.mxu0
        %1262 = vmatprep.mubr.f32.mxu0 0.0
        %1263 = vmatmul.mubr.f32.gmra.mxu0 %v408
        %v1264 = vpop.f32.mrf.mxu0
        %v1265 = vadd.f32 0.0, %v1264
        %v1266 = vpop.f32.mrf.mxu0
        %1267 = vmatprep.mubr.f32.mxu0 0.0
        %1268 = vmatmul.mubr.f32.gmra.mxu0 %v411
        %v1269 = vpop.f32.mrf.mxu0
        %v1270 = vadd.f32 0.0, %v1269
        %v1271 = vpop.f32.mrf.mxu0
        %1272 = vmatprep.mubr.f32.mxu0 0.0
        %1273 = vmatmul.mubr.f32.gmra.mxu0 %v414
        %v1274 = vpop.f32.mrf.mxu0
        %v1275 = vadd.f32 0.0, %v1274
        %v1276 = vpop.f32.mrf.mxu0
        %1277 = vmatprep.mubr.f32.mxu0 0.0
        %1278 = vmatmul.mubr.f32.gmra.mxu0 %v417
        %v1279 = vpop.f32.mrf.mxu0
        %v1280 = vadd.f32 0.0, %v1279
        %v1281 = vpop.f32.mrf.mxu0
        %1282 = vmatprep.mubr.f32.mxu0 0.0
        %1283 = vmatmul.mubr.f32.gmra.mxu0 %v420
        %v1284 = vpop.f32.mrf.mxu0
        %v1285 = vadd.f32 0.0, %v1284
        %v1286 = vpop.f32.mrf.mxu0
        %1287 = vmatprep.mubr.f32.mxu0 0.0
        %1288 = vmatmul.mubr.f32.gmra.mxu0 %v423
        %v1289 = vpop.f32.mrf.mxu0
        %v1290 = vadd.f32 0.0, %v1289
        %v1291 = vpop.f32.mrf.mxu0
        %1292 = vmatprep.mubr.f32.mxu0 0.0
        %1293 = vmatmul.mubr.f32.gmra.mxu0 %v426
        %v1294 = vpop.f32.mrf.mxu0
        %v1295 = vadd.f32 0.0, %v1294
        %v1296 = vpop.f32.mrf.mxu0
        %1297 = vmatprep.mubr.f32.mxu0 0.0
        %1298 = vmatmul.mubr.f32.gmra.mxu0 %v429
        %v1299 = vpop.f32.mrf.mxu0
        %v1300 = vadd.f32 0.0, %v1299
        %v1301 = vpop.f32.mrf.mxu0
        %1302 = vmatprep.mubr.f32.mxu0 0.0
        %1303 = vmatmul.mubr.f32.gmra.mxu0 %v432
        %v1304 = vpop.f32.mrf.mxu0
        %v1305 = vadd.f32 0.0, %v1304
        %v1306 = vpop.f32.mrf.mxu0
        %1307 = vmatprep.mubr.f32.mxu0 0.0
        %1308 = vmatmul.mubr.f32.gmra.mxu0 %v435
        %v1309 = vpop.f32.mrf.mxu0
        %v1310 = vadd.f32 0.0, %v1309
        %v1311 = vpop.f32.mrf.mxu0
        %1312 = vmatprep.mubr.f32.mxu0 0.0
        %1313 = vmatmul.mubr.f32.gmra.mxu0 %v438
        %v1314 = vpop.f32.mrf.mxu0
        %v1315 = vadd.f32 0.0, %v1314
        %v1316 = vpop.f32.mrf.mxu0
        %1317 = vmatprep.mubr.f32.mxu0 0.0
        %1318 = vmatmul.mubr.f32.gmra.mxu0 %v441
        %v1319 = vpop.f32.mrf.mxu0
        %v1320 = vadd.f32 0.0, %v1319
        %v1321 = vpop.f32.mrf.mxu0
        %1322 = vmatprep.mubr.f32.mxu0 0.0
        %1323 = vmatmul.mubr.f32.gmra.mxu0 %v444
        %v1324 = vpop.f32.mrf.mxu0
        %v1325 = vadd.f32 0.0, %v1324
        %v1326 = vpop.f32.mrf.mxu0
        %1327 = vmatprep.mubr.f32.mxu0 0.0
        %1328 = vmatmul.mubr.f32.gmra.mxu0 %v447
        %v1329 = vpop.f32.mrf.mxu0
        %v1330 = vadd.f32 0.0, %v1329
        %v1331 = vpop.f32.mrf.mxu0
        %1332 = vmatprep.mubr.f32.mxu0 0.0
        %1333 = vmatmul.mubr.f32.gmra.mxu0 %v450
        %v1334 = vpop.f32.mrf.mxu0
        %v1335 = vadd.f32 0.0, %v1334
        %v1336 = vpop.f32.mrf.mxu0
        %1337 = vmatprep.mubr.f32.mxu0 0.0
        %1338 = vmatmul.mubr.f32.gmra.mxu0 %v453
        %v1339 = vpop.f32.mrf.mxu0
        %v1340 = vadd.f32 0.0, %v1339
        %v1341 = vpop.f32.mrf.mxu0
        %1342 = vmatprep.mubr.f32.mxu0 0.0
        %1343 = vmatmul.mubr.f32.gmra.mxu0 %v456
        %v1344 = vpop.f32.mrf.mxu0
        %v1345 = vadd.f32 0.0, %v1344
        %v1346 = vpop.f32.mrf.mxu0
        %1347 = vmatprep.mubr.f32.mxu0 0.0
        %1348 = vmatmul.mubr.f32.gmra.mxu0 %v459
        %v1349 = vpop.f32.mrf.mxu0
        %v1350 = vadd.f32 0.0, %v1349
        %v1351 = vpop.f32.mrf.mxu0
        %1352 = vmatprep.mubr.f32.mxu0 0.0
        %1353 = vmatmul.mubr.f32.gmra.mxu0 %v462
        %v1354 = vpop.f32.mrf.mxu0
        %v1355 = vadd.f32 0.0, %v1354
        %v1356 = vpop.f32.mrf.mxu0
        %1357 = vmatprep.mubr.f32.mxu0 0.0
        %1358 = vmatmul.mubr.f32.gmra.mxu0 %v465
        %v1359 = vpop.f32.mrf.mxu0
        %v1360 = vadd.f32 0.0, %v1359
        %v1361 = vpop.f32.mrf.mxu0
        %1362 = vmatprep.mubr.f32.mxu0 0.0
        %1363 = vmatmul.mubr.f32.gmra.mxu0 %v468
        %v1364 = vpop.f32.mrf.mxu0
        %v1365 = vadd.f32 0.0, %v1364
        %v1366 = vpop.f32.mrf.mxu0
        %1367 = vmatprep.mubr.f32.mxu0 0.0
        %1368 = vmatmul.mubr.f32.gmra.mxu0 %v471
        %v1369 = vpop.f32.mrf.mxu0
        %v1370 = vadd.f32 0.0, %v1369
        %v1371 = vpop.f32.mrf.mxu0
        %1372 = vmatprep.mubr.f32.mxu0 0.0
        %1373 = vmatmul.mubr.f32.gmra.mxu0 %v474
        %v1374 = vpop.f32.mrf.mxu0
        %v1375 = vadd.f32 0.0, %v1374
        %v1376 = vpop.f32.mrf.mxu0
        %1377 = vmatprep.mubr.f32.mxu0 0.0
        %1378 = vmatmul.mubr.f32.gmra.mxu0 %v477
        %v1379 = vpop.f32.mrf.mxu0
        %v1380 = vadd.f32 0.0, %v1379
        %v1381 = vpop.f32.mrf.mxu0
        %1382 = vmatprep.mubr.f32.mxu0 0.0
        %1383 = vmatmul.mubr.f32.gmra.mxu0 %v480
        %v1384 = vpop.f32.mrf.mxu0
        %v1385 = vadd.f32 0.0, %v1384
        %v1386 = vpop.f32.mrf.mxu0
        %1387 = vmatprep.mubr.f32.mxu0 0.0
        %1388 = vmatmul.mubr.f32.gmra.mxu0 %v483
        %v1389 = vpop.f32.mrf.mxu0
        %v1390 = vadd.f32 0.0, %v1389
        %v1391 = vpop.f32.mrf.mxu0
        %1392 = vmatprep.mubr.f32.mxu0 0.0
        %1393 = vmatmul.mubr.f32.gmra.mxu0 %v486
        %v1394 = vpop.f32.mrf.mxu0
        %v1395 = vadd.f32 0.0, %v1394
        %v1396 = vpop.f32.mrf.mxu0
        %1397 = vmatprep.mubr.f32.mxu0 0.0
        %1398 = vmatmul.mubr.f32.gmra.mxu0 %v489
        %v1399 = vpop.f32.mrf.mxu0
        %v1400 = vadd.f32 0.0, %v1399
        %v1401 = vpop.f32.mrf.mxu0
        %1402 = vmatprep.mubr.f32.mxu0 0.0
        %1403 = vmatmul.mubr.f32.gmra.mxu0 %v492
        %v1404 = vpop.f32.mrf.mxu0
        %v1405 = vadd.f32 0.0, %v1404
        %v1406 = vpop.f32.mrf.mxu0
        %1407 = vmatprep.mubr.f32.mxu0 0.0
        %1408 = vmatmul.mubr.f32.gmra.mxu0 %v495
        %v1409 = vpop.f32.mrf.mxu0
        %v1410 = vadd.f32 0.0, %v1409
        %v1411 = vpop.f32.mrf.mxu0
        %1412 = vmatprep.mubr.f32.mxu0 0.0
        %1413 = vmatmul.mubr.f32.gmra.mxu0 %v498
        %v1414 = vpop.f32.mrf.mxu0
        %v1415 = vadd.f32 0.0, %v1414
        %v1416 = vpop.f32.mrf.mxu0
        %1417 = vmatprep.mubr.f32.mxu0 0.0
        %1418 = vmatmul.mubr.f32.gmra.mxu0 %v501
        %v1419 = vpop.f32.mrf.mxu0
        %v1420 = vadd.f32 0.0, %v1419
        %v1421 = vpop.f32.mrf.mxu0
        %1422 = vmatprep.mubr.f32.mxu0 0.0
        %1423 = vmatmul.mubr.f32.gmra.mxu0 %v504
        %v1424 = vpop.f32.mrf.mxu0
        %v1425 = vadd.f32 0.0, %v1424
        %v1426 = vpop.f32.mrf.mxu0
        %1427 = vmatprep.mubr.f32.mxu0 0.0
        %1428 = vmatmul.mubr.f32.gmra.mxu0 %v507
        %v1429 = vpop.f32.mrf.mxu0
        %v1430 = vadd.f32 0.0, %v1429
        %v1431 = vpop.f32.mrf.mxu0
        %1432 = vmatprep.mubr.f32.mxu0 0.0
        %1433 = vmatmul.mubr.f32.gmra.mxu0 %v510
        %v1434 = vpop.f32.mrf.mxu0
        %v1435 = vadd.f32 0.0, %v1434
        %v1436 = vpop.f32.mrf.mxu0
        %1437 = vmatprep.mubr.f32.mxu0 0.0
        %1438 = vmatmul.mubr.f32.gmra.mxu0 %v513
        %v1439 = vpop.f32.mrf.mxu0
        %v1440 = vadd.f32 0.0, %v1439
        %v1441 = vpop.f32.mrf.mxu0
        %1442 = vmatprep.mubr.f32.mxu0 0.0
        %1443 = vmatmul.mubr.f32.gmra.mxu0 %v1142
        %v1444 = vpop.f32.mrf.mxu0
        %v1445 = vadd.f32 0.0, %v1444
        %v1446 = vpop.f32.mrf.mxu0
        %1447 = vmatprep.mubr.f32.mxu0 0.0
        %1448 = vmatmul.mubr.f32.gmra.mxu0 %v1145
        %v1449 = vpop.f32.mrf.mxu0
        %v1450 = vadd.f32 0.0, %v1449
        %v1451 = vpop.f32.mrf.mxu0
        %1452 = vmatprep.mubr.f32.mxu0 0.0
        %1453 = vmatmul.mubr.f32.gmra.mxu0 %v1148
        %v1454 = vpop.f32.mrf.mxu0
        %v1455 = vadd.f32 0.0, %v1454
        %v1456 = vpop.f32.mrf.mxu0
        %1457 = vdwg.mxu0
        %v1458 = vadd.f32 %v903, %v1220
        %v1459 = vadd.f32 %v908, %v1225
        %v1460 = vadd.f32 %v913, %v1230
        %v1461 = vadd.f32 %v918, %v1235
        %v1462 = vadd.f32 %v923, %v1240
        %v1463 = vadd.f32 %v928, %v1245
        %v1464 = vadd.f32 %v933, %v1250
        %v1465 = vadd.f32 %v938, %v1255
        %v1466 = vadd.f32 %v943, %v1260
        %v1467 = vadd.f32 %v948, %v1265
        %v1468 = vadd.f32 %v953, %v1270
        %v1469 = vadd.f32 %v958, %v1275
        %v1470 = vadd.f32 %v963, %v1280
        %v1471 = vadd.f32 %v968, %v1285
        %v1472 = vadd.f32 %v973, %v1290
        %v1473 = vadd.f32 %v978, %v1295
        %v1474 = vadd.f32 %v983, %v1300
        %v1475 = vadd.f32 %v988, %v1305
        %v1476 = vadd.f32 %v993, %v1310
        %v1477 = vadd.f32 %v998, %v1315
        %v1478 = vadd.f32 %v1003, %v1320
        %v1479 = vadd.f32 %v1008, %v1325
        %v1480 = vadd.f32 %v1013, %v1330
        %v1481 = vadd.f32 %v1018, %v1335
        %v1482 = vadd.f32 %v1023, %v1340
        %v1483 = vadd.f32 %v1028, %v1345
        %v1484 = vadd.f32 %v1033, %v1350
        %v1485 = vadd.f32 %v1038, %v1355
        %v1486 = vadd.f32 %v1043, %v1360
        %v1487 = vadd.f32 %v1048, %v1365
        %v1488 = vadd.f32 %v1053, %v1370
        %v1489 = vadd.f32 %v1058, %v1375
        %v1490 = vadd.f32 %v1063, %v1380
        %v1491 = vadd.f32 %v1068, %v1385
        %v1492 = vadd.f32 %v1073, %v1390
        %v1493 = vadd.f32 %v1078, %v1395
        %v1494 = vadd.f32 %v1083, %v1400
        %v1495 = vadd.f32 %v1088, %v1405
        %v1496 = vadd.f32 %v1093, %v1410
        %v1497 = vadd.f32 %v1098, %v1415
        %v1498 = vadd.f32 %v1103, %v1420
        %v1499 = vadd.f32 %v1108, %v1425
        %v1500 = vadd.f32 %v1113, %v1430
        %v1501 = vadd.f32 %v1118, %v1435
        %v1502 = vadd.f32 %v1123, %v1440
        %v1503 = vadd.f32 %v1128, %v1445
        %v1504 = vadd.f32 %v1133, %v1450
        %v1505 = vadd.f32 %v1138, %v1455
        %v1507 = vsel %vm370, %v196, 0
        %v1510 = vsel %vm370, %v197, 0
        %v1513 = vsel %vm370, %v198, 0
        %v1516 = vsel %vm370, %v199, 0
        %v1519 = vsel %vm370, %v200, 0
        %v1522 = vsel %vm370, %v201, 0
        %v1525 = vsel %vm370, %v202, 0
        %v1528 = vsel %vm370, %v203, 0
        %v1531 = vsel %vm370, %v204, 0
        %v1534 = vsel %vm370, %v205, 0
        %v1537 = vsel %vm370, %v206, 0
        %v1540 = vsel %vm370, %v207, 0
        %v1543 = vsel %vm370, %v208, 0
        %v1546 = vsel %vm370, %v209, 0
        %v1549 = vsel %vm370, %v210, 0
        %v1552 = vsel %vm370, %v211, 0
        %v1555 = vsel %vm370, %v212, 0
        %v1558 = vsel %vm370, %v213, 0
        %v1561 = vsel %vm370, %v214, 0
        %v1564 = vsel %vm370, %v215, 0
        %v1567 = vsel %vm370, %v216, 0
        %v1570 = vsel %vm370, %v217, 0
        %v1573 = vsel %vm370, %v218, 0
        %v1576 = vsel %vm370, %v219, 0
        %v1579 = vsel %vm370, %v220, 0
        %v1582 = vsel %vm370, %v221, 0
        %v1585 = vsel %vm370, %v222, 0
        %v1588 = vsel %vm370, %v223, 0
        %v1591 = vsel %vm370, %v224, 0
        %v1594 = vsel %vm370, %v225, 0
        %v1597 = vsel %vm370, %v226, 0
        %v1600 = vsel %vm370, %v227, 0
        %v1603 = vsel %vm370, %v228, 0
        %v1606 = vsel %vm370, %v229, 0
        %v1609 = vsel %vm370, %v230, 0
        %v1612 = vsel %vm370, %v231, 0
        %v1615 = vsel %vm370, %v232, 0
        %v1618 = vsel %vm370, %v233, 0
        %v1621 = vsel %vm370, %v234, 0
        %v1624 = vsel %vm370, %v235, 0
        %v1627 = vsel %vm370, %v236, 0
        %v1630 = vsel %vm370, %v237, 0
        %v1633 = vsel %vm370, %v238, 0
        %v1636 = vsel %vm370, %v239, 0
        %v1639 = vsel %vm370, %v240, 0
        %v1642 = vsel %vm370, %v241, 0
        %v1645 = vsel %vm370, %v242, 0
        %v1648 = vsel %vm370, %v243, 0
        %v1651 = vsel %vm515, %v251, 0
        %1653 = vmatprep.subr.mxu0 0.0
        %1654 = vmatpush1.msra.mxu0 0.0
        %1655 = vmatprep.subr.mxu0 0.0
        %1656 = vmatpush1.msra.mxu0 0.0
        %1657 = vmatprep.subr.mxu0 0.0
        %1658 = vmatpush1.msra.mxu0 0.0
        %1659 = vmatprep.subr.mxu0 0.0
        %1660 = vmatpush1.msra.mxu0 0.0
        %1661 = vmatprep.subr.mxu0 0.0
        %1662 = vmatpush1.msra.mxu0 0.0
        %1663 = vmatprep.subr.mxu0 0.0
        %1664 = vmatpush1.msra.mxu0 0.0
        %1665 = vmatprep.subr.mxu0 0.0
        %1666 = vmatpush1.msra.mxu0 0.0
        %1667 = vmatprep.subr.mxu0 0.0
        %1668 = vmatpush1.msra.mxu0 0.0
        %1669 = vmatprep.subr.mxu0 0.0
        %1670 = vmatpush1.msra.mxu0 0.0
        %1671 = vmatprep.subr.mxu0 0.0
        %1672 = vmatpush1.msra.mxu0 0.0
        %1673 = vmatprep.subr.mxu0 0.0
        %1674 = vmatpush1.msra.mxu0 0.0
        %1675 = vmatprep.subr.mxu0 0.0
        %1676 = vmatpush1.msra.mxu0 0.0
        %1677 = vmatprep.subr.mxu0 0.0
        %1678 = vmatpush1.msra.mxu0 0.0
        %1679 = vmatprep.subr.mxu0 0.0
        %1680 = vmatpush1.msra.mxu0 0.0
        %1681 = vmatprep.subr.mxu0 0.0
        %1682 = vmatpush1.msra.mxu0 0.0
        %1683 = vmatprep.subr.mxu0 0.0
        %1684 = vmatpush1.msra.mxu0 %v1651
        %1685 = vmatprep.subr.mxu0 0.0
        %1686 = vmatpush2.msra.mxu0 0.0
        %1687 = vmatprep.subr.mxu0 0.0
        %1688 = vmatpush2.msra.mxu0 0.0
        %1689 = vmatprep.subr.mxu0 0.0
        %1690 = vmatpush2.msra.mxu0 0.0
        %1691 = vmatprep.subr.mxu0 0.0
        %1692 = vmatpush2.msra.mxu0 0.0
        %1693 = vmatprep.subr.mxu0 0.0
        %1694 = vmatpush2.msra.mxu0 0.0
        %1695 = vmatprep.subr.mxu0 0.0
        %1696 = vmatpush2.msra.mxu0 0.0
        %1697 = vmatprep.subr.mxu0 0.0
        %1698 = vmatpush2.msra.mxu0 0.0
        %1699 = vmatprep.subr.mxu0 0.0
        %1700 = vmatpush2.msra.mxu0 0.0
        %1701 = vmatprep.subr.mxu0 0.0
        %1702 = vmatpush2.msra.mxu0 0.0
        %1703 = vmatprep.subr.mxu0 0.0
        %1704 = vmatpush2.msra.mxu0 0.0
        %1705 = vmatprep.subr.mxu0 0.0
        %1706 = vmatpush2.msra.mxu0 0.0
        %1707 = vmatprep.subr.mxu0 0.0
        %1708 = vmatpush2.msra.mxu0 0.0
        %1709 = vmatprep.subr.mxu0 0.0
        %1710 = vmatpush2.msra.mxu0 0.0
        %1711 = vmatprep.subr.mxu0 0.0
        %1712 = vmatpush2.msra.mxu0 0.0
        %1713 = vmatprep.subr.mxu0 0.0
        %1714 = vmatpush2.msra.mxu0 0.0
        %1715 = vmatprep.subr.mxu0 0.0
        %1716 = vmatpush2.msra.mxu0 0.0
        %1717 = vmatprep.mubr.f32.mxu0 0.0
        %1718 = vmatmul.mubr.f32.gmra.mxu0 %v1507
        %v1719 = vpop.f32.mrf.mxu0
        %v1720 = vadd.f32 0.0, %v1719
        %v1721 = vpop.f32.mrf.mxu0
        %1722 = vmatprep.mubr.f32.mxu0 0.0
        %1723 = vmatmul.mubr.f32.gmra.mxu0 %v1510
        %v1724 = vpop.f32.mrf.mxu0
        %v1725 = vadd.f32 0.0, %v1724
        %v1726 = vpop.f32.mrf.mxu0
        %1727 = vmatprep.mubr.f32.mxu0 0.0
        %1728 = vmatmul.mubr.f32.gmra.mxu0 %v1513
        %v1729 = vpop.f32.mrf.mxu0
        %v1730 = vadd.f32 0.0, %v1729
        %v1731 = vpop.f32.mrf.mxu0
        %1732 = vmatprep.mubr.f32.mxu0 0.0
        %1733 = vmatmul.mubr.f32.gmra.mxu0 %v1516
        %v1734 = vpop.f32.mrf.mxu0
        %v1735 = vadd.f32 0.0, %v1734
        %v1736 = vpop.f32.mrf.mxu0
        %1737 = vmatprep.mubr.f32.mxu0 0.0
        %1738 = vmatmul.mubr.f32.gmra.mxu0 %v1519
        %v1739 = vpop.f32.mrf.mxu0
        %v1740 = vadd.f32 0.0, %v1739
        %v1741 = vpop.f32.mrf.mxu0
        %1742 = vmatprep.mubr.f32.mxu0 0.0
        %1743 = vmatmul.mubr.f32.gmra.mxu0 %v1522
        %v1744 = vpop.f32.mrf.mxu0
        %v1745 = vadd.f32 0.0, %v1744
        %v1746 = vpop.f32.mrf.mxu0
        %1747 = vmatprep.mubr.f32.mxu0 0.0
        %1748 = vmatmul.mubr.f32.gmra.mxu0 %v1525
        %v1749 = vpop.f32.mrf.mxu0
        %v1750 = vadd.f32 0.0, %v1749
        %v1751 = vpop.f32.mrf.mxu0
        %1752 = vmatprep.mubr.f32.mxu0 0.0
        %1753 = vmatmul.mubr.f32.gmra.mxu0 %v1528
        %v1754 = vpop.f32.mrf.mxu0
        %v1755 = vadd.f32 0.0, %v1754
        %v1756 = vpop.f32.mrf.mxu0
        %1757 = vmatprep.mubr.f32.mxu0 0.0
        %1758 = vmatmul.mubr.f32.gmra.mxu0 %v1531
        %v1759 = vpop.f32.mrf.mxu0
        %v1760 = vadd.f32 0.0, %v1759
        %v1761 = vpop.f32.mrf.mxu0
        %1762 = vmatprep.mubr.f32.mxu0 0.0
        %1763 = vmatmul.mubr.f32.gmra.mxu0 %v1534
        %v1764 = vpop.f32.mrf.mxu0
        %v1765 = vadd.f32 0.0, %v1764
        %v1766 = vpop.f32.mrf.mxu0
        %1767 = vmatprep.mubr.f32.mxu0 0.0
        %1768 = vmatmul.mubr.f32.gmra.mxu0 %v1537
        %v1769 = vpop.f32.mrf.mxu0
        %v1770 = vadd.f32 0.0, %v1769
        %v1771 = vpop.f32.mrf.mxu0
        %1772 = vmatprep.mubr.f32.mxu0 0.0
        %1773 = vmatmul.mubr.f32.gmra.mxu0 %v1540
        %v1774 = vpop.f32.mrf.mxu0
        %v1775 = vadd.f32 0.0, %v1774
        %v1776 = vpop.f32.mrf.mxu0
        %1777 = vmatprep.mubr.f32.mxu0 0.0
        %1778 = vmatmul.mubr.f32.gmra.mxu0 %v1543
        %v1779 = vpop.f32.mrf.mxu0
        %v1780 = vadd.f32 0.0, %v1779
        %v1781 = vpop.f32.mrf.mxu0
        %1782 = vmatprep.mubr.f32.mxu0 0.0
        %1783 = vmatmul.mubr.f32.gmra.mxu0 %v1546
        %v1784 = vpop.f32.mrf.mxu0
        %v1785 = vadd.f32 0.0, %v1784
        %v1786 = vpop.f32.mrf.mxu0
        %1787 = vmatprep.mubr.f32.mxu0 0.0
        %1788 = vmatmul.mubr.f32.gmra.mxu0 %v1549
        %v1789 = vpop.f32.mrf.mxu0
        %v1790 = vadd.f32 0.0, %v1789
        %v1791 = vpop.f32.mrf.mxu0
        %1792 = vmatprep.mubr.f32.mxu0 0.0
        %1793 = vmatmul.mubr.f32.gmra.mxu0 %v1552
        %v1794 = vpop.f32.mrf.mxu0
        %v1795 = vadd.f32 0.0, %v1794
        %v1796 = vpop.f32.mrf.mxu0
        %1797 = vmatprep.mubr.f32.mxu0 0.0
        %1798 = vmatmul.mubr.f32.gmra.mxu0 %v1555
        %v1799 = vpop.f32.mrf.mxu0
        %v1800 = vadd.f32 0.0, %v1799
        %v1801 = vpop.f32.mrf.mxu0
        %1802 = vmatprep.mubr.f32.mxu0 0.0
        %1803 = vmatmul.mubr.f32.gmra.mxu0 %v1558
        %v1804 = vpop.f32.mrf.mxu0
        %v1805 = vadd.f32 0.0, %v1804
        %v1806 = vpop.f32.mrf.mxu0
        %1807 = vmatprep.mubr.f32.mxu0 0.0
        %1808 = vmatmul.mubr.f32.gmra.mxu0 %v1561
        %v1809 = vpop.f32.mrf.mxu0
        %v1810 = vadd.f32 0.0, %v1809
        %v1811 = vpop.f32.mrf.mxu0
        %1812 = vmatprep.mubr.f32.mxu0 0.0
        %1813 = vmatmul.mubr.f32.gmra.mxu0 %v1564
        %v1814 = vpop.f32.mrf.mxu0
        %v1815 = vadd.f32 0.0, %v1814
        %v1816 = vpop.f32.mrf.mxu0
        %1817 = vmatprep.mubr.f32.mxu0 0.0
        %1818 = vmatmul.mubr.f32.gmra.mxu0 %v1567
        %v1819 = vpop.f32.mrf.mxu0
        %v1820 = vadd.f32 0.0, %v1819
        %v1821 = vpop.f32.mrf.mxu0
        %1822 = vmatprep.mubr.f32.mxu0 0.0
        %1823 = vmatmul.mubr.f32.gmra.mxu0 %v1570
        %v1824 = vpop.f32.mrf.mxu0
        %v1825 = vadd.f32 0.0, %v1824
        %v1826 = vpop.f32.mrf.mxu0
        %1827 = vmatprep.mubr.f32.mxu0 0.0
        %1828 = vmatmul.mubr.f32.gmra.mxu0 %v1573
        %v1829 = vpop.f32.mrf.mxu0
        %v1830 = vadd.f32 0.0, %v1829
        %v1831 = vpop.f32.mrf.mxu0
        %1832 = vmatprep.mubr.f32.mxu0 0.0
        %1833 = vmatmul.mubr.f32.gmra.mxu0 %v1576
        %v1834 = vpop.f32.mrf.mxu0
        %v1835 = vadd.f32 0.0, %v1834
        %v1836 = vpop.f32.mrf.mxu0
        %1837 = vmatprep.mubr.f32.mxu0 0.0
        %1838 = vmatmul.mubr.f32.gmra.mxu0 %v1579
        %v1839 = vpop.f32.mrf.mxu0
        %v1840 = vadd.f32 0.0, %v1839
        %v1841 = vpop.f32.mrf.mxu0
        %1842 = vmatprep.mubr.f32.mxu0 0.0
        %1843 = vmatmul.mubr.f32.gmra.mxu0 %v1582
        %v1844 = vpop.f32.mrf.mxu0
        %v1845 = vadd.f32 0.0, %v1844
        %v1846 = vpop.f32.mrf.mxu0
        %1847 = vmatprep.mubr.f32.mxu0 0.0
        %1848 = vmatmul.mubr.f32.gmra.mxu0 %v1585
        %v1849 = vpop.f32.mrf.mxu0
        %v1850 = vadd.f32 0.0, %v1849
        %v1851 = vpop.f32.mrf.mxu0
        %1852 = vmatprep.mubr.f32.mxu0 0.0
        %1853 = vmatmul.mubr.f32.gmra.mxu0 %v1588
        %v1854 = vpop.f32.mrf.mxu0
        %v1855 = vadd.f32 0.0, %v1854
        %v1856 = vpop.f32.mrf.mxu0
        %1857 = vmatprep.mubr.f32.mxu0 0.0
        %1858 = vmatmul.mubr.f32.gmra.mxu0 %v1591
        %v1859 = vpop.f32.mrf.mxu0
        %v1860 = vadd.f32 0.0, %v1859
        %v1861 = vpop.f32.mrf.mxu0
        %1862 = vmatprep.mubr.f32.mxu0 0.0
        %1863 = vmatmul.mubr.f32.gmra.mxu0 %v1594
        %v1864 = vpop.f32.mrf.mxu0
        %v1865 = vadd.f32 0.0, %v1864
        %v1866 = vpop.f32.mrf.mxu0
        %1867 = vmatprep.mubr.f32.mxu0 0.0
        %1868 = vmatmul.mubr.f32.gmra.mxu0 %v1597
        %v1869 = vpop.f32.mrf.mxu0
        %v1870 = vadd.f32 0.0, %v1869
        %v1871 = vpop.f32.mrf.mxu0
        %1872 = vmatprep.mubr.f32.mxu0 0.0
        %1873 = vmatmul.mubr.f32.gmra.mxu0 %v1600
        %v1874 = vpop.f32.mrf.mxu0
        %v1875 = vadd.f32 0.0, %v1874
        %v1876 = vpop.f32.mrf.mxu0
        %1877 = vmatprep.mubr.f32.mxu0 0.0
        %1878 = vmatmul.mubr.f32.gmra.mxu0 %v1603
        %v1879 = vpop.f32.mrf.mxu0
        %v1880 = vadd.f32 0.0, %v1879
        %v1881 = vpop.f32.mrf.mxu0
        %1882 = vmatprep.mubr.f32.mxu0 0.0
        %1883 = vmatmul.mubr.f32.gmra.mxu0 %v1606
        %v1884 = vpop.f32.mrf.mxu0
        %v1885 = vadd.f32 0.0, %v1884
        %v1886 = vpop.f32.mrf.mxu0
        %1887 = vmatprep.mubr.f32.mxu0 0.0
        %1888 = vmatmul.mubr.f32.gmra.mxu0 %v1609
        %v1889 = vpop.f32.mrf.mxu0
        %v1890 = vadd.f32 0.0, %v1889
        %v1891 = vpop.f32.mrf.mxu0
        %1892 = vmatprep.mubr.f32.mxu0 0.0
        %1893 = vmatmul.mubr.f32.gmra.mxu0 %v1612
        %v1894 = vpop.f32.mrf.mxu0
        %v1895 = vadd.f32 0.0, %v1894
        %v1896 = vpop.f32.mrf.mxu0
        %1897 = vmatprep.mubr.f32.mxu0 0.0
        %1898 = vmatmul.mubr.f32.gmra.mxu0 %v1615
        %v1899 = vpop.f32.mrf.mxu0
        %v1900 = vadd.f32 0.0, %v1899
        %v1901 = vpop.f32.mrf.mxu0
        %1902 = vmatprep.mubr.f32.mxu0 0.0
        %1903 = vmatmul.mubr.f32.gmra.mxu0 %v1618
        %v1904 = vpop.f32.mrf.mxu0
        %v1905 = vadd.f32 0.0, %v1904
        %v1906 = vpop.f32.mrf.mxu0
        %1907 = vmatprep.mubr.f32.mxu0 0.0
        %1908 = vmatmul.mubr.f32.gmra.mxu0 %v1621
        %v1909 = vpop.f32.mrf.mxu0
        %v1910 = vadd.f32 0.0, %v1909
        %v1911 = vpop.f32.mrf.mxu0
        %1912 = vmatprep.mubr.f32.mxu0 0.0
        %1913 = vmatmul.mubr.f32.gmra.mxu0 %v1624
        %v1914 = vpop.f32.mrf.mxu0
        %v1915 = vadd.f32 0.0, %v1914
        %v1916 = vpop.f32.mrf.mxu0
        %1917 = vmatprep.mubr.f32.mxu0 0.0
        %1918 = vmatmul.mubr.f32.gmra.mxu0 %v1627
        %v1919 = vpop.f32.mrf.mxu0
        %v1920 = vadd.f32 0.0, %v1919
        %v1921 = vpop.f32.mrf.mxu0
        %1922 = vmatprep.mubr.f32.mxu0 0.0
        %1923 = vmatmul.mubr.f32.gmra.mxu0 %v1630
        %v1924 = vpop.f32.mrf.mxu0
        %v1925 = vadd.f32 0.0, %v1924
        %v1926 = vpop.f32.mrf.mxu0
        %1927 = vmatprep.mubr.f32.mxu0 0.0
        %1928 = vmatmul.mubr.f32.gmra.mxu0 %v1633
        %v1929 = vpop.f32.mrf.mxu0
        %v1930 = vadd.f32 0.0, %v1929
        %v1931 = vpop.f32.mrf.mxu0
        %1932 = vmatprep.mubr.f32.mxu0 0.0
        %1933 = vmatmul.mubr.f32.gmra.mxu0 %v1636
        %v1934 = vpop.f32.mrf.mxu0
        %v1935 = vadd.f32 0.0, %v1934
        %v1936 = vpop.f32.mrf.mxu0
        %1937 = vmatprep.mubr.f32.mxu0 0.0
        %1938 = vmatmul.mubr.f32.gmra.mxu0 %v1639
        %v1939 = vpop.f32.mrf.mxu0
        %v1940 = vadd.f32 0.0, %v1939
        %v1941 = vpop.f32.mrf.mxu0
        %1942 = vmatprep.mubr.f32.mxu0 0.0
        %1943 = vmatmul.mubr.f32.gmra.mxu0 %v1642
        %v1944 = vpop.f32.mrf.mxu0
        %v1945 = vadd.f32 0.0, %v1944
        %v1946 = vpop.f32.mrf.mxu0
        %1947 = vmatprep.mubr.f32.mxu0 0.0
        %1948 = vmatmul.mubr.f32.gmra.mxu0 %v1645
        %v1949 = vpop.f32.mrf.mxu0
        %v1950 = vadd.f32 0.0, %v1949
        %v1951 = vpop.f32.mrf.mxu0
        %1952 = vmatprep.mubr.f32.mxu0 0.0
        %1953 = vmatmul.mubr.f32.gmra.mxu0 %v1648
        %v1954 = vpop.f32.mrf.mxu0
        %v1955 = vadd.f32 0.0, %v1954
        %v1956 = vpop.f32.mrf.mxu0
        %1957 = vdwg.mxu0
        %v1958 = vadd.f32 %v1458, %v1720
        %v1959 = vadd.f32 %v1459, %v1725
        %v1960 = vadd.f32 %v1460, %v1730
        %v1961 = vadd.f32 %v1461, %v1735
        %v1962 = vadd.f32 %v1462, %v1740
        %v1963 = vadd.f32 %v1463, %v1745
        %v1964 = vadd.f32 %v1464, %v1750
        %v1965 = vadd.f32 %v1465, %v1755
        %v1966 = vadd.f32 %v1466, %v1760
        %v1967 = vadd.f32 %v1467, %v1765
        %v1968 = vadd.f32 %v1468, %v1770
        %v1969 = vadd.f32 %v1469, %v1775
        %v1970 = vadd.f32 %v1470, %v1780
        %v1971 = vadd.f32 %v1471, %v1785
        %v1972 = vadd.f32 %v1472, %v1790
        %v1973 = vadd.f32 %v1473, %v1795
        %v1974 = vadd.f32 %v1474, %v1800
        %v1975 = vadd.f32 %v1475, %v1805
        %v1976 = vadd.f32 %v1476, %v1810
        %v1977 = vadd.f32 %v1477, %v1815
        %v1978 = vadd.f32 %v1478, %v1820
        %v1979 = vadd.f32 %v1479, %v1825
        %v1980 = vadd.f32 %v1480, %v1830
        %v1981 = vadd.f32 %v1481, %v1835
        %v1982 = vadd.f32 %v1482, %v1840
        %v1983 = vadd.f32 %v1483, %v1845
        %v1984 = vadd.f32 %v1484, %v1850
        %v1985 = vadd.f32 %v1485, %v1855
        %v1986 = vadd.f32 %v1486, %v1860
        %v1987 = vadd.f32 %v1487, %v1865
        %v1988 = vadd.f32 %v1488, %v1870
        %v1989 = vadd.f32 %v1489, %v1875
        %v1990 = vadd.f32 %v1490, %v1880
        %v1991 = vadd.f32 %v1491, %v1885
        %v1992 = vadd.f32 %v1492, %v1890
        %v1993 = vadd.f32 %v1493, %v1895
        %v1994 = vadd.f32 %v1494, %v1900
        %v1995 = vadd.f32 %v1495, %v1905
        %v1996 = vadd.f32 %v1496, %v1910
        %v1997 = vadd.f32 %v1497, %v1915
        %v1998 = vadd.f32 %v1498, %v1920
        %v1999 = vadd.f32 %v1499, %v1925
        %v2000 = vadd.f32 %v1500, %v1930
        %v2001 = vadd.f32 %v1501, %v1935
        %v2002 = vadd.f32 %v1502, %v1940
        %v2003 = vadd.f32 %v1503, %v1945
        %v2004 = vadd.f32 %v1504, %v1950
        %v2005 = vadd.f32 %v1505, %v1955
        %v2007 = vsel %vm370, %v244, 0
        %v2010 = vsel %vm370, %v245, 0
        %v2013 = vsel %vm370, %v246, 0
        %v2016 = vsel %vm515, %v254, 0
        %2018 = vmatprep.subr.mxu0 0.0
        %2019 = vmatpush1.msra.mxu0 0.0
        %2020 = vmatprep.subr.mxu0 0.0
        %2021 = vmatpush1.msra.mxu0 0.0
        %2022 = vmatprep.subr.mxu0 0.0
        %2023 = vmatpush1.msra.mxu0 0.0
        %2024 = vmatprep.subr.mxu0 0.0
        %2025 = vmatpush1.msra.mxu0 0.0
        %2026 = vmatprep.subr.mxu0 0.0
        %2027 = vmatpush1.msra.mxu0 0.0
        %2028 = vmatprep.subr.mxu0 0.0
        %2029 = vmatpush1.msra.mxu0 0.0
        %2030 = vmatprep.subr.mxu0 0.0
        %2031 = vmatpush1.msra.mxu0 0.0
        %2032 = vmatprep.subr.mxu0 0.0
        %2033 = vmatpush1.msra.mxu0 0.0
        %2034 = vmatprep.subr.mxu0 0.0
        %2035 = vmatpush1.msra.mxu0 0.0
        %2036 = vmatprep.subr.mxu0 0.0
        %2037 = vmatpush1.msra.mxu0 0.0
        %2038 = vmatprep.subr.mxu0 0.0
        %2039 = vmatpush1.msra.mxu0 0.0
        %2040 = vmatprep.subr.mxu0 0.0
        %2041 = vmatpush1.msra.mxu0 0.0
        %2042 = vmatprep.subr.mxu0 0.0
        %2043 = vmatpush1.msra.mxu0 0.0
        %2044 = vmatprep.subr.mxu0 0.0
        %2045 = vmatpush1.msra.mxu0 0.0
        %2046 = vmatprep.subr.mxu0 0.0
        %2047 = vmatpush1.msra.mxu0 0.0
        %2048 = vmatprep.subr.mxu0 0.0
        %2049 = vmatpush1.msra.mxu0 %v2016
        %2050 = vmatprep.subr.mxu0 0.0
        %2051 = vmatpush2.msra.mxu0 0.0
        %2052 = vmatprep.subr.mxu0 0.0
        %2053 = vmatpush2.msra.mxu0 0.0
        %2054 = vmatprep.subr.mxu0 0.0
        %2055 = vmatpush2.msra.mxu0 0.0
        %2056 = vmatprep.subr.mxu0 0.0
        %2057 = vmatpush2.msra.mxu0 0.0
        %2058 = vmatprep.subr.mxu0 0.0
        %2059 = vmatpush2.msra.mxu0 0.0
        %2060 = vmatprep.subr.mxu0 0.0
        %2061 = vmatpush2.msra.mxu0 0.0
        %2062 = vmatprep.subr.mxu0 0.0
        %2063 = vmatpush2.msra.mxu0 0.0
        %2064 = vmatprep.subr.mxu0 0.0
        %2065 = vmatpush2.msra.mxu0 0.0
        %2066 = vmatprep.subr.mxu0 0.0
        %2067 = vmatpush2.msra.mxu0 0.0
        %2068 = vmatprep.subr.mxu0 0.0
        %2069 = vmatpush2.msra.mxu0 0.0
        %2070 = vmatprep.subr.mxu0 0.0
        %2071 = vmatpush2.msra.mxu0 0.0
        %2072 = vmatprep.subr.mxu0 0.0
        %2073 = vmatpush2.msra.mxu0 0.0
        %2074 = vmatprep.subr.mxu0 0.0
        %2075 = vmatpush2.msra.mxu0 0.0
        %2076 = vmatprep.subr.mxu0 0.0
        %2077 = vmatpush2.msra.mxu0 0.0
        %2078 = vmatprep.subr.mxu0 0.0
        %2079 = vmatpush2.msra.mxu0 0.0
        %2080 = vmatprep.subr.mxu0 0.0
        %2081 = vmatpush2.msra.mxu0 0.0
        %2082 = vmatprep.mubr.f32.mxu0 0.0
        %2083 = vmatmul.mubr.f32.gmra.mxu0 %v1516
        %v2084 = vpop.f32.mrf.mxu0
        %v2085 = vadd.f32 0.0, %v2084
        %v2086 = vpop.f32.mrf.mxu0
        %2087 = vmatprep.mubr.f32.mxu0 0.0
        %2088 = vmatmul.mubr.f32.gmra.mxu0 %v1519
        %v2089 = vpop.f32.mrf.mxu0
        %v2090 = vadd.f32 0.0, %v2089
        %v2091 = vpop.f32.mrf.mxu0
        %2092 = vmatprep.mubr.f32.mxu0 0.0
        %2093 = vmatmul.mubr.f32.gmra.mxu0 %v1522
        %v2094 = vpop.f32.mrf.mxu0
        %v2095 = vadd.f32 0.0, %v2094
        %v2096 = vpop.f32.mrf.mxu0
        %2097 = vmatprep.mubr.f32.mxu0 0.0
        %2098 = vmatmul.mubr.f32.gmra.mxu0 %v1525
        %v2099 = vpop.f32.mrf.mxu0
        %v2100 = vadd.f32 0.0, %v2099
        %v2101 = vpop.f32.mrf.mxu0
        %2102 = vmatprep.mubr.f32.mxu0 0.0
        %2103 = vmatmul.mubr.f32.gmra.mxu0 %v1528
        %v2104 = vpop.f32.mrf.mxu0
        %v2105 = vadd.f32 0.0, %v2104
        %v2106 = vpop.f32.mrf.mxu0
        %2107 = vmatprep.mubr.f32.mxu0 0.0
        %2108 = vmatmul.mubr.f32.gmra.mxu0 %v1531
        %v2109 = vpop.f32.mrf.mxu0
        %v2110 = vadd.f32 0.0, %v2109
        %v2111 = vpop.f32.mrf.mxu0
        %2112 = vmatprep.mubr.f32.mxu0 0.0
        %2113 = vmatmul.mubr.f32.gmra.mxu0 %v1534
        %v2114 = vpop.f32.mrf.mxu0
        %v2115 = vadd.f32 0.0, %v2114
        %v2116 = vpop.f32.mrf.mxu0
        %2117 = vmatprep.mubr.f32.mxu0 0.0
        %2118 = vmatmul.mubr.f32.gmra.mxu0 %v1537
        %v2119 = vpop.f32.mrf.mxu0
        %v2120 = vadd.f32 0.0, %v2119
        %v2121 = vpop.f32.mrf.mxu0
        %2122 = vmatprep.mubr.f32.mxu0 0.0
        %2123 = vmatmul.mubr.f32.gmra.mxu0 %v1540
        %v2124 = vpop.f32.mrf.mxu0
        %v2125 = vadd.f32 0.0, %v2124
        %v2126 = vpop.f32.mrf.mxu0
        %2127 = vmatprep.mubr.f32.mxu0 0.0
        %2128 = vmatmul.mubr.f32.gmra.mxu0 %v1543
        %v2129 = vpop.f32.mrf.mxu0
        %v2130 = vadd.f32 0.0, %v2129
        %v2131 = vpop.f32.mrf.mxu0
        %2132 = vmatprep.mubr.f32.mxu0 0.0
        %2133 = vmatmul.mubr.f32.gmra.mxu0 %v1546
        %v2134 = vpop.f32.mrf.mxu0
        %v2135 = vadd.f32 0.0, %v2134
        %v2136 = vpop.f32.mrf.mxu0
        %2137 = vmatprep.mubr.f32.mxu0 0.0
        %2138 = vmatmul.mubr.f32.gmra.mxu0 %v1549
        %v2139 = vpop.f32.mrf.mxu0
        %v2140 = vadd.f32 0.0, %v2139
        %v2141 = vpop.f32.mrf.mxu0
        %2142 = vmatprep.mubr.f32.mxu0 0.0
        %2143 = vmatmul.mubr.f32.gmra.mxu0 %v1552
        %v2144 = vpop.f32.mrf.mxu0
        %v2145 = vadd.f32 0.0, %v2144
        %v2146 = vpop.f32.mrf.mxu0
        %2147 = vmatprep.mubr.f32.mxu0 0.0
        %2148 = vmatmul.mubr.f32.gmra.mxu0 %v1555
        %v2149 = vpop.f32.mrf.mxu0
        %v2150 = vadd.f32 0.0, %v2149
        %v2151 = vpop.f32.mrf.mxu0
        %2152 = vmatprep.mubr.f32.mxu0 0.0
        %2153 = vmatmul.mubr.f32.gmra.mxu0 %v1558
        %v2154 = vpop.f32.mrf.mxu0
        %v2155 = vadd.f32 0.0, %v2154
        %v2156 = vpop.f32.mrf.mxu0
        %2157 = vmatprep.mubr.f32.mxu0 0.0
        %2158 = vmatmul.mubr.f32.gmra.mxu0 %v1561
        %v2159 = vpop.f32.mrf.mxu0
        %v2160 = vadd.f32 0.0, %v2159
        %v2161 = vpop.f32.mrf.mxu0
        %2162 = vmatprep.mubr.f32.mxu0 0.0
        %2163 = vmatmul.mubr.f32.gmra.mxu0 %v1564
        %v2164 = vpop.f32.mrf.mxu0
        %v2165 = vadd.f32 0.0, %v2164
        %v2166 = vpop.f32.mrf.mxu0
        %2167 = vmatprep.mubr.f32.mxu0 0.0
        %2168 = vmatmul.mubr.f32.gmra.mxu0 %v1567
        %v2169 = vpop.f32.mrf.mxu0
        %v2170 = vadd.f32 0.0, %v2169
        %v2171 = vpop.f32.mrf.mxu0
        %2172 = vmatprep.mubr.f32.mxu0 0.0
        %2173 = vmatmul.mubr.f32.gmra.mxu0 %v1570
        %v2174 = vpop.f32.mrf.mxu0
        %v2175 = vadd.f32 0.0, %v2174
        %v2176 = vpop.f32.mrf.mxu0
        %2177 = vmatprep.mubr.f32.mxu0 0.0
        %2178 = vmatmul.mubr.f32.gmra.mxu0 %v1573
        %v2179 = vpop.f32.mrf.mxu0
        %v2180 = vadd.f32 0.0, %v2179
        %v2181 = vpop.f32.mrf.mxu0
        %2182 = vmatprep.mubr.f32.mxu0 0.0
        %2183 = vmatmul.mubr.f32.gmra.mxu0 %v1576
        %v2184 = vpop.f32.mrf.mxu0
        %v2185 = vadd.f32 0.0, %v2184
        %v2186 = vpop.f32.mrf.mxu0
        %2187 = vmatprep.mubr.f32.mxu0 0.0
        %2188 = vmatmul.mubr.f32.gmra.mxu0 %v1579
        %v2189 = vpop.f32.mrf.mxu0
        %v2190 = vadd.f32 0.0, %v2189
        %v2191 = vpop.f32.mrf.mxu0
        %2192 = vmatprep.mubr.f32.mxu0 0.0
        %2193 = vmatmul.mubr.f32.gmra.mxu0 %v1582
        %v2194 = vpop.f32.mrf.mxu0
        %v2195 = vadd.f32 0.0, %v2194
        %v2196 = vpop.f32.mrf.mxu0
        %2197 = vmatprep.mubr.f32.mxu0 0.0
        %2198 = vmatmul.mubr.f32.gmra.mxu0 %v1585
        %v2199 = vpop.f32.mrf.mxu0
        %v2200 = vadd.f32 0.0, %v2199
        %v2201 = vpop.f32.mrf.mxu0
        %2202 = vmatprep.mubr.f32.mxu0 0.0
        %2203 = vmatmul.mubr.f32.gmra.mxu0 %v1588
        %v2204 = vpop.f32.mrf.mxu0
        %v2205 = vadd.f32 0.0, %v2204
        %v2206 = vpop.f32.mrf.mxu0
        %2207 = vmatprep.mubr.f32.mxu0 0.0
        %2208 = vmatmul.mubr.f32.gmra.mxu0 %v1591
        %v2209 = vpop.f32.mrf.mxu0
        %v2210 = vadd.f32 0.0, %v2209
        %v2211 = vpop.f32.mrf.mxu0
        %2212 = vmatprep.mubr.f32.mxu0 0.0
        %2213 = vmatmul.mubr.f32.gmra.mxu0 %v1594
        %v2214 = vpop.f32.mrf.mxu0
        %v2215 = vadd.f32 0.0, %v2214
        %v2216 = vpop.f32.mrf.mxu0
        %2217 = vmatprep.mubr.f32.mxu0 0.0
        %2218 = vmatmul.mubr.f32.gmra.mxu0 %v1597
        %v2219 = vpop.f32.mrf.mxu0
        %v2220 = vadd.f32 0.0, %v2219
        %v2221 = vpop.f32.mrf.mxu0
        %2222 = vmatprep.mubr.f32.mxu0 0.0
        %2223 = vmatmul.mubr.f32.gmra.mxu0 %v1600
        %v2224 = vpop.f32.mrf.mxu0
        %v2225 = vadd.f32 0.0, %v2224
        %v2226 = vpop.f32.mrf.mxu0
        %2227 = vmatprep.mubr.f32.mxu0 0.0
        %2228 = vmatmul.mubr.f32.gmra.mxu0 %v1603
        %v2229 = vpop.f32.mrf.mxu0
        %v2230 = vadd.f32 0.0, %v2229
        %v2231 = vpop.f32.mrf.mxu0
        %2232 = vmatprep.mubr.f32.mxu0 0.0
        %2233 = vmatmul.mubr.f32.gmra.mxu0 %v1606
        %v2234 = vpop.f32.mrf.mxu0
        %v2235 = vadd.f32 0.0, %v2234
        %v2236 = vpop.f32.mrf.mxu0
        %2237 = vmatprep.mubr.f32.mxu0 0.0
        %2238 = vmatmul.mubr.f32.gmra.mxu0 %v1609
        %v2239 = vpop.f32.mrf.mxu0
        %v2240 = vadd.f32 0.0, %v2239
        %v2241 = vpop.f32.mrf.mxu0
        %2242 = vmatprep.mubr.f32.mxu0 0.0
        %2243 = vmatmul.mubr.f32.gmra.mxu0 %v1612
        %v2244 = vpop.f32.mrf.mxu0
        %v2245 = vadd.f32 0.0, %v2244
        %v2246 = vpop.f32.mrf.mxu0
        %2247 = vmatprep.mubr.f32.mxu0 0.0
        %2248 = vmatmul.mubr.f32.gmra.mxu0 %v1615
        %v2249 = vpop.f32.mrf.mxu0
        %v2250 = vadd.f32 0.0, %v2249
        %v2251 = vpop.f32.mrf.mxu0
        %2252 = vmatprep.mubr.f32.mxu0 0.0
        %2253 = vmatmul.mubr.f32.gmra.mxu0 %v1618
        %v2254 = vpop.f32.mrf.mxu0
        %v2255 = vadd.f32 0.0, %v2254
        %v2256 = vpop.f32.mrf.mxu0
        %2257 = vmatprep.mubr.f32.mxu0 0.0
        %2258 = vmatmul.mubr.f32.gmra.mxu0 %v1621
        %v2259 = vpop.f32.mrf.mxu0
        %v2260 = vadd.f32 0.0, %v2259
        %v2261 = vpop.f32.mrf.mxu0
        %2262 = vmatprep.mubr.f32.mxu0 0.0
        %2263 = vmatmul.mubr.f32.gmra.mxu0 %v1624
        %v2264 = vpop.f32.mrf.mxu0
        %v2265 = vadd.f32 0.0, %v2264
        %v2266 = vpop.f32.mrf.mxu0
        %2267 = vmatprep.mubr.f32.mxu0 0.0
        %2268 = vmatmul.mubr.f32.gmra.mxu0 %v1627
        %v2269 = vpop.f32.mrf.mxu0
        %v2270 = vadd.f32 0.0, %v2269
        %v2271 = vpop.f32.mrf.mxu0
        %2272 = vmatprep.mubr.f32.mxu0 0.0
        %2273 = vmatmul.mubr.f32.gmra.mxu0 %v1630
        %v2274 = vpop.f32.mrf.mxu0
        %v2275 = vadd.f32 0.0, %v2274
        %v2276 = vpop.f32.mrf.mxu0
        %2277 = vmatprep.mubr.f32.mxu0 0.0
        %2278 = vmatmul.mubr.f32.gmra.mxu0 %v1633
        %v2279 = vpop.f32.mrf.mxu0
        %v2280 = vadd.f32 0.0, %v2279
        %v2281 = vpop.f32.mrf.mxu0
        %2282 = vmatprep.mubr.f32.mxu0 0.0
        %2283 = vmatmul.mubr.f32.gmra.mxu0 %v1636
        %v2284 = vpop.f32.mrf.mxu0
        %v2285 = vadd.f32 0.0, %v2284
        %v2286 = vpop.f32.mrf.mxu0
        %2287 = vmatprep.mubr.f32.mxu0 0.0
        %2288 = vmatmul.mubr.f32.gmra.mxu0 %v1639
        %v2289 = vpop.f32.mrf.mxu0
        %v2290 = vadd.f32 0.0, %v2289
        %v2291 = vpop.f32.mrf.mxu0
        %2292 = vmatprep.mubr.f32.mxu0 0.0
        %2293 = vmatmul.mubr.f32.gmra.mxu0 %v1642
        %v2294 = vpop.f32.mrf.mxu0
        %v2295 = vadd.f32 0.0, %v2294
        %v2296 = vpop.f32.mrf.mxu0
        %2297 = vmatprep.mubr.f32.mxu0 0.0
        %2298 = vmatmul.mubr.f32.gmra.mxu0 %v1645
        %v2299 = vpop.f32.mrf.mxu0
        %v2300 = vadd.f32 0.0, %v2299
        %v2301 = vpop.f32.mrf.mxu0
        %2302 = vmatprep.mubr.f32.mxu0 0.0
        %2303 = vmatmul.mubr.f32.gmra.mxu0 %v1648
        %v2304 = vpop.f32.mrf.mxu0
        %v2305 = vadd.f32 0.0, %v2304
        %v2306 = vpop.f32.mrf.mxu0
        %2307 = vmatprep.mubr.f32.mxu0 0.0
        %2308 = vmatmul.mubr.f32.gmra.mxu0 %v2007
        %v2309 = vpop.f32.mrf.mxu0
        %v2310 = vadd.f32 0.0, %v2309
        %v2311 = vpop.f32.mrf.mxu0
        %2312 = vmatprep.mubr.f32.mxu0 0.0
        %2313 = vmatmul.mubr.f32.gmra.mxu0 %v2010
        %v2314 = vpop.f32.mrf.mxu0
        %v2315 = vadd.f32 0.0, %v2314
        %v2316 = vpop.f32.mrf.mxu0
        %2317 = vmatprep.mubr.f32.mxu0 0.0
        %2318 = vmatmul.mubr.f32.gmra.mxu0 %v2013
        %v2319 = vpop.f32.mrf.mxu0
        %v2320 = vadd.f32 0.0, %v2319
        %v2321 = vpop.f32.mrf.mxu0
        %2322 = vdwg.mxu0
        %v2323 = vadd.f32 %v1958, %v2085
        %v2324 = vadd.f32 %v1959, %v2090
        %v2325 = vadd.f32 %v1960, %v2095
        %v2326 = vadd.f32 %v1961, %v2100
        %v2327 = vadd.f32 %v1962, %v2105
        %v2328 = vadd.f32 %v1963, %v2110
        %v2329 = vadd.f32 %v1964, %v2115
        %v2330 = vadd.f32 %v1965, %v2120
        %v2331 = vadd.f32 %v1966, %v2125
        %v2332 = vadd.f32 %v1967, %v2130
        %v2333 = vadd.f32 %v1968, %v2135
        %v2334 = vadd.f32 %v1969, %v2140
        %v2335 = vadd.f32 %v1970, %v2145
        %v2336 = vadd.f32 %v1971, %v2150
        %v2337 = vadd.f32 %v1972, %v2155
        %v2338 = vadd.f32 %v1973, %v2160
        %v2339 = vadd.f32 %v1974, %v2165
        %v2340 = vadd.f32 %v1975, %v2170
        %v2341 = vadd.f32 %v1976, %v2175
        %v2342 = vadd.f32 %v1977, %v2180
        %v2343 = vadd.f32 %v1978, %v2185
        %v2344 = vadd.f32 %v1979, %v2190
        %v2345 = vadd.f32 %v1980, %v2195
        %v2346 = vadd.f32 %v1981, %v2200
        %v2347 = vadd.f32 %v1982, %v2205
        %v2348 = vadd.f32 %v1983, %v2210
        %v2349 = vadd.f32 %v1984, %v2215
        %v2350 = vadd.f32 %v1985, %v2220
        %v2351 = vadd.f32 %v1986, %v2225
        %v2352 = vadd.f32 %v1987, %v2230
        %v2353 = vadd.f32 %v1988, %v2235
        %v2354 = vadd.f32 %v1989, %v2240
        %v2355 = vadd.f32 %v1990, %v2245
        %v2356 = vadd.f32 %v1991, %v2250
        %v2357 = vadd.f32 %v1992, %v2255
        %v2358 = vadd.f32 %v1993, %v2260
        %v2359 = vadd.f32 %v1994, %v2265
        %v2360 = vadd.f32 %v1995, %v2270
        %v2361 = vadd.f32 %v1996, %v2275
        %v2362 = vadd.f32 %v1997, %v2280
        %v2363 = vadd.f32 %v1998, %v2285
        %v2364 = vadd.f32 %v1999, %v2290
        %v2365 = vadd.f32 %v2000, %v2295
        %v2366 = vadd.f32 %v2001, %v2300
        %v2367 = vadd.f32 %v2002, %v2305
        %v2368 = vadd.f32 %v2003, %v2310
        %v2369 = vadd.f32 %v2004, %v2315
        %v2370 = vadd.f32 %v2005, %v2320
        %v2372 = vsel %vm370, %v247, 0
        %v2375 = vsel %vm370, %v248, 0
        %v2378 = vsel %vm370, %v249, 0
        %v2381 = vsel %vm515, %v257, 0
        %2383 = vmatprep.subr.mxu0 0.0
        %2384 = vmatpush1.msra.mxu0 0.0
        %2385 = vmatprep.subr.mxu0 0.0
        %2386 = vmatpush1.msra.mxu0 0.0
        %2387 = vmatprep.subr.mxu0 0.0
        %2388 = vmatpush1.msra.mxu0 0.0
        %2389 = vmatprep.subr.mxu0 0.0
        %2390 = vmatpush1.msra.mxu0 0.0
        %2391 = vmatprep.subr.mxu0 0.0
        %2392 = vmatpush1.msra.mxu0 0.0
        %2393 = vmatprep.subr.mxu0 0.0
        %2394 = vmatpush1.msra.mxu0 0.0
        %2395 = vmatprep.subr.mxu0 0.0
        %2396 = vmatpush1.msra.mxu0 0.0
        %2397 = vmatprep.subr.mxu0 0.0
        %2398 = vmatpush1.msra.mxu0 0.0
        %2399 = vmatprep.subr.mxu0 0.0
        %2400 = vmatpush1.msra.mxu0 0.0
        %2401 = vmatprep.subr.mxu0 0.0
        %2402 = vmatpush1.msra.mxu0 0.0
        %2403 = vmatprep.subr.mxu0 0.0
        %2404 = vmatpush1.msra.mxu0 0.0
        %2405 = vmatprep.subr.mxu0 0.0
        %2406 = vmatpush1.msra.mxu0 0.0
        %2407 = vmatprep.subr.mxu0 0.0
        %2408 = vmatpush1.msra.mxu0 0.0
        %2409 = vmatprep.subr.mxu0 0.0
        %2410 = vmatpush1.msra.mxu0 0.0
        %2411 = vmatprep.subr.mxu0 0.0
        %2412 = vmatpush1.msra.mxu0 0.0
        %2413 = vmatprep.subr.mxu0 0.0
        %2414 = vmatpush1.msra.mxu0 %v2381
        %2415 = vmatprep.subr.mxu0 0.0
        %2416 = vmatpush2.msra.mxu0 0.0
        %2417 = vmatprep.subr.mxu0 0.0
        %2418 = vmatpush2.msra.mxu0 0.0
        %2419 = vmatprep.subr.mxu0 0.0
        %2420 = vmatpush2.msra.mxu0 0.0
        %2421 = vmatprep.subr.mxu0 0.0
        %2422 = vmatpush2.msra.mxu0 0.0
        %2423 = vmatprep.subr.mxu0 0.0
        %2424 = vmatpush2.msra.mxu0 0.0
        %2425 = vmatprep.subr.mxu0 0.0
        %2426 = vmatpush2.msra.mxu0 0.0
        %2427 = vmatprep.subr.mxu0 0.0
        %2428 = vmatpush2.msra.mxu0 0.0
        %2429 = vmatprep.subr.mxu0 0.0
        %2430 = vmatpush2.msra.mxu0 0.0
        %2431 = vmatprep.subr.mxu0 0.0
        %2432 = vmatpush2.msra.mxu0 0.0
        %2433 = vmatprep.subr.mxu0 0.0
        %2434 = vmatpush2.msra.mxu0 0.0
        %2435 = vmatprep.subr.mxu0 0.0
        %2436 = vmatpush2.msra.mxu0 0.0
        %2437 = vmatprep.subr.mxu0 0.0
        %2438 = vmatpush2.msra.mxu0 0.0
        %2439 = vmatprep.subr.mxu0 0.0
        %2440 = vmatpush2.msra.mxu0 0.0
        %2441 = vmatprep.subr.mxu0 0.0
        %2442 = vmatpush2.msra.mxu0 0.0
        %2443 = vmatprep.subr.mxu0 0.0
        %2444 = vmatpush2.msra.mxu0 0.0
        %2445 = vmatprep.subr.mxu0 0.0
        %2446 = vmatpush2.msra.mxu0 0.0
        %2447 = vmatprep.mubr.f32.mxu0 0.0
        %2448 = vmatmul.mubr.f32.gmra.mxu0 %v1525
        %v2449 = vpop.f32.mrf.mxu0
        %v2450 = vadd.f32 0.0, %v2449
        %v2451 = vpop.f32.mrf.mxu0
        %2452 = vmatprep.mubr.f32.mxu0 0.0
        %2453 = vmatmul.mubr.f32.gmra.mxu0 %v1528
        %v2454 = vpop.f32.mrf.mxu0
        %v2455 = vadd.f32 0.0, %v2454
        %v2456 = vpop.f32.mrf.mxu0
        %2457 = vmatprep.mubr.f32.mxu0 0.0
        %2458 = vmatmul.mubr.f32.gmra.mxu0 %v1531
        %v2459 = vpop.f32.mrf.mxu0
        %v2460 = vadd.f32 0.0, %v2459
        %v2461 = vpop.f32.mrf.mxu0
        %2462 = vmatprep.mubr.f32.mxu0 0.0
        %2463 = vmatmul.mubr.f32.gmra.mxu0 %v1534
        %v2464 = vpop.f32.mrf.mxu0
        %v2465 = vadd.f32 0.0, %v2464
        %v2466 = vpop.f32.mrf.mxu0
        %2467 = vmatprep.mubr.f32.mxu0 0.0
        %2468 = vmatmul.mubr.f32.gmra.mxu0 %v1537
        %v2469 = vpop.f32.mrf.mxu0
        %v2470 = vadd.f32 0.0, %v2469
        %v2471 = vpop.f32.mrf.mxu0
        %2472 = vmatprep.mubr.f32.mxu0 0.0
        %2473 = vmatmul.mubr.f32.gmra.mxu0 %v1540
        %v2474 = vpop.f32.mrf.mxu0
        %v2475 = vadd.f32 0.0, %v2474
        %v2476 = vpop.f32.mrf.mxu0
        %2477 = vmatprep.mubr.f32.mxu0 0.0
        %2478 = vmatmul.mubr.f32.gmra.mxu0 %v1543
        %v2479 = vpop.f32.mrf.mxu0
        %v2480 = vadd.f32 0.0, %v2479
        %v2481 = vpop.f32.mrf.mxu0
        %2482 = vmatprep.mubr.f32.mxu0 0.0
        %2483 = vmatmul.mubr.f32.gmra.mxu0 %v1546
        %v2484 = vpop.f32.mrf.mxu0
        %v2485 = vadd.f32 0.0, %v2484
        %v2486 = vpop.f32.mrf.mxu0
        %2487 = vmatprep.mubr.f32.mxu0 0.0
        %2488 = vmatmul.mubr.f32.gmra.mxu0 %v1549
        %v2489 = vpop.f32.mrf.mxu0
        %v2490 = vadd.f32 0.0, %v2489
        %v2491 = vpop.f32.mrf.mxu0
        %2492 = vmatprep.mubr.f32.mxu0 0.0
        %2493 = vmatmul.mubr.f32.gmra.mxu0 %v1552
        %v2494 = vpop.f32.mrf.mxu0
        %v2495 = vadd.f32 0.0, %v2494
        %v2496 = vpop.f32.mrf.mxu0
        %2497 = vmatprep.mubr.f32.mxu0 0.0
        %2498 = vmatmul.mubr.f32.gmra.mxu0 %v1555
        %v2499 = vpop.f32.mrf.mxu0
        %v2500 = vadd.f32 0.0, %v2499
        %v2501 = vpop.f32.mrf.mxu0
        %2502 = vmatprep.mubr.f32.mxu0 0.0
        %2503 = vmatmul.mubr.f32.gmra.mxu0 %v1558
        %v2504 = vpop.f32.mrf.mxu0
        %v2505 = vadd.f32 0.0, %v2504
        %v2506 = vpop.f32.mrf.mxu0
        %2507 = vmatprep.mubr.f32.mxu0 0.0
        %2508 = vmatmul.mubr.f32.gmra.mxu0 %v1561
        %v2509 = vpop.f32.mrf.mxu0
        %v2510 = vadd.f32 0.0, %v2509
        %v2511 = vpop.f32.mrf.mxu0
        %2512 = vmatprep.mubr.f32.mxu0 0.0
        %2513 = vmatmul.mubr.f32.gmra.mxu0 %v1564
        %v2514 = vpop.f32.mrf.mxu0
        %v2515 = vadd.f32 0.0, %v2514
        %v2516 = vpop.f32.mrf.mxu0
        %2517 = vmatprep.mubr.f32.mxu0 0.0
        %2518 = vmatmul.mubr.f32.gmra.mxu0 %v1567
        %v2519 = vpop.f32.mrf.mxu0
        %v2520 = vadd.f32 0.0, %v2519
        %v2521 = vpop.f32.mrf.mxu0
        %2522 = vmatprep.mubr.f32.mxu0 0.0
        %2523 = vmatmul.mubr.f32.gmra.mxu0 %v1570
        %v2524 = vpop.f32.mrf.mxu0
        %v2525 = vadd.f32 0.0, %v2524
        %v2526 = vpop.f32.mrf.mxu0
        %2527 = vmatprep.mubr.f32.mxu0 0.0
        %2528 = vmatmul.mubr.f32.gmra.mxu0 %v1573
        %v2529 = vpop.f32.mrf.mxu0
        %v2530 = vadd.f32 0.0, %v2529
        %v2531 = vpop.f32.mrf.mxu0
        %2532 = vmatprep.mubr.f32.mxu0 0.0
        %2533 = vmatmul.mubr.f32.gmra.mxu0 %v1576
        %v2534 = vpop.f32.mrf.mxu0
        %v2535 = vadd.f32 0.0, %v2534
        %v2536 = vpop.f32.mrf.mxu0
        %2537 = vmatprep.mubr.f32.mxu0 0.0
        %2538 = vmatmul.mubr.f32.gmra.mxu0 %v1579
        %v2539 = vpop.f32.mrf.mxu0
        %v2540 = vadd.f32 0.0, %v2539
        %v2541 = vpop.f32.mrf.mxu0
        %2542 = vmatprep.mubr.f32.mxu0 0.0
        %2543 = vmatmul.mubr.f32.gmra.mxu0 %v1582
        %v2544 = vpop.f32.mrf.mxu0
        %v2545 = vadd.f32 0.0, %v2544
        %v2546 = vpop.f32.mrf.mxu0
        %2547 = vmatprep.mubr.f32.mxu0 0.0
        %2548 = vmatmul.mubr.f32.gmra.mxu0 %v1585
        %v2549 = vpop.f32.mrf.mxu0
        %v2550 = vadd.f32 0.0, %v2549
        %v2551 = vpop.f32.mrf.mxu0
        %2552 = vmatprep.mubr.f32.mxu0 0.0
        %2553 = vmatmul.mubr.f32.gmra.mxu0 %v1588
        %v2554 = vpop.f32.mrf.mxu0
        %v2555 = vadd.f32 0.0, %v2554
        %v2556 = vpop.f32.mrf.mxu0
        %2557 = vmatprep.mubr.f32.mxu0 0.0
        %2558 = vmatmul.mubr.f32.gmra.mxu0 %v1591
        %v2559 = vpop.f32.mrf.mxu0
        %v2560 = vadd.f32 0.0, %v2559
        %v2561 = vpop.f32.mrf.mxu0
        %2562 = vmatprep.mubr.f32.mxu0 0.0
        %2563 = vmatmul.mubr.f32.gmra.mxu0 %v1594
        %v2564 = vpop.f32.mrf.mxu0
        %v2565 = vadd.f32 0.0, %v2564
        %v2566 = vpop.f32.mrf.mxu0
        %2567 = vmatprep.mubr.f32.mxu0 0.0
        %2568 = vmatmul.mubr.f32.gmra.mxu0 %v1597
        %v2569 = vpop.f32.mrf.mxu0
        %v2570 = vadd.f32 0.0, %v2569
        %v2571 = vpop.f32.mrf.mxu0
        %2572 = vmatprep.mubr.f32.mxu0 0.0
        %2573 = vmatmul.mubr.f32.gmra.mxu0 %v1600
        %v2574 = vpop.f32.mrf.mxu0
        %v2575 = vadd.f32 0.0, %v2574
        %v2576 = vpop.f32.mrf.mxu0
        %2577 = vmatprep.mubr.f32.mxu0 0.0
        %2578 = vmatmul.mubr.f32.gmra.mxu0 %v1603
        %v2579 = vpop.f32.mrf.mxu0
        %v2580 = vadd.f32 0.0, %v2579
        %v2581 = vpop.f32.mrf.mxu0
        %2582 = vmatprep.mubr.f32.mxu0 0.0
        %2583 = vmatmul.mubr.f32.gmra.mxu0 %v1606
        %v2584 = vpop.f32.mrf.mxu0
        %v2585 = vadd.f32 0.0, %v2584
        %v2586 = vpop.f32.mrf.mxu0
        %2587 = vmatprep.mubr.f32.mxu0 0.0
        %2588 = vmatmul.mubr.f32.gmra.mxu0 %v1609
        %v2589 = vpop.f32.mrf.mxu0
        %v2590 = vadd.f32 0.0, %v2589
        %v2591 = vpop.f32.mrf.mxu0
        %2592 = vmatprep.mubr.f32.mxu0 0.0
        %2593 = vmatmul.mubr.f32.gmra.mxu0 %v1612
        %v2594 = vpop.f32.mrf.mxu0
        %v2595 = vadd.f32 0.0, %v2594
        %v2596 = vpop.f32.mrf.mxu0
        %2597 = vmatprep.mubr.f32.mxu0 0.0
        %2598 = vmatmul.mubr.f32.gmra.mxu0 %v1615
        %v2599 = vpop.f32.mrf.mxu0
        %v2600 = vadd.f32 0.0, %v2599
        %v2601 = vpop.f32.mrf.mxu0
        %2602 = vmatprep.mubr.f32.mxu0 0.0
        %2603 = vmatmul.mubr.f32.gmra.mxu0 %v1618
        %v2604 = vpop.f32.mrf.mxu0
        %v2605 = vadd.f32 0.0, %v2604
        %v2606 = vpop.f32.mrf.mxu0
        %2607 = vmatprep.mubr.f32.mxu0 0.0
        %2608 = vmatmul.mubr.f32.gmra.mxu0 %v1621
        %v2609 = vpop.f32.mrf.mxu0
        %v2610 = vadd.f32 0.0, %v2609
        %v2611 = vpop.f32.mrf.mxu0
        %2612 = vmatprep.mubr.f32.mxu0 0.0
        %2613 = vmatmul.mubr.f32.gmra.mxu0 %v1624
        %v2614 = vpop.f32.mrf.mxu0
        %v2615 = vadd.f32 0.0, %v2614
        %v2616 = vpop.f32.mrf.mxu0
        %2617 = vmatprep.mubr.f32.mxu0 0.0
        %2618 = vmatmul.mubr.f32.gmra.mxu0 %v1627
        %v2619 = vpop.f32.mrf.mxu0
        %v2620 = vadd.f32 0.0, %v2619
        %v2621 = vpop.f32.mrf.mxu0
        %2622 = vmatprep.mubr.f32.mxu0 0.0
        %2623 = vmatmul.mubr.f32.gmra.mxu0 %v1630
        %v2624 = vpop.f32.mrf.mxu0
        %v2625 = vadd.f32 0.0, %v2624
        %v2626 = vpop.f32.mrf.mxu0
        %2627 = vmatprep.mubr.f32.mxu0 0.0
        %2628 = vmatmul.mubr.f32.gmra.mxu0 %v1633
        %v2629 = vpop.f32.mrf.mxu0
        %v2630 = vadd.f32 0.0, %v2629
        %v2631 = vpop.f32.mrf.mxu0
        %2632 = vmatprep.mubr.f32.mxu0 0.0
        %2633 = vmatmul.mubr.f32.gmra.mxu0 %v1636
        %v2634 = vpop.f32.mrf.mxu0
        %v2635 = vadd.f32 0.0, %v2634
        %v2636 = vpop.f32.mrf.mxu0
        %2637 = vmatprep.mubr.f32.mxu0 0.0
        %2638 = vmatmul.mubr.f32.gmra.mxu0 %v1639
        %v2639 = vpop.f32.mrf.mxu0
        %v2640 = vadd.f32 0.0, %v2639
        %v2641 = vpop.f32.mrf.mxu0
        %2642 = vmatprep.mubr.f32.mxu0 0.0
        %2643 = vmatmul.mubr.f32.gmra.mxu0 %v1642
        %v2644 = vpop.f32.mrf.mxu0
        %v2645 = vadd.f32 0.0, %v2644
        %v2646 = vpop.f32.mrf.mxu0
        %2647 = vmatprep.mubr.f32.mxu0 0.0
        %2648 = vmatmul.mubr.f32.gmra.mxu0 %v1645
        %v2649 = vpop.f32.mrf.mxu0
        %v2650 = vadd.f32 0.0, %v2649
        %v2651 = vpop.f32.mrf.mxu0
        %2652 = vmatprep.mubr.f32.mxu0 0.0
        %2653 = vmatmul.mubr.f32.gmra.mxu0 %v1648
        %v2654 = vpop.f32.mrf.mxu0
        %v2655 = vadd.f32 0.0, %v2654
        %v2656 = vpop.f32.mrf.mxu0
        %2657 = vmatprep.mubr.f32.mxu0 0.0
        %2658 = vmatmul.mubr.f32.gmra.mxu0 %v2007
        %v2659 = vpop.f32.mrf.mxu0
        %v2660 = vadd.f32 0.0, %v2659
        %v2661 = vpop.f32.mrf.mxu0
        %2662 = vmatprep.mubr.f32.mxu0 0.0
        %2663 = vmatmul.mubr.f32.gmra.mxu0 %v2010
        %v2664 = vpop.f32.mrf.mxu0
        %v2665 = vadd.f32 0.0, %v2664
        %v2666 = vpop.f32.mrf.mxu0
        %2667 = vmatprep.mubr.f32.mxu0 0.0
        %2668 = vmatmul.mubr.f32.gmra.mxu0 %v2013
        %v2669 = vpop.f32.mrf.mxu0
        %v2670 = vadd.f32 0.0, %v2669
        %v2671 = vpop.f32.mrf.mxu0
        %2672 = vmatprep.mubr.f32.mxu0 0.0
        %2673 = vmatmul.mubr.f32.gmra.mxu0 %v2372
        %v2674 = vpop.f32.mrf.mxu0
        %v2675 = vadd.f32 0.0, %v2674
        %v2676 = vpop.f32.mrf.mxu0
        %2677 = vmatprep.mubr.f32.mxu0 0.0
        %2678 = vmatmul.mubr.f32.gmra.mxu0 %v2375
        %v2679 = vpop.f32.mrf.mxu0
        %v2680 = vadd.f32 0.0, %v2679
        %v2681 = vpop.f32.mrf.mxu0
        %2682 = vmatprep.mubr.f32.mxu0 0.0
        %2683 = vmatmul.mubr.f32.gmra.mxu0 %v2378
        %v2684 = vpop.f32.mrf.mxu0
        %v2685 = vadd.f32 0.0, %v2684
        %v2686 = vpop.f32.mrf.mxu0
        %2687 = vdwg.mxu0
        %v2688 = vadd.f32 %v2323, %v2450
        %v2689 = vadd.f32 %v2324, %v2455
        %v2690 = vadd.f32 %v2325, %v2460
        %v2691 = vadd.f32 %v2326, %v2465
        %v2692 = vadd.f32 %v2327, %v2470
        %v2693 = vadd.f32 %v2328, %v2475
        %v2694 = vadd.f32 %v2329, %v2480
        %v2695 = vadd.f32 %v2330, %v2485
        %v2696 = vadd.f32 %v2331, %v2490
        %v2697 = vadd.f32 %v2332, %v2495
        %v2698 = vadd.f32 %v2333, %v2500
        %v2699 = vadd.f32 %v2334, %v2505
        %v2700 = vadd.f32 %v2335, %v2510
        %v2701 = vadd.f32 %v2336, %v2515
        %v2702 = vadd.f32 %v2337, %v2520
        %v2703 = vadd.f32 %v2338, %v2525
        %v2704 = vadd.f32 %v2339, %v2530
        %v2705 = vadd.f32 %v2340, %v2535
        %v2706 = vadd.f32 %v2341, %v2540
        %v2707 = vadd.f32 %v2342, %v2545
        %v2708 = vadd.f32 %v2343, %v2550
        %v2709 = vadd.f32 %v2344, %v2555
        %v2710 = vadd.f32 %v2345, %v2560
        %v2711 = vadd.f32 %v2346, %v2565
        %v2712 = vadd.f32 %v2347, %v2570
        %v2713 = vadd.f32 %v2348, %v2575
        %v2714 = vadd.f32 %v2349, %v2580
        %v2715 = vadd.f32 %v2350, %v2585
        %v2716 = vadd.f32 %v2351, %v2590
        %v2717 = vadd.f32 %v2352, %v2595
        %v2718 = vadd.f32 %v2353, %v2600
        %v2719 = vadd.f32 %v2354, %v2605
        %v2720 = vadd.f32 %v2355, %v2610
        %v2721 = vadd.f32 %v2356, %v2615
        %v2722 = vadd.f32 %v2357, %v2620
        %v2723 = vadd.f32 %v2358, %v2625
        %v2724 = vadd.f32 %v2359, %v2630
        %v2725 = vadd.f32 %v2360, %v2635
        %v2726 = vadd.f32 %v2361, %v2640
        %v2727 = vadd.f32 %v2362, %v2645
        %v2728 = vadd.f32 %v2363, %v2650
        %v2729 = vadd.f32 %v2364, %v2655
        %v2730 = vadd.f32 %v2365, %v2660
        %v2731 = vadd.f32 %v2366, %v2665
        %v2732 = vadd.f32 %v2367, %v2670
        %v2733 = vadd.f32 %v2368, %v2675
        %v2734 = vadd.f32 %v2369, %v2680
        %v2735 = vadd.f32 %v2370, %v2685
        %v2736 = vrot.slane %v196, 1
        %v2737 = vrot.slane %v197, 1
        %v2738 = vrot.slane %v198, 1
        %v2739 = vrot.slane %v199, 1
        %v2740 = vrot.slane %v200, 1
        %v2741 = vrot.slane %v201, 1
        %v2742 = vrot.slane %v202, 1
        %v2743 = vrot.slane %v203, 1
        %v2744 = vrot.slane %v204, 1
        %v2745 = vrot.slane %v205, 1
        %v2746 = vrot.slane %v206, 1
        %v2747 = vrot.slane %v207, 1
        %v2748 = vrot.slane %v208, 1
        %v2749 = vrot.slane %v209, 1
        %v2750 = vrot.slane %v210, 1
        %v2751 = vrot.slane %v211, 1
        %v2752 = vrot.slane %v212, 1
        %v2753 = vrot.slane %v213, 1
        %v2754 = vrot.slane %v214, 1
        %v2755 = vrot.slane %v215, 1
        %v2756 = vrot.slane %v216, 1
        %v2757 = vrot.slane %v217, 1
        %v2758 = vrot.slane %v218, 1
        %v2759 = vrot.slane %v219, 1
        %v2760 = vrot.slane %v220, 1
        %v2761 = vrot.slane %v221, 1
        %v2762 = vrot.slane %v222, 1
        %v2763 = vrot.slane %v223, 1
        %v2764 = vrot.slane %v224, 1
        %v2765 = vrot.slane %v225, 1
        %v2766 = vrot.slane %v226, 1
        %v2767 = vrot.slane %v227, 1
        %v2768 = vrot.slane %v228, 1
        %v2769 = vrot.slane %v229, 1
        %v2770 = vrot.slane %v230, 1
        %v2771 = vrot.slane %v231, 1
        %v2772 = vrot.slane %v232, 1
        %v2773 = vrot.slane %v233, 1
        %v2774 = vrot.slane %v234, 1
        %v2775 = vrot.slane %v235, 1
        %v2776 = vrot.slane %v236, 1
        %v2777 = vrot.slane %v237, 1
        %v2778 = vrot.slane %v238, 1
        %v2779 = vrot.slane %v239, 1
        %v2780 = vrot.slane %v240, 1
        %v2781 = vrot.slane %v241, 1
        %v2782 = vrot.slane %v242, 1
        %v2783 = vrot.slane %v243, 1
        %v2784 = vrot.slane %v244, 1
        %v2785 = vrot.slane %v245, 1
        %v2786 = vrot.slane %v246, 1
        %v2787 = vrot.slane %v247, 1
        %v2788 = vrot.slane %v248, 1
        %v2789 = vrot.slane %v249, 1
        %vm2790 = vcmp.lt.s32.totalorder %v314, 7
        %v2791 = vsel %vm2790, %v2788, %v2789
        %v2792 = vsel %vm2790, %v2787, %v2788
        %v2793 = vsel %vm2790, %v2786, %v2787
        %v2794 = vsel %vm2790, %v2785, %v2786
        %v2795 = vsel %vm2790, %v2784, %v2785
        %v2796 = vsel %vm2790, %v2783, %v2784
        %v2797 = vsel %vm2790, %v2782, %v2783
        %v2798 = vsel %vm2790, %v2781, %v2782
        %v2799 = vsel %vm2790, %v2780, %v2781
        %v2800 = vsel %vm2790, %v2779, %v2780
        %v2801 = vsel %vm2790, %v2778, %v2779
        %v2802 = vsel %vm2790, %v2777, %v2778
        %v2803 = vsel %vm2790, %v2776, %v2777
        %v2804 = vsel %vm2790, %v2775, %v2776
        %v2805 = vsel %vm2790, %v2774, %v2775
        %v2806 = vsel %vm2790, %v2773, %v2774
        %v2807 = vsel %vm2790, %v2772, %v2773
        %v2808 = vsel %vm2790, %v2771, %v2772
        %v2809 = vsel %vm2790, %v2770, %v2771
        %v2810 = vsel %vm2790, %v2769, %v2770
        %v2811 = vsel %vm2790, %v2768, %v2769
        %v2812 = vsel %vm2790, %v2767, %v2768
        %v2813 = vsel %vm2790, %v2766, %v2767
        %v2814 = vsel %vm2790, %v2765, %v2766
        %v2815 = vsel %vm2790, %v2764, %v2765
        %v2816 = vsel %vm2790, %v2763, %v2764
        %v2817 = vsel %vm2790, %v2762, %v2763
        %v2818 = vsel %vm2790, %v2761, %v2762
        %v2819 = vsel %vm2790, %v2760, %v2761
        %v2820 = vsel %vm2790, %v2759, %v2760
        %v2821 = vsel %vm2790, %v2758, %v2759
        %v2822 = vsel %vm2790, %v2757, %v2758
        %v2823 = vsel %vm2790, %v2756, %v2757
        %v2824 = vsel %vm2790, %v2755, %v2756
        %v2825 = vsel %vm2790, %v2754, %v2755
        %v2826 = vsel %vm2790, %v2753, %v2754
        %v2827 = vsel %vm2790, %v2752, %v2753
        %v2828 = vsel %vm2790, %v2751, %v2752
        %v2829 = vsel %vm2790, %v2750, %v2751
        %v2830 = vsel %vm2790, %v2749, %v2750
        %v2831 = vsel %vm2790, %v2748, %v2749
        %v2832 = vsel %vm2790, %v2747, %v2748
        %v2833 = vsel %vm2790, %v2746, %v2747
        %v2834 = vsel %vm2790, %v2745, %v2746
        %v2835 = vsel %vm2790, %v2744, %v2745
        %v2836 = vsel %vm2790, %v2743, %v2744
        %v2837 = vsel %vm2790, %v2742, %v2743
        %v2838 = vsel %vm2790, %v2741, %v2742
        %v2839 = vsel %vm2790, %v2740, %v2741
        %v2840 = vsel %vm2790, %v2739, %v2740
        %v2841 = vsel %vm2790, %v2738, %v2739
        %v2842 = vsel %vm2790, %v2737, %v2738
        %v2843 = vsel %vm2790, %v2736, %v2737
        %v2844 = vsel %vm2790, %v2789, %v2736
        %v2846 = vsel %vm370, %v2843, 0
        %v2849 = vsel %vm370, %v2842, 0
        %v2852 = vsel %vm370, %v2841, 0
        %v2855 = vsel %vm370, %v2840, 0
        %v2858 = vsel %vm370, %v2839, 0
        %v2861 = vsel %vm370, %v2838, 0
        %v2864 = vsel %vm370, %v2837, 0
        %v2867 = vsel %vm370, %v2836, 0
        %v2870 = vsel %vm370, %v2835, 0
        %v2873 = vsel %vm370, %v2834, 0
        %v2876 = vsel %vm370, %v2833, 0
        %v2879 = vsel %vm370, %v2832, 0
        %v2882 = vsel %vm370, %v2831, 0
        %v2885 = vsel %vm370, %v2830, 0
        %v2888 = vsel %vm370, %v2829, 0
        %v2891 = vsel %vm370, %v2828, 0
        %v2894 = vsel %vm370, %v2827, 0
        %v2897 = vsel %vm370, %v2826, 0
        %v2900 = vsel %vm370, %v2825, 0
        %v2903 = vsel %vm370, %v2824, 0
        %v2906 = vsel %vm370, %v2823, 0
        %v2909 = vsel %vm370, %v2822, 0
        %v2912 = vsel %vm370, %v2821, 0
        %v2915 = vsel %vm370, %v2820, 0
        %v2918 = vsel %vm370, %v2819, 0
        %v2921 = vsel %vm370, %v2818, 0
        %v2924 = vsel %vm370, %v2817, 0
        %v2927 = vsel %vm370, %v2816, 0
        %v2930 = vsel %vm370, %v2815, 0
        %v2933 = vsel %vm370, %v2814, 0
        %v2936 = vsel %vm370, %v2813, 0
        %v2939 = vsel %vm370, %v2812, 0
        %v2942 = vsel %vm370, %v2811, 0
        %v2945 = vsel %vm370, %v2810, 0
        %v2948 = vsel %vm370, %v2809, 0
        %v2951 = vsel %vm370, %v2808, 0
        %v2954 = vsel %vm370, %v2807, 0
        %v2957 = vsel %vm370, %v2806, 0
        %v2960 = vsel %vm370, %v2805, 0
        %v2963 = vsel %vm370, %v2804, 0
        %v2966 = vsel %vm370, %v2803, 0
        %v2969 = vsel %vm370, %v2802, 0
        %v2972 = vsel %vm370, %v2801, 0
        %v2975 = vsel %vm370, %v2800, 0
        %v2978 = vsel %vm370, %v2799, 0
        %v2981 = vsel %vm370, %v2798, 0
        %v2984 = vsel %vm370, %v2797, 0
        %v2987 = vsel %vm370, %v2796, 0
        %v2990 = vsel %vm515, %v252, 0
        %2992 = vmatprep.subr.mxu0 0.0
        %2993 = vmatpush1.msra.mxu0 0.0
        %2994 = vmatprep.subr.mxu0 0.0
        %2995 = vmatpush1.msra.mxu0 0.0
        %2996 = vmatprep.subr.mxu0 0.0
        %2997 = vmatpush1.msra.mxu0 0.0
        %2998 = vmatprep.subr.mxu0 0.0
        %2999 = vmatpush1.msra.mxu0 0.0
        %3000 = vmatprep.subr.mxu0 0.0
        %3001 = vmatpush1.msra.mxu0 0.0
        %3002 = vmatprep.subr.mxu0 0.0
        %3003 = vmatpush1.msra.mxu0 0.0
        %3004 = vmatprep.subr.mxu0 0.0
        %3005 = vmatpush1.msra.mxu0 0.0
        %3006 = vmatprep.subr.mxu0 0.0
        %3007 = vmatpush1.msra.mxu0 0.0
        %3008 = vmatprep.subr.mxu0 0.0
        %3009 = vmatpush1.msra.mxu0 0.0
        %3010 = vmatprep.subr.mxu0 0.0
        %3011 = vmatpush1.msra.mxu0 0.0
        %3012 = vmatprep.subr.mxu0 0.0
        %3013 = vmatpush1.msra.mxu0 0.0
        %3014 = vmatprep.subr.mxu0 0.0
        %3015 = vmatpush1.msra.mxu0 0.0
        %3016 = vmatprep.subr.mxu0 0.0
        %3017 = vmatpush1.msra.mxu0 0.0
        %3018 = vmatprep.subr.mxu0 0.0
        %3019 = vmatpush1.msra.mxu0 0.0
        %3020 = vmatprep.subr.mxu0 0.0
        %3021 = vmatpush1.msra.mxu0 0.0
        %3022 = vmatprep.subr.mxu0 0.0
        %3023 = vmatpush1.msra.mxu0 %v2990
        %3024 = vmatprep.subr.mxu0 0.0
        %3025 = vmatpush2.msra.mxu0 0.0
        %3026 = vmatprep.subr.mxu0 0.0
        %3027 = vmatpush2.msra.mxu0 0.0
        %3028 = vmatprep.subr.mxu0 0.0
        %3029 = vmatpush2.msra.mxu0 0.0
        %3030 = vmatprep.subr.mxu0 0.0
        %3031 = vmatpush2.msra.mxu0 0.0
        %3032 = vmatprep.subr.mxu0 0.0
        %3033 = vmatpush2.msra.mxu0 0.0
        %3034 = vmatprep.subr.mxu0 0.0
        %3035 = vmatpush2.msra.mxu0 0.0
        %3036 = vmatprep.subr.mxu0 0.0
        %3037 = vmatpush2.msra.mxu0 0.0
        %3038 = vmatprep.subr.mxu0 0.0
        %3039 = vmatpush2.msra.mxu0 0.0
        %3040 = vmatprep.subr.mxu0 0.0
        %3041 = vmatpush2.msra.mxu0 0.0
        %3042 = vmatprep.subr.mxu0 0.0
        %3043 = vmatpush2.msra.mxu0 0.0
        %3044 = vmatprep.subr.mxu0 0.0
        %3045 = vmatpush2.msra.mxu0 0.0
        %3046 = vmatprep.subr.mxu0 0.0
        %3047 = vmatpush2.msra.mxu0 0.0
        %3048 = vmatprep.subr.mxu0 0.0
        %3049 = vmatpush2.msra.mxu0 0.0
        %3050 = vmatprep.subr.mxu0 0.0
        %3051 = vmatpush2.msra.mxu0 0.0
        %3052 = vmatprep.subr.mxu0 0.0
        %3053 = vmatpush2.msra.mxu0 0.0
        %3054 = vmatprep.subr.mxu0 0.0
        %3055 = vmatpush2.msra.mxu0 0.0
        %3056 = vmatprep.mubr.f32.mxu0 0.0
        %3057 = vmatmul.mubr.f32.gmra.mxu0 %v2846
        %v3058 = vpop.f32.mrf.mxu0
        %v3059 = vadd.f32 0.0, %v3058
        %v3060 = vpop.f32.mrf.mxu0
        %3061 = vmatprep.mubr.f32.mxu0 0.0
        %3062 = vmatmul.mubr.f32.gmra.mxu0 %v2849
        %v3063 = vpop.f32.mrf.mxu0
        %v3064 = vadd.f32 0.0, %v3063
        %v3065 = vpop.f32.mrf.mxu0
        %3066 = vmatprep.mubr.f32.mxu0 0.0
        %3067 = vmatmul.mubr.f32.gmra.mxu0 %v2852
        %v3068 = vpop.f32.mrf.mxu0
        %v3069 = vadd.f32 0.0, %v3068
        %v3070 = vpop.f32.mrf.mxu0
        %3071 = vmatprep.mubr.f32.mxu0 0.0
        %3072 = vmatmul.mubr.f32.gmra.mxu0 %v2855
        %v3073 = vpop.f32.mrf.mxu0
        %v3074 = vadd.f32 0.0, %v3073
        %v3075 = vpop.f32.mrf.mxu0
        %3076 = vmatprep.mubr.f32.mxu0 0.0
        %3077 = vmatmul.mubr.f32.gmra.mxu0 %v2858
        %v3078 = vpop.f32.mrf.mxu0
        %v3079 = vadd.f32 0.0, %v3078
        %v3080 = vpop.f32.mrf.mxu0
        %3081 = vmatprep.mubr.f32.mxu0 0.0
        %3082 = vmatmul.mubr.f32.gmra.mxu0 %v2861
        %v3083 = vpop.f32.mrf.mxu0
        %v3084 = vadd.f32 0.0, %v3083
        %v3085 = vpop.f32.mrf.mxu0
        %3086 = vmatprep.mubr.f32.mxu0 0.0
        %3087 = vmatmul.mubr.f32.gmra.mxu0 %v2864
        %v3088 = vpop.f32.mrf.mxu0
        %v3089 = vadd.f32 0.0, %v3088
        %v3090 = vpop.f32.mrf.mxu0
        %3091 = vmatprep.mubr.f32.mxu0 0.0
        %3092 = vmatmul.mubr.f32.gmra.mxu0 %v2867
        %v3093 = vpop.f32.mrf.mxu0
        %v3094 = vadd.f32 0.0, %v3093
        %v3095 = vpop.f32.mrf.mxu0
        %3096 = vmatprep.mubr.f32.mxu0 0.0
        %3097 = vmatmul.mubr.f32.gmra.mxu0 %v2870
        %v3098 = vpop.f32.mrf.mxu0
        %v3099 = vadd.f32 0.0, %v3098
        %v3100 = vpop.f32.mrf.mxu0
        %3101 = vmatprep.mubr.f32.mxu0 0.0
        %3102 = vmatmul.mubr.f32.gmra.mxu0 %v2873
        %v3103 = vpop.f32.mrf.mxu0
        %v3104 = vadd.f32 0.0, %v3103
        %v3105 = vpop.f32.mrf.mxu0
        %3106 = vmatprep.mubr.f32.mxu0 0.0
        %3107 = vmatmul.mubr.f32.gmra.mxu0 %v2876
        %v3108 = vpop.f32.mrf.mxu0
        %v3109 = vadd.f32 0.0, %v3108
        %v3110 = vpop.f32.mrf.mxu0
        %3111 = vmatprep.mubr.f32.mxu0 0.0
        %3112 = vmatmul.mubr.f32.gmra.mxu0 %v2879
        %v3113 = vpop.f32.mrf.mxu0
        %v3114 = vadd.f32 0.0, %v3113
        %v3115 = vpop.f32.mrf.mxu0
        %3116 = vmatprep.mubr.f32.mxu0 0.0
        %3117 = vmatmul.mubr.f32.gmra.mxu0 %v2882
        %v3118 = vpop.f32.mrf.mxu0
        %v3119 = vadd.f32 0.0, %v3118
        %v3120 = vpop.f32.mrf.mxu0
        %3121 = vmatprep.mubr.f32.mxu0 0.0
        %3122 = vmatmul.mubr.f32.gmra.mxu0 %v2885
        %v3123 = vpop.f32.mrf.mxu0
        %v3124 = vadd.f32 0.0, %v3123
        %v3125 = vpop.f32.mrf.mxu0
        %3126 = vmatprep.mubr.f32.mxu0 0.0
        %3127 = vmatmul.mubr.f32.gmra.mxu0 %v2888
        %v3128 = vpop.f32.mrf.mxu0
        %v3129 = vadd.f32 0.0, %v3128
        %v3130 = vpop.f32.mrf.mxu0
        %3131 = vmatprep.mubr.f32.mxu0 0.0
        %3132 = vmatmul.mubr.f32.gmra.mxu0 %v2891
        %v3133 = vpop.f32.mrf.mxu0
        %v3134 = vadd.f32 0.0, %v3133
        %v3135 = vpop.f32.mrf.mxu0
        %3136 = vmatprep.mubr.f32.mxu0 0.0
        %3137 = vmatmul.mubr.f32.gmra.mxu0 %v2894
        %v3138 = vpop.f32.mrf.mxu0
        %v3139 = vadd.f32 0.0, %v3138
        %v3140 = vpop.f32.mrf.mxu0
        %3141 = vmatprep.mubr.f32.mxu0 0.0
        %3142 = vmatmul.mubr.f32.gmra.mxu0 %v2897
        %v3143 = vpop.f32.mrf.mxu0
        %v3144 = vadd.f32 0.0, %v3143
        %v3145 = vpop.f32.mrf.mxu0
        %3146 = vmatprep.mubr.f32.mxu0 0.0
        %3147 = vmatmul.mubr.f32.gmra.mxu0 %v2900
        %v3148 = vpop.f32.mrf.mxu0
        %v3149 = vadd.f32 0.0, %v3148
        %v3150 = vpop.f32.mrf.mxu0
        %3151 = vmatprep.mubr.f32.mxu0 0.0
        %3152 = vmatmul.mubr.f32.gmra.mxu0 %v2903
        %v3153 = vpop.f32.mrf.mxu0
        %v3154 = vadd.f32 0.0, %v3153
        %v3155 = vpop.f32.mrf.mxu0
        %3156 = vmatprep.mubr.f32.mxu0 0.0
        %3157 = vmatmul.mubr.f32.gmra.mxu0 %v2906
        %v3158 = vpop.f32.mrf.mxu0
        %v3159 = vadd.f32 0.0, %v3158
        %v3160 = vpop.f32.mrf.mxu0
        %3161 = vmatprep.mubr.f32.mxu0 0.0
        %3162 = vmatmul.mubr.f32.gmra.mxu0 %v2909
        %v3163 = vpop.f32.mrf.mxu0
        %v3164 = vadd.f32 0.0, %v3163
        %v3165 = vpop.f32.mrf.mxu0
        %3166 = vmatprep.mubr.f32.mxu0 0.0
        %3167 = vmatmul.mubr.f32.gmra.mxu0 %v2912
        %v3168 = vpop.f32.mrf.mxu0
        %v3169 = vadd.f32 0.0, %v3168
        %v3170 = vpop.f32.mrf.mxu0
        %3171 = vmatprep.mubr.f32.mxu0 0.0
        %3172 = vmatmul.mubr.f32.gmra.mxu0 %v2915
        %v3173 = vpop.f32.mrf.mxu0
        %v3174 = vadd.f32 0.0, %v3173
        %v3175 = vpop.f32.mrf.mxu0
        %3176 = vmatprep.mubr.f32.mxu0 0.0
        %3177 = vmatmul.mubr.f32.gmra.mxu0 %v2918
        %v3178 = vpop.f32.mrf.mxu0
        %v3179 = vadd.f32 0.0, %v3178
        %v3180 = vpop.f32.mrf.mxu0
        %3181 = vmatprep.mubr.f32.mxu0 0.0
        %3182 = vmatmul.mubr.f32.gmra.mxu0 %v2921
        %v3183 = vpop.f32.mrf.mxu0
        %v3184 = vadd.f32 0.0, %v3183
        %v3185 = vpop.f32.mrf.mxu0
        %3186 = vmatprep.mubr.f32.mxu0 0.0
        %3187 = vmatmul.mubr.f32.gmra.mxu0 %v2924
        %v3188 = vpop.f32.mrf.mxu0
        %v3189 = vadd.f32 0.0, %v3188
        %v3190 = vpop.f32.mrf.mxu0
        %3191 = vmatprep.mubr.f32.mxu0 0.0
        %3192 = vmatmul.mubr.f32.gmra.mxu0 %v2927
        %v3193 = vpop.f32.mrf.mxu0
        %v3194 = vadd.f32 0.0, %v3193
        %v3195 = vpop.f32.mrf.mxu0
        %3196 = vmatprep.mubr.f32.mxu0 0.0
        %3197 = vmatmul.mubr.f32.gmra.mxu0 %v2930
        %v3198 = vpop.f32.mrf.mxu0
        %v3199 = vadd.f32 0.0, %v3198
        %v3200 = vpop.f32.mrf.mxu0
        %3201 = vmatprep.mubr.f32.mxu0 0.0
        %3202 = vmatmul.mubr.f32.gmra.mxu0 %v2933
        %v3203 = vpop.f32.mrf.mxu0
        %v3204 = vadd.f32 0.0, %v3203
        %v3205 = vpop.f32.mrf.mxu0
        %3206 = vmatprep.mubr.f32.mxu0 0.0
        %3207 = vmatmul.mubr.f32.gmra.mxu0 %v2936
        %v3208 = vpop.f32.mrf.mxu0
        %v3209 = vadd.f32 0.0, %v3208
        %v3210 = vpop.f32.mrf.mxu0
        %3211 = vmatprep.mubr.f32.mxu0 0.0
        %3212 = vmatmul.mubr.f32.gmra.mxu0 %v2939
        %v3213 = vpop.f32.mrf.mxu0
        %v3214 = vadd.f32 0.0, %v3213
        %v3215 = vpop.f32.mrf.mxu0
        %3216 = vmatprep.mubr.f32.mxu0 0.0
        %3217 = vmatmul.mubr.f32.gmra.mxu0 %v2942
        %v3218 = vpop.f32.mrf.mxu0
        %v3219 = vadd.f32 0.0, %v3218
        %v3220 = vpop.f32.mrf.mxu0
        %3221 = vmatprep.mubr.f32.mxu0 0.0
        %3222 = vmatmul.mubr.f32.gmra.mxu0 %v2945
        %v3223 = vpop.f32.mrf.mxu0
        %v3224 = vadd.f32 0.0, %v3223
        %v3225 = vpop.f32.mrf.mxu0
        %3226 = vmatprep.mubr.f32.mxu0 0.0
        %3227 = vmatmul.mubr.f32.gmra.mxu0 %v2948
        %v3228 = vpop.f32.mrf.mxu0
        %v3229 = vadd.f32 0.0, %v3228
        %v3230 = vpop.f32.mrf.mxu0
        %3231 = vmatprep.mubr.f32.mxu0 0.0
        %3232 = vmatmul.mubr.f32.gmra.mxu0 %v2951
        %v3233 = vpop.f32.mrf.mxu0
        %v3234 = vadd.f32 0.0, %v3233
        %v3235 = vpop.f32.mrf.mxu0
        %3236 = vmatprep.mubr.f32.mxu0 0.0
        %3237 = vmatmul.mubr.f32.gmra.mxu0 %v2954
        %v3238 = vpop.f32.mrf.mxu0
        %v3239 = vadd.f32 0.0, %v3238
        %v3240 = vpop.f32.mrf.mxu0
        %3241 = vmatprep.mubr.f32.mxu0 0.0
        %3242 = vmatmul.mubr.f32.gmra.mxu0 %v2957
        %v3243 = vpop.f32.mrf.mxu0
        %v3244 = vadd.f32 0.0, %v3243
        %v3245 = vpop.f32.mrf.mxu0
        %3246 = vmatprep.mubr.f32.mxu0 0.0
        %3247 = vmatmul.mubr.f32.gmra.mxu0 %v2960
        %v3248 = vpop.f32.mrf.mxu0
        %v3249 = vadd.f32 0.0, %v3248
        %v3250 = vpop.f32.mrf.mxu0
        %3251 = vmatprep.mubr.f32.mxu0 0.0
        %3252 = vmatmul.mubr.f32.gmra.mxu0 %v2963
        %v3253 = vpop.f32.mrf.mxu0
        %v3254 = vadd.f32 0.0, %v3253
        %v3255 = vpop.f32.mrf.mxu0
        %3256 = vmatprep.mubr.f32.mxu0 0.0
        %3257 = vmatmul.mubr.f32.gmra.mxu0 %v2966
        %v3258 = vpop.f32.mrf.mxu0
        %v3259 = vadd.f32 0.0, %v3258
        %v3260 = vpop.f32.mrf.mxu0
        %3261 = vmatprep.mubr.f32.mxu0 0.0
        %3262 = vmatmul.mubr.f32.gmra.mxu0 %v2969
        %v3263 = vpop.f32.mrf.mxu0
        %v3264 = vadd.f32 0.0, %v3263
        %v3265 = vpop.f32.mrf.mxu0
        %3266 = vmatprep.mubr.f32.mxu0 0.0
        %3267 = vmatmul.mubr.f32.gmra.mxu0 %v2972
        %v3268 = vpop.f32.mrf.mxu0
        %v3269 = vadd.f32 0.0, %v3268
        %v3270 = vpop.f32.mrf.mxu0
        %3271 = vmatprep.mubr.f32.mxu0 0.0
        %3272 = vmatmul.mubr.f32.gmra.mxu0 %v2975
        %v3273 = vpop.f32.mrf.mxu0
        %v3274 = vadd.f32 0.0, %v3273
        %v3275 = vpop.f32.mrf.mxu0
        %3276 = vmatprep.mubr.f32.mxu0 0.0
        %3277 = vmatmul.mubr.f32.gmra.mxu0 %v2978
        %v3278 = vpop.f32.mrf.mxu0
        %v3279 = vadd.f32 0.0, %v3278
        %v3280 = vpop.f32.mrf.mxu0
        %3281 = vmatprep.mubr.f32.mxu0 0.0
        %3282 = vmatmul.mubr.f32.gmra.mxu0 %v2981
        %v3283 = vpop.f32.mrf.mxu0
        %v3284 = vadd.f32 0.0, %v3283
        %v3285 = vpop.f32.mrf.mxu0
        %3286 = vmatprep.mubr.f32.mxu0 0.0
        %3287 = vmatmul.mubr.f32.gmra.mxu0 %v2984
        %v3288 = vpop.f32.mrf.mxu0
        %v3289 = vadd.f32 0.0, %v3288
        %v3290 = vpop.f32.mrf.mxu0
        %3291 = vmatprep.mubr.f32.mxu0 0.0
        %3292 = vmatmul.mubr.f32.gmra.mxu0 %v2987
        %v3293 = vpop.f32.mrf.mxu0
        %v3294 = vadd.f32 0.0, %v3293
        %v3295 = vpop.f32.mrf.mxu0
        %3296 = vdwg.mxu0
        %v3297 = vadd.f32 %v2688, %v3059
        %v3298 = vadd.f32 %v2689, %v3064
        %v3299 = vadd.f32 %v2690, %v3069
        %v3300 = vadd.f32 %v2691, %v3074
        %v3301 = vadd.f32 %v2692, %v3079
        %v3302 = vadd.f32 %v2693, %v3084
        %v3303 = vadd.f32 %v2694, %v3089
        %v3304 = vadd.f32 %v2695, %v3094
        %v3305 = vadd.f32 %v2696, %v3099
        %v3306 = vadd.f32 %v2697, %v3104
        %v3307 = vadd.f32 %v2698, %v3109
        %v3308 = vadd.f32 %v2699, %v3114
        %v3309 = vadd.f32 %v2700, %v3119
        %v3310 = vadd.f32 %v2701, %v3124
        %v3311 = vadd.f32 %v2702, %v3129
        %v3312 = vadd.f32 %v2703, %v3134
        %v3313 = vadd.f32 %v2704, %v3139
        %v3314 = vadd.f32 %v2705, %v3144
        %v3315 = vadd.f32 %v2706, %v3149
        %v3316 = vadd.f32 %v2707, %v3154
        %v3317 = vadd.f32 %v2708, %v3159
        %v3318 = vadd.f32 %v2709, %v3164
        %v3319 = vadd.f32 %v2710, %v3169
        %v3320 = vadd.f32 %v2711, %v3174
        %v3321 = vadd.f32 %v2712, %v3179
        %v3322 = vadd.f32 %v2713, %v3184
        %v3323 = vadd.f32 %v2714, %v3189
        %v3324 = vadd.f32 %v2715, %v3194
        %v3325 = vadd.f32 %v2716, %v3199
        %v3326 = vadd.f32 %v2717, %v3204
        %v3327 = vadd.f32 %v2718, %v3209
        %v3328 = vadd.f32 %v2719, %v3214
        %v3329 = vadd.f32 %v2720, %v3219
        %v3330 = vadd.f32 %v2721, %v3224
        %v3331 = vadd.f32 %v2722, %v3229
        %v3332 = vadd.f32 %v2723, %v3234
        %v3333 = vadd.f32 %v2724, %v3239
        %v3334 = vadd.f32 %v2725, %v3244
        %v3335 = vadd.f32 %v2726, %v3249
        %v3336 = vadd.f32 %v2727, %v3254
        %v3337 = vadd.f32 %v2728, %v3259
        %v3338 = vadd.f32 %v2729, %v3264
        %v3339 = vadd.f32 %v2730, %v3269
        %v3340 = vadd.f32 %v2731, %v3274
        %v3341 = vadd.f32 %v2732, %v3279
        %v3342 = vadd.f32 %v2733, %v3284
        %v3343 = vadd.f32 %v2734, %v3289
        %v3344 = vadd.f32 %v2735, %v3294
        %v3346 = vsel %vm370, %v2795, 0
        %v3349 = vsel %vm370, %v2794, 0
        %v3352 = vsel %vm370, %v2793, 0
        %v3355 = vsel %vm515, %v255, 0
        %3357 = vmatprep.subr.mxu0 0.0
        %3358 = vmatpush1.msra.mxu0 0.0
        %3359 = vmatprep.subr.mxu0 0.0
        %3360 = vmatpush1.msra.mxu0 0.0
        %3361 = vmatprep.subr.mxu0 0.0
        %3362 = vmatpush1.msra.mxu0 0.0
        %3363 = vmatprep.subr.mxu0 0.0
        %3364 = vmatpush1.msra.mxu0 0.0
        %3365 = vmatprep.subr.mxu0 0.0
        %3366 = vmatpush1.msra.mxu0 0.0
        %3367 = vmatprep.subr.mxu0 0.0
        %3368 = vmatpush1.msra.mxu0 0.0
        %3369 = vmatprep.subr.mxu0 0.0
        %3370 = vmatpush1.msra.mxu0 0.0
        %3371 = vmatprep.subr.mxu0 0.0
        %3372 = vmatpush1.msra.mxu0 0.0
        %3373 = vmatprep.subr.mxu0 0.0
        %3374 = vmatpush1.msra.mxu0 0.0
        %3375 = vmatprep.subr.mxu0 0.0
        %3376 = vmatpush1.msra.mxu0 0.0
        %3377 = vmatprep.subr.mxu0 0.0
        %3378 = vmatpush1.msra.mxu0 0.0
        %3379 = vmatprep.subr.mxu0 0.0
        %3380 = vmatpush1.msra.mxu0 0.0
        %3381 = vmatprep.subr.mxu0 0.0
        %3382 = vmatpush1.msra.mxu0 0.0
        %3383 = vmatprep.subr.mxu0 0.0
        %3384 = vmatpush1.msra.mxu0 0.0
        %3385 = vmatprep.subr.mxu0 0.0
        %3386 = vmatpush1.msra.mxu0 0.0
        %3387 = vmatprep.subr.mxu0 0.0
        %3388 = vmatpush1.msra.mxu0 %v3355
        %3389 = vmatprep.subr.mxu0 0.0
        %3390 = vmatpush2.msra.mxu0 0.0
        %3391 = vmatprep.subr.mxu0 0.0
        %3392 = vmatpush2.msra.mxu0 0.0
        %3393 = vmatprep.subr.mxu0 0.0
        %3394 = vmatpush2.msra.mxu0 0.0
        %3395 = vmatprep.subr.mxu0 0.0
        %3396 = vmatpush2.msra.mxu0 0.0
        %3397 = vmatprep.subr.mxu0 0.0
        %3398 = vmatpush2.msra.mxu0 0.0
        %3399 = vmatprep.subr.mxu0 0.0
        %3400 = vmatpush2.msra.mxu0 0.0
        %3401 = vmatprep.subr.mxu0 0.0
        %3402 = vmatpush2.msra.mxu0 0.0
        %3403 = vmatprep.subr.mxu0 0.0
        %3404 = vmatpush2.msra.mxu0 0.0
        %3405 = vmatprep.subr.mxu0 0.0
        %3406 = vmatpush2.msra.mxu0 0.0
        %3407 = vmatprep.subr.mxu0 0.0
        %3408 = vmatpush2.msra.mxu0 0.0
        %3409 = vmatprep.subr.mxu0 0.0
        %3410 = vmatpush2.msra.mxu0 0.0
        %3411 = vmatprep.subr.mxu0 0.0
        %3412 = vmatpush2.msra.mxu0 0.0
        %3413 = vmatprep.subr.mxu0 0.0
        %3414 = vmatpush2.msra.mxu0 0.0
        %3415 = vmatprep.subr.mxu0 0.0
        %3416 = vmatpush2.msra.mxu0 0.0
        %3417 = vmatprep.subr.mxu0 0.0
        %3418 = vmatpush2.msra.mxu0 0.0
        %3419 = vmatprep.subr.mxu0 0.0
        %3420 = vmatpush2.msra.mxu0 0.0
        %3421 = vmatprep.mubr.f32.mxu0 0.0
        %3422 = vmatmul.mubr.f32.gmra.mxu0 %v2855
        %v3423 = vpop.f32.mrf.mxu0
        %v3424 = vadd.f32 0.0, %v3423
        %v3425 = vpop.f32.mrf.mxu0
        %3426 = vmatprep.mubr.f32.mxu0 0.0
        %3427 = vmatmul.mubr.f32.gmra.mxu0 %v2858
        %v3428 = vpop.f32.mrf.mxu0
        %v3429 = vadd.f32 0.0, %v3428
        %v3430 = vpop.f32.mrf.mxu0
        %3431 = vmatprep.mubr.f32.mxu0 0.0
        %3432 = vmatmul.mubr.f32.gmra.mxu0 %v2861
        %v3433 = vpop.f32.mrf.mxu0
        %v3434 = vadd.f32 0.0, %v3433
        %v3435 = vpop.f32.mrf.mxu0
        %3436 = vmatprep.mubr.f32.mxu0 0.0
        %3437 = vmatmul.mubr.f32.gmra.mxu0 %v2864
        %v3438 = vpop.f32.mrf.mxu0
        %v3439 = vadd.f32 0.0, %v3438
        %v3440 = vpop.f32.mrf.mxu0
        %3441 = vmatprep.mubr.f32.mxu0 0.0
        %3442 = vmatmul.mubr.f32.gmra.mxu0 %v2867
        %v3443 = vpop.f32.mrf.mxu0
        %v3444 = vadd.f32 0.0, %v3443
        %v3445 = vpop.f32.mrf.mxu0
        %3446 = vmatprep.mubr.f32.mxu0 0.0
        %3447 = vmatmul.mubr.f32.gmra.mxu0 %v2870
        %v3448 = vpop.f32.mrf.mxu0
        %v3449 = vadd.f32 0.0, %v3448
        %v3450 = vpop.f32.mrf.mxu0
        %3451 = vmatprep.mubr.f32.mxu0 0.0
        %3452 = vmatmul.mubr.f32.gmra.mxu0 %v2873
        %v3453 = vpop.f32.mrf.mxu0
        %v3454 = vadd.f32 0.0, %v3453
        %v3455 = vpop.f32.mrf.mxu0
        %3456 = vmatprep.mubr.f32.mxu0 0.0
        %3457 = vmatmul.mubr.f32.gmra.mxu0 %v2876
        %v3458 = vpop.f32.mrf.mxu0
        %v3459 = vadd.f32 0.0, %v3458
        %v3460 = vpop.f32.mrf.mxu0
        %3461 = vmatprep.mubr.f32.mxu0 0.0
        %3462 = vmatmul.mubr.f32.gmra.mxu0 %v2879
        %v3463 = vpop.f32.mrf.mxu0
        %v3464 = vadd.f32 0.0, %v3463
        %v3465 = vpop.f32.mrf.mxu0
        %3466 = vmatprep.mubr.f32.mxu0 0.0
        %3467 = vmatmul.mubr.f32.gmra.mxu0 %v2882
        %v3468 = vpop.f32.mrf.mxu0
        %v3469 = vadd.f32 0.0, %v3468
        %v3470 = vpop.f32.mrf.mxu0
        %3471 = vmatprep.mubr.f32.mxu0 0.0
        %3472 = vmatmul.mubr.f32.gmra.mxu0 %v2885
        %v3473 = vpop.f32.mrf.mxu0
        %v3474 = vadd.f32 0.0, %v3473
        %v3475 = vpop.f32.mrf.mxu0
        %3476 = vmatprep.mubr.f32.mxu0 0.0
        %3477 = vmatmul.mubr.f32.gmra.mxu0 %v2888
        %v3478 = vpop.f32.mrf.mxu0
        %v3479 = vadd.f32 0.0, %v3478
        %v3480 = vpop.f32.mrf.mxu0
        %3481 = vmatprep.mubr.f32.mxu0 0.0
        %3482 = vmatmul.mubr.f32.gmra.mxu0 %v2891
        %v3483 = vpop.f32.mrf.mxu0
        %v3484 = vadd.f32 0.0, %v3483
        %v3485 = vpop.f32.mrf.mxu0
        %3486 = vmatprep.mubr.f32.mxu0 0.0
        %3487 = vmatmul.mubr.f32.gmra.mxu0 %v2894
        %v3488 = vpop.f32.mrf.mxu0
        %v3489 = vadd.f32 0.0, %v3488
        %v3490 = vpop.f32.mrf.mxu0
        %3491 = vmatprep.mubr.f32.mxu0 0.0
        %3492 = vmatmul.mubr.f32.gmra.mxu0 %v2897
        %v3493 = vpop.f32.mrf.mxu0
        %v3494 = vadd.f32 0.0, %v3493
        %v3495 = vpop.f32.mrf.mxu0
        %3496 = vmatprep.mubr.f32.mxu0 0.0
        %3497 = vmatmul.mubr.f32.gmra.mxu0 %v2900
        %v3498 = vpop.f32.mrf.mxu0
        %v3499 = vadd.f32 0.0, %v3498
        %v3500 = vpop.f32.mrf.mxu0
        %3501 = vmatprep.mubr.f32.mxu0 0.0
        %3502 = vmatmul.mubr.f32.gmra.mxu0 %v2903
        %v3503 = vpop.f32.mrf.mxu0
        %v3504 = vadd.f32 0.0, %v3503
        %v3505 = vpop.f32.mrf.mxu0
        %3506 = vmatprep.mubr.f32.mxu0 0.0
        %3507 = vmatmul.mubr.f32.gmra.mxu0 %v2906
        %v3508 = vpop.f32.mrf.mxu0
        %v3509 = vadd.f32 0.0, %v3508
        %v3510 = vpop.f32.mrf.mxu0
        %3511 = vmatprep.mubr.f32.mxu0 0.0
        %3512 = vmatmul.mubr.f32.gmra.mxu0 %v2909
        %v3513 = vpop.f32.mrf.mxu0
        %v3514 = vadd.f32 0.0, %v3513
        %v3515 = vpop.f32.mrf.mxu0
        %3516 = vmatprep.mubr.f32.mxu0 0.0
        %3517 = vmatmul.mubr.f32.gmra.mxu0 %v2912
        %v3518 = vpop.f32.mrf.mxu0
        %v3519 = vadd.f32 0.0, %v3518
        %v3520 = vpop.f32.mrf.mxu0
        %3521 = vmatprep.mubr.f32.mxu0 0.0
        %3522 = vmatmul.mubr.f32.gmra.mxu0 %v2915
        %v3523 = vpop.f32.mrf.mxu0
        %v3524 = vadd.f32 0.0, %v3523
        %v3525 = vpop.f32.mrf.mxu0
        %3526 = vmatprep.mubr.f32.mxu0 0.0
        %3527 = vmatmul.mubr.f32.gmra.mxu0 %v2918
        %v3528 = vpop.f32.mrf.mxu0
        %v3529 = vadd.f32 0.0, %v3528
        %v3530 = vpop.f32.mrf.mxu0
        %3531 = vmatprep.mubr.f32.mxu0 0.0
        %3532 = vmatmul.mubr.f32.gmra.mxu0 %v2921
        %v3533 = vpop.f32.mrf.mxu0
        %v3534 = vadd.f32 0.0, %v3533
        %v3535 = vpop.f32.mrf.mxu0
        %3536 = vmatprep.mubr.f32.mxu0 0.0
        %3537 = vmatmul.mubr.f32.gmra.mxu0 %v2924
        %v3538 = vpop.f32.mrf.mxu0
        %v3539 = vadd.f32 0.0, %v3538
        %v3540 = vpop.f32.mrf.mxu0
        %3541 = vmatprep.mubr.f32.mxu0 0.0
        %3542 = vmatmul.mubr.f32.gmra.mxu0 %v2927
        %v3543 = vpop.f32.mrf.mxu0
        %v3544 = vadd.f32 0.0, %v3543
        %v3545 = vpop.f32.mrf.mxu0
        %3546 = vmatprep.mubr.f32.mxu0 0.0
        %3547 = vmatmul.mubr.f32.gmra.mxu0 %v2930
        %v3548 = vpop.f32.mrf.mxu0
        %v3549 = vadd.f32 0.0, %v3548
        %v3550 = vpop.f32.mrf.mxu0
        %3551 = vmatprep.mubr.f32.mxu0 0.0
        %3552 = vmatmul.mubr.f32.gmra.mxu0 %v2933
        %v3553 = vpop.f32.mrf.mxu0
        %v3554 = vadd.f32 0.0, %v3553
        %v3555 = vpop.f32.mrf.mxu0
        %3556 = vmatprep.mubr.f32.mxu0 0.0
        %3557 = vmatmul.mubr.f32.gmra.mxu0 %v2936
        %v3558 = vpop.f32.mrf.mxu0
        %v3559 = vadd.f32 0.0, %v3558
        %v3560 = vpop.f32.mrf.mxu0
        %3561 = vmatprep.mubr.f32.mxu0 0.0
        %3562 = vmatmul.mubr.f32.gmra.mxu0 %v2939
        %v3563 = vpop.f32.mrf.mxu0
        %v3564 = vadd.f32 0.0, %v3563
        %v3565 = vpop.f32.mrf.mxu0
        %3566 = vmatprep.mubr.f32.mxu0 0.0
        %3567 = vmatmul.mubr.f32.gmra.mxu0 %v2942
        %v3568 = vpop.f32.mrf.mxu0
        %v3569 = vadd.f32 0.0, %v3568
        %v3570 = vpop.f32.mrf.mxu0
        %3571 = vmatprep.mubr.f32.mxu0 0.0
        %3572 = vmatmul.mubr.f32.gmra.mxu0 %v2945
        %v3573 = vpop.f32.mrf.mxu0
        %v3574 = vadd.f32 0.0, %v3573
        %v3575 = vpop.f32.mrf.mxu0
        %3576 = vmatprep.mubr.f32.mxu0 0.0
        %3577 = vmatmul.mubr.f32.gmra.mxu0 %v2948
        %v3578 = vpop.f32.mrf.mxu0
        %v3579 = vadd.f32 0.0, %v3578
        %v3580 = vpop.f32.mrf.mxu0
        %3581 = vmatprep.mubr.f32.mxu0 0.0
        %3582 = vmatmul.mubr.f32.gmra.mxu0 %v2951
        %v3583 = vpop.f32.mrf.mxu0
        %v3584 = vadd.f32 0.0, %v3583
        %v3585 = vpop.f32.mrf.mxu0
        %3586 = vmatprep.mubr.f32.mxu0 0.0
        %3587 = vmatmul.mubr.f32.gmra.mxu0 %v2954
        %v3588 = vpop.f32.mrf.mxu0
        %v3589 = vadd.f32 0.0, %v3588
        %v3590 = vpop.f32.mrf.mxu0
        %3591 = vmatprep.mubr.f32.mxu0 0.0
        %3592 = vmatmul.mubr.f32.gmra.mxu0 %v2957
        %v3593 = vpop.f32.mrf.mxu0
        %v3594 = vadd.f32 0.0, %v3593
        %v3595 = vpop.f32.mrf.mxu0
        %3596 = vmatprep.mubr.f32.mxu0 0.0
        %3597 = vmatmul.mubr.f32.gmra.mxu0 %v2960
        %v3598 = vpop.f32.mrf.mxu0
        %v3599 = vadd.f32 0.0, %v3598
        %v3600 = vpop.f32.mrf.mxu0
        %3601 = vmatprep.mubr.f32.mxu0 0.0
        %3602 = vmatmul.mubr.f32.gmra.mxu0 %v2963
        %v3603 = vpop.f32.mrf.mxu0
        %v3604 = vadd.f32 0.0, %v3603
        %v3605 = vpop.f32.mrf.mxu0
        %3606 = vmatprep.mubr.f32.mxu0 0.0
        %3607 = vmatmul.mubr.f32.gmra.mxu0 %v2966
        %v3608 = vpop.f32.mrf.mxu0
        %v3609 = vadd.f32 0.0, %v3608
        %v3610 = vpop.f32.mrf.mxu0
        %3611 = vmatprep.mubr.f32.mxu0 0.0
        %3612 = vmatmul.mubr.f32.gmra.mxu0 %v2969
        %v3613 = vpop.f32.mrf.mxu0
        %v3614 = vadd.f32 0.0, %v3613
        %v3615 = vpop.f32.mrf.mxu0
        %3616 = vmatprep.mubr.f32.mxu0 0.0
        %3617 = vmatmul.mubr.f32.gmra.mxu0 %v2972
        %v3618 = vpop.f32.mrf.mxu0
        %v3619 = vadd.f32 0.0, %v3618
        %v3620 = vpop.f32.mrf.mxu0
        %3621 = vmatprep.mubr.f32.mxu0 0.0
        %3622 = vmatmul.mubr.f32.gmra.mxu0 %v2975
        %v3623 = vpop.f32.mrf.mxu0
        %v3624 = vadd.f32 0.0, %v3623
        %v3625 = vpop.f32.mrf.mxu0
        %3626 = vmatprep.mubr.f32.mxu0 0.0
        %3627 = vmatmul.mubr.f32.gmra.mxu0 %v2978
        %v3628 = vpop.f32.mrf.mxu0
        %v3629 = vadd.f32 0.0, %v3628
        %v3630 = vpop.f32.mrf.mxu0
        %3631 = vmatprep.mubr.f32.mxu0 0.0
        %3632 = vmatmul.mubr.f32.gmra.mxu0 %v2981
        %v3633 = vpop.f32.mrf.mxu0
        %v3634 = vadd.f32 0.0, %v3633
        %v3635 = vpop.f32.mrf.mxu0
        %3636 = vmatprep.mubr.f32.mxu0 0.0
        %3637 = vmatmul.mubr.f32.gmra.mxu0 %v2984
        %v3638 = vpop.f32.mrf.mxu0
        %v3639 = vadd.f32 0.0, %v3638
        %v3640 = vpop.f32.mrf.mxu0
        %3641 = vmatprep.mubr.f32.mxu0 0.0
        %3642 = vmatmul.mubr.f32.gmra.mxu0 %v2987
        %v3643 = vpop.f32.mrf.mxu0
        %v3644 = vadd.f32 0.0, %v3643
        %v3645 = vpop.f32.mrf.mxu0
        %3646 = vmatprep.mubr.f32.mxu0 0.0
        %3647 = vmatmul.mubr.f32.gmra.mxu0 %v3346
        %v3648 = vpop.f32.mrf.mxu0
        %v3649 = vadd.f32 0.0, %v3648
        %v3650 = vpop.f32.mrf.mxu0
        %3651 = vmatprep.mubr.f32.mxu0 0.0
        %3652 = vmatmul.mubr.f32.gmra.mxu0 %v3349
        %v3653 = vpop.f32.mrf.mxu0
        %v3654 = vadd.f32 0.0, %v3653
        %v3655 = vpop.f32.mrf.mxu0
        %3656 = vmatprep.mubr.f32.mxu0 0.0
        %3657 = vmatmul.mubr.f32.gmra.mxu0 %v3352
        %v3658 = vpop.f32.mrf.mxu0
        %v3659 = vadd.f32 0.0, %v3658
        %v3660 = vpop.f32.mrf.mxu0
        %3661 = vdwg.mxu0
        %v3662 = vadd.f32 %v3297, %v3424
        %v3663 = vadd.f32 %v3298, %v3429
        %v3664 = vadd.f32 %v3299, %v3434
        %v3665 = vadd.f32 %v3300, %v3439
        %v3666 = vadd.f32 %v3301, %v3444
        %v3667 = vadd.f32 %v3302, %v3449
        %v3668 = vadd.f32 %v3303, %v3454
        %v3669 = vadd.f32 %v3304, %v3459
        %v3670 = vadd.f32 %v3305, %v3464
        %v3671 = vadd.f32 %v3306, %v3469
        %v3672 = vadd.f32 %v3307, %v3474
        %v3673 = vadd.f32 %v3308, %v3479
        %v3674 = vadd.f32 %v3309, %v3484
        %v3675 = vadd.f32 %v3310, %v3489
        %v3676 = vadd.f32 %v3311, %v3494
        %v3677 = vadd.f32 %v3312, %v3499
        %v3678 = vadd.f32 %v3313, %v3504
        %v3679 = vadd.f32 %v3314, %v3509
        %v3680 = vadd.f32 %v3315, %v3514
        %v3681 = vadd.f32 %v3316, %v3519
        %v3682 = vadd.f32 %v3317, %v3524
        %v3683 = vadd.f32 %v3318, %v3529
        %v3684 = vadd.f32 %v3319, %v3534
        %v3685 = vadd.f32 %v3320, %v3539
        %v3686 = vadd.f32 %v3321, %v3544
        %v3687 = vadd.f32 %v3322, %v3549
        %v3688 = vadd.f32 %v3323, %v3554
        %v3689 = vadd.f32 %v3324, %v3559
        %v3690 = vadd.f32 %v3325, %v3564
        %v3691 = vadd.f32 %v3326, %v3569
        %v3692 = vadd.f32 %v3327, %v3574
        %v3693 = vadd.f32 %v3328, %v3579
        %v3694 = vadd.f32 %v3329, %v3584
        %v3695 = vadd.f32 %v3330, %v3589
        %v3696 = vadd.f32 %v3331, %v3594
        %v3697 = vadd.f32 %v3332, %v3599
        %v3698 = vadd.f32 %v3333, %v3604
        %v3699 = vadd.f32 %v3334, %v3609
        %v3700 = vadd.f32 %v3335, %v3614
        %v3701 = vadd.f32 %v3336, %v3619
        %v3702 = vadd.f32 %v3337, %v3624
        %v3703 = vadd.f32 %v3338, %v3629
        %v3704 = vadd.f32 %v3339, %v3634
        %v3705 = vadd.f32 %v3340, %v3639
        %v3706 = vadd.f32 %v3341, %v3644
        %v3707 = vadd.f32 %v3342, %v3649
        %v3708 = vadd.f32 %v3343, %v3654
        %v3709 = vadd.f32 %v3344, %v3659
        %v3711 = vsel %vm370, %v2792, 0
        %v3714 = vsel %vm370, %v2791, 0
        %v3717 = vsel %vm370, %v2844, 0
        %v3720 = vsel %vm515, %v258, 0
        %3722 = vmatprep.subr.mxu0 0.0
        %3723 = vmatpush1.msra.mxu0 0.0
        %3724 = vmatprep.subr.mxu0 0.0
        %3725 = vmatpush1.msra.mxu0 0.0
        %3726 = vmatprep.subr.mxu0 0.0
        %3727 = vmatpush1.msra.mxu0 0.0
        %3728 = vmatprep.subr.mxu0 0.0
        %3729 = vmatpush1.msra.mxu0 0.0
        %3730 = vmatprep.subr.mxu0 0.0
        %3731 = vmatpush1.msra.mxu0 0.0
        %3732 = vmatprep.subr.mxu0 0.0
        %3733 = vmatpush1.msra.mxu0 0.0
        %3734 = vmatprep.subr.mxu0 0.0
        %3735 = vmatpush1.msra.mxu0 0.0
        %3736 = vmatprep.subr.mxu0 0.0
        %3737 = vmatpush1.msra.mxu0 0.0
        %3738 = vmatprep.subr.mxu0 0.0
        %3739 = vmatpush1.msra.mxu0 0.0
        %3740 = vmatprep.subr.mxu0 0.0
        %3741 = vmatpush1.msra.mxu0 0.0
        %3742 = vmatprep.subr.mxu0 0.0
        %3743 = vmatpush1.msra.mxu0 0.0
        %3744 = vmatprep.subr.mxu0 0.0
        %3745 = vmatpush1.msra.mxu0 0.0
        %3746 = vmatprep.subr.mxu0 0.0
        %3747 = vmatpush1.msra.mxu0 0.0
        %3748 = vmatprep.subr.mxu0 0.0
        %3749 = vmatpush1.msra.mxu0 0.0
        %3750 = vmatprep.subr.mxu0 0.0
        %3751 = vmatpush1.msra.mxu0 0.0
        %3752 = vmatprep.subr.mxu0 0.0
        %3753 = vmatpush1.msra.mxu0 %v3720
        %3754 = vmatprep.subr.mxu0 0.0
        %3755 = vmatpush2.msra.mxu0 0.0
        %3756 = vmatprep.subr.mxu0 0.0
        %3757 = vmatpush2.msra.mxu0 0.0
        %3758 = vmatprep.subr.mxu0 0.0
        %3759 = vmatpush2.msra.mxu0 0.0
        %3760 = vmatprep.subr.mxu0 0.0
        %3761 = vmatpush2.msra.mxu0 0.0
        %3762 = vmatprep.subr.mxu0 0.0
        %3763 = vmatpush2.msra.mxu0 0.0
        %3764 = vmatprep.subr.mxu0 0.0
        %3765 = vmatpush2.msra.mxu0 0.0
        %3766 = vmatprep.subr.mxu0 0.0
        %3767 = vmatpush2.msra.mxu0 0.0
        %3768 = vmatprep.subr.mxu0 0.0
        %3769 = vmatpush2.msra.mxu0 0.0
        %3770 = vmatprep.subr.mxu0 0.0
        %3771 = vmatpush2.msra.mxu0 0.0
        %3772 = vmatprep.subr.mxu0 0.0
        %3773 = vmatpush2.msra.mxu0 0.0
        %3774 = vmatprep.subr.mxu0 0.0
        %3775 = vmatpush2.msra.mxu0 0.0
        %3776 = vmatprep.subr.mxu0 0.0
        %3777 = vmatpush2.msra.mxu0 0.0
        %3778 = vmatprep.subr.mxu0 0.0
        %3779 = vmatpush2.msra.mxu0 0.0
        %3780 = vmatprep.subr.mxu0 0.0
        %3781 = vmatpush2.msra.mxu0 0.0
        %3782 = vmatprep.subr.mxu0 0.0
        %3783 = vmatpush2.msra.mxu0 0.0
        %3784 = vmatprep.subr.mxu0 0.0
        %3785 = vmatpush2.msra.mxu0 0.0
        %3786 = vmatprep.mubr.f32.mxu0 0.0
        %3787 = vmatmul.mubr.f32.gmra.mxu0 %v2864
        %v3788 = vpop.f32.mrf.mxu0
        %v3789 = vadd.f32 0.0, %v3788
        %v3790 = vpop.f32.mrf.mxu0
        %3791 = vmatprep.mubr.f32.mxu0 0.0
        %3792 = vmatmul.mubr.f32.gmra.mxu0 %v2867
        %v3793 = vpop.f32.mrf.mxu0
        %v3794 = vadd.f32 0.0, %v3793
        %v3795 = vpop.f32.mrf.mxu0
        %3796 = vmatprep.mubr.f32.mxu0 0.0
        %3797 = vmatmul.mubr.f32.gmra.mxu0 %v2870
        %v3798 = vpop.f32.mrf.mxu0
        %v3799 = vadd.f32 0.0, %v3798
        %v3800 = vpop.f32.mrf.mxu0
        %3801 = vmatprep.mubr.f32.mxu0 0.0
        %3802 = vmatmul.mubr.f32.gmra.mxu0 %v2873
        %v3803 = vpop.f32.mrf.mxu0
        %v3804 = vadd.f32 0.0, %v3803
        %v3805 = vpop.f32.mrf.mxu0
        %3806 = vmatprep.mubr.f32.mxu0 0.0
        %3807 = vmatmul.mubr.f32.gmra.mxu0 %v2876
        %v3808 = vpop.f32.mrf.mxu0
        %v3809 = vadd.f32 0.0, %v3808
        %v3810 = vpop.f32.mrf.mxu0
        %3811 = vmatprep.mubr.f32.mxu0 0.0
        %3812 = vmatmul.mubr.f32.gmra.mxu0 %v2879
        %v3813 = vpop.f32.mrf.mxu0
        %v3814 = vadd.f32 0.0, %v3813
        %v3815 = vpop.f32.mrf.mxu0
        %3816 = vmatprep.mubr.f32.mxu0 0.0
        %3817 = vmatmul.mubr.f32.gmra.mxu0 %v2882
        %v3818 = vpop.f32.mrf.mxu0
        %v3819 = vadd.f32 0.0, %v3818
        %v3820 = vpop.f32.mrf.mxu0
        %3821 = vmatprep.mubr.f32.mxu0 0.0
        %3822 = vmatmul.mubr.f32.gmra.mxu0 %v2885
        %v3823 = vpop.f32.mrf.mxu0
        %v3824 = vadd.f32 0.0, %v3823
        %v3825 = vpop.f32.mrf.mxu0
        %3826 = vmatprep.mubr.f32.mxu0 0.0
        %3827 = vmatmul.mubr.f32.gmra.mxu0 %v2888
        %v3828 = vpop.f32.mrf.mxu0
        %v3829 = vadd.f32 0.0, %v3828
        %v3830 = vpop.f32.mrf.mxu0
        %3831 = vmatprep.mubr.f32.mxu0 0.0
        %3832 = vmatmul.mubr.f32.gmra.mxu0 %v2891
        %v3833 = vpop.f32.mrf.mxu0
        %v3834 = vadd.f32 0.0, %v3833
        %v3835 = vpop.f32.mrf.mxu0
        %3836 = vmatprep.mubr.f32.mxu0 0.0
        %3837 = vmatmul.mubr.f32.gmra.mxu0 %v2894
        %v3838 = vpop.f32.mrf.mxu0
        %v3839 = vadd.f32 0.0, %v3838
        %v3840 = vpop.f32.mrf.mxu0
        %3841 = vmatprep.mubr.f32.mxu0 0.0
        %3842 = vmatmul.mubr.f32.gmra.mxu0 %v2897
        %v3843 = vpop.f32.mrf.mxu0
        %v3844 = vadd.f32 0.0, %v3843
        %v3845 = vpop.f32.mrf.mxu0
        %3846 = vmatprep.mubr.f32.mxu0 0.0
        %3847 = vmatmul.mubr.f32.gmra.mxu0 %v2900
        %v3848 = vpop.f32.mrf.mxu0
        %v3849 = vadd.f32 0.0, %v3848
        %v3850 = vpop.f32.mrf.mxu0
        %3851 = vmatprep.mubr.f32.mxu0 0.0
        %3852 = vmatmul.mubr.f32.gmra.mxu0 %v2903
        %v3853 = vpop.f32.mrf.mxu0
        %v3854 = vadd.f32 0.0, %v3853
        %v3855 = vpop.f32.mrf.mxu0
        %3856 = vmatprep.mubr.f32.mxu0 0.0
        %3857 = vmatmul.mubr.f32.gmra.mxu0 %v2906
        %v3858 = vpop.f32.mrf.mxu0
        %v3859 = vadd.f32 0.0, %v3858
        %v3860 = vpop.f32.mrf.mxu0
        %3861 = vmatprep.mubr.f32.mxu0 0.0
        %3862 = vmatmul.mubr.f32.gmra.mxu0 %v2909
        %v3863 = vpop.f32.mrf.mxu0
        %v3864 = vadd.f32 0.0, %v3863
        %v3865 = vpop.f32.mrf.mxu0
        %3866 = vmatprep.mubr.f32.mxu0 0.0
        %3867 = vmatmul.mubr.f32.gmra.mxu0 %v2912
        %v3868 = vpop.f32.mrf.mxu0
        %v3869 = vadd.f32 0.0, %v3868
        %v3870 = vpop.f32.mrf.mxu0
        %3871 = vmatprep.mubr.f32.mxu0 0.0
        %3872 = vmatmul.mubr.f32.gmra.mxu0 %v2915
        %v3873 = vpop.f32.mrf.mxu0
        %v3874 = vadd.f32 0.0, %v3873
        %v3875 = vpop.f32.mrf.mxu0
        %3876 = vmatprep.mubr.f32.mxu0 0.0
        %3877 = vmatmul.mubr.f32.gmra.mxu0 %v2918
        %v3878 = vpop.f32.mrf.mxu0
        %v3879 = vadd.f32 0.0, %v3878
        %v3880 = vpop.f32.mrf.mxu0
        %3881 = vmatprep.mubr.f32.mxu0 0.0
        %3882 = vmatmul.mubr.f32.gmra.mxu0 %v2921
        %v3883 = vpop.f32.mrf.mxu0
        %v3884 = vadd.f32 0.0, %v3883
        %v3885 = vpop.f32.mrf.mxu0
        %3886 = vmatprep.mubr.f32.mxu0 0.0
        %3887 = vmatmul.mubr.f32.gmra.mxu0 %v2924
        %v3888 = vpop.f32.mrf.mxu0
        %v3889 = vadd.f32 0.0, %v3888
        %v3890 = vpop.f32.mrf.mxu0
        %3891 = vmatprep.mubr.f32.mxu0 0.0
        %3892 = vmatmul.mubr.f32.gmra.mxu0 %v2927
        %v3893 = vpop.f32.mrf.mxu0
        %v3894 = vadd.f32 0.0, %v3893
        %v3895 = vpop.f32.mrf.mxu0
        %3896 = vmatprep.mubr.f32.mxu0 0.0
        %3897 = vmatmul.mubr.f32.gmra.mxu0 %v2930
        %v3898 = vpop.f32.mrf.mxu0
        %v3899 = vadd.f32 0.0, %v3898
        %v3900 = vpop.f32.mrf.mxu0
        %3901 = vmatprep.mubr.f32.mxu0 0.0
        %3902 = vmatmul.mubr.f32.gmra.mxu0 %v2933
        %v3903 = vpop.f32.mrf.mxu0
        %v3904 = vadd.f32 0.0, %v3903
        %v3905 = vpop.f32.mrf.mxu0
        %3906 = vmatprep.mubr.f32.mxu0 0.0
        %3907 = vmatmul.mubr.f32.gmra.mxu0 %v2936
        %v3908 = vpop.f32.mrf.mxu0
        %v3909 = vadd.f32 0.0, %v3908
        %v3910 = vpop.f32.mrf.mxu0
        %3911 = vmatprep.mubr.f32.mxu0 0.0
        %3912 = vmatmul.mubr.f32.gmra.mxu0 %v2939
        %v3913 = vpop.f32.mrf.mxu0
        %v3914 = vadd.f32 0.0, %v3913
        %v3915 = vpop.f32.mrf.mxu0
        %3916 = vmatprep.mubr.f32.mxu0 0.0
        %3917 = vmatmul.mubr.f32.gmra.mxu0 %v2942
        %v3918 = vpop.f32.mrf.mxu0
        %v3919 = vadd.f32 0.0, %v3918
        %v3920 = vpop.f32.mrf.mxu0
        %3921 = vmatprep.mubr.f32.mxu0 0.0
        %3922 = vmatmul.mubr.f32.gmra.mxu0 %v2945
        %v3923 = vpop.f32.mrf.mxu0
        %v3924 = vadd.f32 0.0, %v3923
        %v3925 = vpop.f32.mrf.mxu0
        %3926 = vmatprep.mubr.f32.mxu0 0.0
        %3927 = vmatmul.mubr.f32.gmra.mxu0 %v2948
        %v3928 = vpop.f32.mrf.mxu0
        %v3929 = vadd.f32 0.0, %v3928
        %v3930 = vpop.f32.mrf.mxu0
        %3931 = vmatprep.mubr.f32.mxu0 0.0
        %3932 = vmatmul.mubr.f32.gmra.mxu0 %v2951
        %v3933 = vpop.f32.mrf.mxu0
        %v3934 = vadd.f32 0.0, %v3933
        %v3935 = vpop.f32.mrf.mxu0
        %3936 = vmatprep.mubr.f32.mxu0 0.0
        %3937 = vmatmul.mubr.f32.gmra.mxu0 %v2954
        %v3938 = vpop.f32.mrf.mxu0
        %v3939 = vadd.f32 0.0, %v3938
        %v3940 = vpop.f32.mrf.mxu0
        %3941 = vmatprep.mubr.f32.mxu0 0.0
        %3942 = vmatmul.mubr.f32.gmra.mxu0 %v2957
        %v3943 = vpop.f32.mrf.mxu0
        %v3944 = vadd.f32 0.0, %v3943
        %v3945 = vpop.f32.mrf.mxu0
        %3946 = vmatprep.mubr.f32.mxu0 0.0
        %3947 = vmatmul.mubr.f32.gmra.mxu0 %v2960
        %v3948 = vpop.f32.mrf.mxu0
        %v3949 = vadd.f32 0.0, %v3948
        %v3950 = vpop.f32.mrf.mxu0
        %3951 = vmatprep.mubr.f32.mxu0 0.0
        %3952 = vmatmul.mubr.f32.gmra.mxu0 %v2963
        %v3953 = vpop.f32.mrf.mxu0
        %v3954 = vadd.f32 0.0, %v3953
        %v3955 = vpop.f32.mrf.mxu0
        %3956 = vmatprep.mubr.f32.mxu0 0.0
        %3957 = vmatmul.mubr.f32.gmra.mxu0 %v2966
        %v3958 = vpop.f32.mrf.mxu0
        %v3959 = vadd.f32 0.0, %v3958
        %v3960 = vpop.f32.mrf.mxu0
        %3961 = vmatprep.mubr.f32.mxu0 0.0
        %3962 = vmatmul.mubr.f32.gmra.mxu0 %v2969
        %v3963 = vpop.f32.mrf.mxu0
        %v3964 = vadd.f32 0.0, %v3963
        %v3965 = vpop.f32.mrf.mxu0
        %3966 = vmatprep.mubr.f32.mxu0 0.0
        %3967 = vmatmul.mubr.f32.gmra.mxu0 %v2972
        %v3968 = vpop.f32.mrf.mxu0
        %v3969 = vadd.f32 0.0, %v3968
        %v3970 = vpop.f32.mrf.mxu0
        %3971 = vmatprep.mubr.f32.mxu0 0.0
        %3972 = vmatmul.mubr.f32.gmra.mxu0 %v2975
        %v3973 = vpop.f32.mrf.mxu0
        %v3974 = vadd.f32 0.0, %v3973
        %v3975 = vpop.f32.mrf.mxu0
        %3976 = vmatprep.mubr.f32.mxu0 0.0
        %3977 = vmatmul.mubr.f32.gmra.mxu0 %v2978
        %v3978 = vpop.f32.mrf.mxu0
        %v3979 = vadd.f32 0.0, %v3978
        %v3980 = vpop.f32.mrf.mxu0
        %3981 = vmatprep.mubr.f32.mxu0 0.0
        %3982 = vmatmul.mubr.f32.gmra.mxu0 %v2981
        %v3983 = vpop.f32.mrf.mxu0
        %v3984 = vadd.f32 0.0, %v3983
        %v3985 = vpop.f32.mrf.mxu0
        %3986 = vmatprep.mubr.f32.mxu0 0.0
        %3987 = vmatmul.mubr.f32.gmra.mxu0 %v2984
        %v3988 = vpop.f32.mrf.mxu0
        %v3989 = vadd.f32 0.0, %v3988
        %v3990 = vpop.f32.mrf.mxu0
        %3991 = vmatprep.mubr.f32.mxu0 0.0
        %3992 = vmatmul.mubr.f32.gmra.mxu0 %v2987
        %v3993 = vpop.f32.mrf.mxu0
        %v3994 = vadd.f32 0.0, %v3993
        %v3995 = vpop.f32.mrf.mxu0
        %3996 = vmatprep.mubr.f32.mxu0 0.0
        %3997 = vmatmul.mubr.f32.gmra.mxu0 %v3346
        %v3998 = vpop.f32.mrf.mxu0
        %v3999 = vadd.f32 0.0, %v3998
        %v4000 = vpop.f32.mrf.mxu0
        %4001 = vmatprep.mubr.f32.mxu0 0.0
        %4002 = vmatmul.mubr.f32.gmra.mxu0 %v3349
        %v4003 = vpop.f32.mrf.mxu0
        %v4004 = vadd.f32 0.0, %v4003
        %v4005 = vpop.f32.mrf.mxu0
        %4006 = vmatprep.mubr.f32.mxu0 0.0
        %4007 = vmatmul.mubr.f32.gmra.mxu0 %v3352
        %v4008 = vpop.f32.mrf.mxu0
        %v4009 = vadd.f32 0.0, %v4008
        %v4010 = vpop.f32.mrf.mxu0
        %4011 = vmatprep.mubr.f32.mxu0 0.0
        %4012 = vmatmul.mubr.f32.gmra.mxu0 %v3711
        %v4013 = vpop.f32.mrf.mxu0
        %v4014 = vadd.f32 0.0, %v4013
        %v4015 = vpop.f32.mrf.mxu0
        %4016 = vmatprep.mubr.f32.mxu0 0.0
        %4017 = vmatmul.mubr.f32.gmra.mxu0 %v3714
        %v4018 = vpop.f32.mrf.mxu0
        %v4019 = vadd.f32 0.0, %v4018
        %v4020 = vpop.f32.mrf.mxu0
        %4021 = vmatprep.mubr.f32.mxu0 0.0
        %4022 = vmatmul.mubr.f32.gmra.mxu0 %v3717
        %v4023 = vpop.f32.mrf.mxu0
        %v4024 = vadd.f32 0.0, %v4023
        %v4025 = vpop.f32.mrf.mxu0
        %4026 = vdwg.mxu0
        %v4027 = vadd.f32 %v3662, %v3789
        %v4028 = vadd.f32 %v3663, %v3794
        %v4029 = vadd.f32 %v3664, %v3799
        %v4030 = vadd.f32 %v3665, %v3804
        %v4031 = vadd.f32 %v3666, %v3809
        %v4032 = vadd.f32 %v3667, %v3814
        %v4033 = vadd.f32 %v3668, %v3819
        %v4034 = vadd.f32 %v3669, %v3824
        %v4035 = vadd.f32 %v3670, %v3829
        %v4036 = vadd.f32 %v3671, %v3834
        %v4037 = vadd.f32 %v3672, %v3839
        %v4038 = vadd.f32 %v3673, %v3844
        %v4039 = vadd.f32 %v3674, %v3849
        %v4040 = vadd.f32 %v3675, %v3854
        %v4041 = vadd.f32 %v3676, %v3859
        %v4042 = vadd.f32 %v3677, %v3864
        %v4043 = vadd.f32 %v3678, %v3869
        %v4044 = vadd.f32 %v3679, %v3874
        %v4045 = vadd.f32 %v3680, %v3879
        %v4046 = vadd.f32 %v3681, %v3884
        %v4047 = vadd.f32 %v3682, %v3889
        %v4048 = vadd.f32 %v3683, %v3894
        %v4049 = vadd.f32 %v3684, %v3899
        %v4050 = vadd.f32 %v3685, %v3904
        %v4051 = vadd.f32 %v3686, %v3909
        %v4052 = vadd.f32 %v3687, %v3914
        %v4053 = vadd.f32 %v3688, %v3919
        %v4054 = vadd.f32 %v3689, %v3924
        %v4055 = vadd.f32 %v3690, %v3929
        %v4056 = vadd.f32 %v3691, %v3934
        %v4057 = vadd.f32 %v3692, %v3939
        %v4058 = vadd.f32 %v3693, %v3944
        %v4059 = vadd.f32 %v3694, %v3949
        %v4060 = vadd.f32 %v3695, %v3954
        %v4061 = vadd.f32 %v3696, %v3959
        %v4062 = vadd.f32 %v3697, %v3964
        %v4063 = vadd.f32 %v3698, %v3969
        %v4064 = vadd.f32 %v3699, %v3974
        %v4065 = vadd.f32 %v3700, %v3979
        %v4066 = vadd.f32 %v3701, %v3984
        %v4067 = vadd.f32 %v3702, %v3989
        %v4068 = vadd.f32 %v3703, %v3994
        %v4069 = vadd.f32 %v3704, %v3999
        %v4070 = vadd.f32 %v3705, %v4004
        %v4071 = vadd.f32 %v3706, %v4009
        %v4072 = vadd.f32 %v3707, %v4014
        %v4073 = vadd.f32 %v3708, %v4019
        %v4074 = vadd.f32 %v3709, %v4024
        %v4075 = vld [vmem:[%s2] sm:$0xf]
        %v4076 = vld [vmem:[%s3] sm:$0x1]
        %v4078 = vlaneseq
        %v4079 = vshrl.u32 %v4078, 7
        %v4080 = vsub.s32 0, %v4079
        %v4081 = vrot.slane %v4076, %v4080
        %v4084 = vsel %vm370, %v4027, 0
        %v4087 = vsel %vm370, %v4028, 0
        %v4090 = vsel %vm370, %v4029, 0
        %v4093 = vsel %vm370, %v4030, 0
        %v4096 = vsel %vm370, %v4031, 0
        %v4099 = vsel %vm370, %v4032, 0
        %v4102 = vsel %vm370, %v4033, 0
        %v4105 = vsel %vm370, %v4034, 0
        %v4108 = vsel %vm370, %v4035, 0
        %v4111 = vsel %vm370, %v4036, 0
        %v4114 = vsel %vm370, %v4037, 0
        %v4117 = vsel %vm370, %v4038, 0
        %v4120 = vsel %vm370, %v4039, 0
        %v4123 = vsel %vm370, %v4040, 0
        %v4126 = vsel %vm370, %v4041, 0
        %v4129 = vsel %vm370, %v4042, 0
        %v4132 = vsel %vm370, %v4043, 0
        %v4135 = vsel %vm370, %v4044, 0
        %v4138 = vsel %vm370, %v4045, 0
        %v4141 = vsel %vm370, %v4046, 0
        %v4144 = vsel %vm370, %v4047, 0
        %v4147 = vsel %vm370, %v4048, 0
        %v4150 = vsel %vm370, %v4049, 0
        %v4153 = vsel %vm370, %v4050, 0
        %v4156 = vsel %vm370, %v4051, 0
        %v4159 = vsel %vm370, %v4052, 0
        %v4162 = vsel %vm370, %v4053, 0
        %v4165 = vsel %vm370, %v4054, 0
        %v4168 = vsel %vm370, %v4055, 0
        %v4171 = vsel %vm370, %v4056, 0
        %v4174 = vsel %vm370, %v4057, 0
        %v4177 = vsel %vm370, %v4058, 0
        %v4180 = vsel %vm370, %v4059, 0
        %v4183 = vsel %vm370, %v4060, 0
        %v4186 = vsel %vm370, %v4061, 0
        %v4189 = vsel %vm370, %v4062, 0
        %v4192 = vsel %vm370, %v4063, 0
        %v4195 = vsel %vm370, %v4064, 0
        %v4198 = vsel %vm370, %v4065, 0
        %v4201 = vsel %vm370, %v4066, 0
        %v4204 = vsel %vm370, %v4067, 0
        %v4207 = vsel %vm370, %v4068, 0
        %v4210 = vsel %vm370, %v4069, 0
        %v4213 = vsel %vm370, %v4070, 0
        %v4216 = vsel %vm370, %v4071, 0
        %v4219 = vsel %vm370, %v4072, 0
        %v4222 = vsel %vm370, %v4073, 0
        %v4225 = vsel %vm370, %v4074, 0
        %v4228 = vsel %vm515, %v4075, 0
        %4230 = vmatprep.subr.mxu0 0.0
        %4231 = vmatpush1.msra.mxu0 0.0
        %4232 = vmatprep.subr.mxu0 0.0
        %4233 = vmatpush1.msra.mxu0 0.0
        %4234 = vmatprep.subr.mxu0 0.0
        %4235 = vmatpush1.msra.mxu0 0.0
        %4236 = vmatprep.subr.mxu0 0.0
        %4237 = vmatpush1.msra.mxu0 0.0
        %4238 = vmatprep.subr.mxu0 0.0
        %4239 = vmatpush1.msra.mxu0 0.0
        %4240 = vmatprep.subr.mxu0 0.0
        %4241 = vmatpush1.msra.mxu0 0.0
        %4242 = vmatprep.subr.mxu0 0.0
        %4243 = vmatpush1.msra.mxu0 0.0
        %4244 = vmatprep.subr.mxu0 0.0
        %4245 = vmatpush1.msra.mxu0 0.0
        %4246 = vmatprep.subr.mxu0 0.0
        %4247 = vmatpush1.msra.mxu0 0.0
        %4248 = vmatprep.subr.mxu0 0.0
        %4249 = vmatpush1.msra.mxu0 0.0
        %4250 = vmatprep.subr.mxu0 0.0
        %4251 = vmatpush1.msra.mxu0 0.0
        %4252 = vmatprep.subr.mxu0 0.0
        %4253 = vmatpush1.msra.mxu0 0.0
        %4254 = vmatprep.subr.mxu0 0.0
        %4255 = vmatpush1.msra.mxu0 0.0
        %4256 = vmatprep.subr.mxu0 0.0
        %4257 = vmatpush1.msra.mxu0 0.0
        %4258 = vmatprep.subr.mxu0 0.0
        %4259 = vmatpush1.msra.mxu0 0.0
        %4260 = vmatprep.subr.mxu0 0.0
        %4261 = vmatpush1.msra.mxu0 %v4228
        %4262 = vmatprep.subr.mxu0 0.0
        %4263 = vmatpush2.msra.mxu0 0.0
        %4264 = vmatprep.subr.mxu0 0.0
        %4265 = vmatpush2.msra.mxu0 0.0
        %4266 = vmatprep.subr.mxu0 0.0
        %4267 = vmatpush2.msra.mxu0 0.0
        %4268 = vmatprep.subr.mxu0 0.0
        %4269 = vmatpush2.msra.mxu0 0.0
        %4270 = vmatprep.subr.mxu0 0.0
        %4271 = vmatpush2.msra.mxu0 0.0
        %4272 = vmatprep.subr.mxu0 0.0
        %4273 = vmatpush2.msra.mxu0 0.0
        %4274 = vmatprep.subr.mxu0 0.0
        %4275 = vmatpush2.msra.mxu0 0.0
        %4276 = vmatprep.subr.mxu0 0.0
        %4277 = vmatpush2.msra.mxu0 0.0
        %4278 = vmatprep.subr.mxu0 0.0
        %4279 = vmatpush2.msra.mxu0 0.0
        %4280 = vmatprep.subr.mxu0 0.0
        %4281 = vmatpush2.msra.mxu0 0.0
        %4282 = vmatprep.subr.mxu0 0.0
        %4283 = vmatpush2.msra.mxu0 0.0
        %4284 = vmatprep.subr.mxu0 0.0
        %4285 = vmatpush2.msra.mxu0 0.0
        %4286 = vmatprep.subr.mxu0 0.0
        %4287 = vmatpush2.msra.mxu0 0.0
        %4288 = vmatprep.subr.mxu0 0.0
        %4289 = vmatpush2.msra.mxu0 0.0
        %4290 = vmatprep.subr.mxu0 0.0
        %4291 = vmatpush2.msra.mxu0 0.0
        %4292 = vmatprep.subr.mxu0 0.0
        %4293 = vmatpush2.msra.mxu0 0.0
        %4294 = vmatprep.mubr.f32.mxu0 0.0
        %4295 = vmatmul.mubr.f32.gmra.mxu0 %v4084
        %v4296 = vpop.f32.mrf.mxu0
        %v4297 = vadd.f32 %v4081, %v4296
        %v4298 = vpop.f32.mrf.mxu0
        %4299 = vmatprep.mubr.f32.mxu0 0.0
        %4300 = vmatmul.mubr.f32.gmra.mxu0 %v4087
        %v4301 = vpop.f32.mrf.mxu0
        %v4302 = vadd.f32 %v4081, %v4301
        %v4303 = vpop.f32.mrf.mxu0
        %4304 = vmatprep.mubr.f32.mxu0 0.0
        %4305 = vmatmul.mubr.f32.gmra.mxu0 %v4090
        %v4306 = vpop.f32.mrf.mxu0
        %v4307 = vadd.f32 %v4081, %v4306
        %v4308 = vpop.f32.mrf.mxu0
        %4309 = vmatprep.mubr.f32.mxu0 0.0
        %4310 = vmatmul.mubr.f32.gmra.mxu0 %v4093
        %v4311 = vpop.f32.mrf.mxu0
        %v4312 = vadd.f32 %v4081, %v4311
        %v4313 = vpop.f32.mrf.mxu0
        %4314 = vmatprep.mubr.f32.mxu0 0.0
        %4315 = vmatmul.mubr.f32.gmra.mxu0 %v4096
        %v4316 = vpop.f32.mrf.mxu0
        %v4317 = vadd.f32 %v4081, %v4316
        %v4318 = vpop.f32.mrf.mxu0
        %4319 = vmatprep.mubr.f32.mxu0 0.0
        %4320 = vmatmul.mubr.f32.gmra.mxu0 %v4099
        %v4321 = vpop.f32.mrf.mxu0
        %v4322 = vadd.f32 %v4081, %v4321
        %v4323 = vpop.f32.mrf.mxu0
        %4324 = vmatprep.mubr.f32.mxu0 0.0
        %4325 = vmatmul.mubr.f32.gmra.mxu0 %v4102
        %v4326 = vpop.f32.mrf.mxu0
        %v4327 = vadd.f32 %v4081, %v4326
        %v4328 = vpop.f32.mrf.mxu0
        %4329 = vmatprep.mubr.f32.mxu0 0.0
        %4330 = vmatmul.mubr.f32.gmra.mxu0 %v4105
        %v4331 = vpop.f32.mrf.mxu0
        %v4332 = vadd.f32 %v4081, %v4331
        %v4333 = vpop.f32.mrf.mxu0
        %4334 = vmatprep.mubr.f32.mxu0 0.0
        %4335 = vmatmul.mubr.f32.gmra.mxu0 %v4108
        %v4336 = vpop.f32.mrf.mxu0
        %v4337 = vadd.f32 %v4081, %v4336
        %v4338 = vpop.f32.mrf.mxu0
        %4339 = vmatprep.mubr.f32.mxu0 0.0
        %4340 = vmatmul.mubr.f32.gmra.mxu0 %v4111
        %v4341 = vpop.f32.mrf.mxu0
        %v4342 = vadd.f32 %v4081, %v4341
        %v4343 = vpop.f32.mrf.mxu0
        %4344 = vmatprep.mubr.f32.mxu0 0.0
        %4345 = vmatmul.mubr.f32.gmra.mxu0 %v4114
        %v4346 = vpop.f32.mrf.mxu0
        %v4347 = vadd.f32 %v4081, %v4346
        %v4348 = vpop.f32.mrf.mxu0
        %4349 = vmatprep.mubr.f32.mxu0 0.0
        %4350 = vmatmul.mubr.f32.gmra.mxu0 %v4117
        %v4351 = vpop.f32.mrf.mxu0
        %v4352 = vadd.f32 %v4081, %v4351
        %v4353 = vpop.f32.mrf.mxu0
        %4354 = vmatprep.mubr.f32.mxu0 0.0
        %4355 = vmatmul.mubr.f32.gmra.mxu0 %v4120
        %v4356 = vpop.f32.mrf.mxu0
        %v4357 = vadd.f32 %v4081, %v4356
        %v4358 = vpop.f32.mrf.mxu0
        %4359 = vmatprep.mubr.f32.mxu0 0.0
        %4360 = vmatmul.mubr.f32.gmra.mxu0 %v4123
        %v4361 = vpop.f32.mrf.mxu0
        %v4362 = vadd.f32 %v4081, %v4361
        %v4363 = vpop.f32.mrf.mxu0
        %4364 = vmatprep.mubr.f32.mxu0 0.0
        %4365 = vmatmul.mubr.f32.gmra.mxu0 %v4126
        %v4366 = vpop.f32.mrf.mxu0
        %v4367 = vadd.f32 %v4081, %v4366
        %v4368 = vpop.f32.mrf.mxu0
        %4369 = vmatprep.mubr.f32.mxu0 0.0
        %4370 = vmatmul.mubr.f32.gmra.mxu0 %v4129
        %v4371 = vpop.f32.mrf.mxu0
        %v4372 = vadd.f32 %v4081, %v4371
        %v4373 = vpop.f32.mrf.mxu0
        %4374 = vmatprep.mubr.f32.mxu0 0.0
        %4375 = vmatmul.mubr.f32.gmra.mxu0 %v4132
        %v4376 = vpop.f32.mrf.mxu0
        %v4377 = vadd.f32 %v4081, %v4376
        %v4378 = vpop.f32.mrf.mxu0
        %4379 = vmatprep.mubr.f32.mxu0 0.0
        %4380 = vmatmul.mubr.f32.gmra.mxu0 %v4135
        %v4381 = vpop.f32.mrf.mxu0
        %v4382 = vadd.f32 %v4081, %v4381
        %v4383 = vpop.f32.mrf.mxu0
        %4384 = vmatprep.mubr.f32.mxu0 0.0
        %4385 = vmatmul.mubr.f32.gmra.mxu0 %v4138
        %v4386 = vpop.f32.mrf.mxu0
        %v4387 = vadd.f32 %v4081, %v4386
        %v4388 = vpop.f32.mrf.mxu0
        %4389 = vmatprep.mubr.f32.mxu0 0.0
        %4390 = vmatmul.mubr.f32.gmra.mxu0 %v4141
        %v4391 = vpop.f32.mrf.mxu0
        %v4392 = vadd.f32 %v4081, %v4391
        %v4393 = vpop.f32.mrf.mxu0
        %4394 = vmatprep.mubr.f32.mxu0 0.0
        %4395 = vmatmul.mubr.f32.gmra.mxu0 %v4144
        %v4396 = vpop.f32.mrf.mxu0
        %v4397 = vadd.f32 %v4081, %v4396
        %v4398 = vpop.f32.mrf.mxu0
        %4399 = vmatprep.mubr.f32.mxu0 0.0
        %4400 = vmatmul.mubr.f32.gmra.mxu0 %v4147
        %v4401 = vpop.f32.mrf.mxu0
        %v4402 = vadd.f32 %v4081, %v4401
        %v4403 = vpop.f32.mrf.mxu0
        %4404 = vmatprep.mubr.f32.mxu0 0.0
        %4405 = vmatmul.mubr.f32.gmra.mxu0 %v4150
        %v4406 = vpop.f32.mrf.mxu0
        %v4407 = vadd.f32 %v4081, %v4406
        %v4408 = vpop.f32.mrf.mxu0
        %4409 = vmatprep.mubr.f32.mxu0 0.0
        %4410 = vmatmul.mubr.f32.gmra.mxu0 %v4153
        %v4411 = vpop.f32.mrf.mxu0
        %v4412 = vadd.f32 %v4081, %v4411
        %v4413 = vpop.f32.mrf.mxu0
        %4414 = vmatprep.mubr.f32.mxu0 0.0
        %4415 = vmatmul.mubr.f32.gmra.mxu0 %v4156
        %v4416 = vpop.f32.mrf.mxu0
        %v4417 = vadd.f32 %v4081, %v4416
        %v4418 = vpop.f32.mrf.mxu0
        %4419 = vmatprep.mubr.f32.mxu0 0.0
        %4420 = vmatmul.mubr.f32.gmra.mxu0 %v4159
        %v4421 = vpop.f32.mrf.mxu0
        %v4422 = vadd.f32 %v4081, %v4421
        %v4423 = vpop.f32.mrf.mxu0
        %4424 = vmatprep.mubr.f32.mxu0 0.0
        %4425 = vmatmul.mubr.f32.gmra.mxu0 %v4162
        %v4426 = vpop.f32.mrf.mxu0
        %v4427 = vadd.f32 %v4081, %v4426
        %v4428 = vpop.f32.mrf.mxu0
        %4429 = vmatprep.mubr.f32.mxu0 0.0
        %4430 = vmatmul.mubr.f32.gmra.mxu0 %v4165
        %v4431 = vpop.f32.mrf.mxu0
        %v4432 = vadd.f32 %v4081, %v4431
        %v4433 = vpop.f32.mrf.mxu0
        %4434 = vmatprep.mubr.f32.mxu0 0.0
        %4435 = vmatmul.mubr.f32.gmra.mxu0 %v4168
        %v4436 = vpop.f32.mrf.mxu0
        %v4437 = vadd.f32 %v4081, %v4436
        %v4438 = vpop.f32.mrf.mxu0
        %4439 = vmatprep.mubr.f32.mxu0 0.0
        %4440 = vmatmul.mubr.f32.gmra.mxu0 %v4171
        %v4441 = vpop.f32.mrf.mxu0
        %v4442 = vadd.f32 %v4081, %v4441
        %v4443 = vpop.f32.mrf.mxu0
        %4444 = vmatprep.mubr.f32.mxu0 0.0
        %4445 = vmatmul.mubr.f32.gmra.mxu0 %v4174
        %v4446 = vpop.f32.mrf.mxu0
        %v4447 = vadd.f32 %v4081, %v4446
        %v4448 = vpop.f32.mrf.mxu0
        %4449 = vmatprep.mubr.f32.mxu0 0.0
        %4450 = vmatmul.mubr.f32.gmra.mxu0 %v4177
        %v4451 = vpop.f32.mrf.mxu0
        %v4452 = vadd.f32 %v4081, %v4451
        %v4453 = vpop.f32.mrf.mxu0
        %4454 = vmatprep.mubr.f32.mxu0 0.0
        %4455 = vmatmul.mubr.f32.gmra.mxu0 %v4180
        %v4456 = vpop.f32.mrf.mxu0
        %v4457 = vadd.f32 %v4081, %v4456
        %v4458 = vpop.f32.mrf.mxu0
        %4459 = vmatprep.mubr.f32.mxu0 0.0
        %4460 = vmatmul.mubr.f32.gmra.mxu0 %v4183
        %v4461 = vpop.f32.mrf.mxu0
        %v4462 = vadd.f32 %v4081, %v4461
        %v4463 = vpop.f32.mrf.mxu0
        %4464 = vmatprep.mubr.f32.mxu0 0.0
        %4465 = vmatmul.mubr.f32.gmra.mxu0 %v4186
        %v4466 = vpop.f32.mrf.mxu0
        %v4467 = vadd.f32 %v4081, %v4466
        %v4468 = vpop.f32.mrf.mxu0
        %4469 = vmatprep.mubr.f32.mxu0 0.0
        %4470 = vmatmul.mubr.f32.gmra.mxu0 %v4189
        %v4471 = vpop.f32.mrf.mxu0
        %v4472 = vadd.f32 %v4081, %v4471
        %v4473 = vpop.f32.mrf.mxu0
        %4474 = vmatprep.mubr.f32.mxu0 0.0
        %4475 = vmatmul.mubr.f32.gmra.mxu0 %v4192
        %v4476 = vpop.f32.mrf.mxu0
        %v4477 = vadd.f32 %v4081, %v4476
        %v4478 = vpop.f32.mrf.mxu0
        %4479 = vmatprep.mubr.f32.mxu0 0.0
        %4480 = vmatmul.mubr.f32.gmra.mxu0 %v4195
        %v4481 = vpop.f32.mrf.mxu0
        %v4482 = vadd.f32 %v4081, %v4481
        %v4483 = vpop.f32.mrf.mxu0
        %4484 = vmatprep.mubr.f32.mxu0 0.0
        %4485 = vmatmul.mubr.f32.gmra.mxu0 %v4198
        %v4486 = vpop.f32.mrf.mxu0
        %v4487 = vadd.f32 %v4081, %v4486
        %v4488 = vpop.f32.mrf.mxu0
        %4489 = vmatprep.mubr.f32.mxu0 0.0
        %4490 = vmatmul.mubr.f32.gmra.mxu0 %v4201
        %v4491 = vpop.f32.mrf.mxu0
        %v4492 = vadd.f32 %v4081, %v4491
        %v4493 = vpop.f32.mrf.mxu0
        %4494 = vmatprep.mubr.f32.mxu0 0.0
        %4495 = vmatmul.mubr.f32.gmra.mxu0 %v4204
        %v4496 = vpop.f32.mrf.mxu0
        %v4497 = vadd.f32 %v4081, %v4496
        %v4498 = vpop.f32.mrf.mxu0
        %4499 = vmatprep.mubr.f32.mxu0 0.0
        %4500 = vmatmul.mubr.f32.gmra.mxu0 %v4207
        %v4501 = vpop.f32.mrf.mxu0
        %v4502 = vadd.f32 %v4081, %v4501
        %v4503 = vpop.f32.mrf.mxu0
        %4504 = vmatprep.mubr.f32.mxu0 0.0
        %4505 = vmatmul.mubr.f32.gmra.mxu0 %v4210
        %v4506 = vpop.f32.mrf.mxu0
        %v4507 = vadd.f32 %v4081, %v4506
        %v4508 = vpop.f32.mrf.mxu0
        %4509 = vmatprep.mubr.f32.mxu0 0.0
        %4510 = vmatmul.mubr.f32.gmra.mxu0 %v4213
        %v4511 = vpop.f32.mrf.mxu0
        %v4512 = vadd.f32 %v4081, %v4511
        %v4513 = vpop.f32.mrf.mxu0
        %4514 = vmatprep.mubr.f32.mxu0 0.0
        %4515 = vmatmul.mubr.f32.gmra.mxu0 %v4216
        %v4516 = vpop.f32.mrf.mxu0
        %v4517 = vadd.f32 %v4081, %v4516
        %v4518 = vpop.f32.mrf.mxu0
        %4519 = vmatprep.mubr.f32.mxu0 0.0
        %4520 = vmatmul.mubr.f32.gmra.mxu0 %v4219
        %v4521 = vpop.f32.mrf.mxu0
        %v4522 = vadd.f32 %v4081, %v4521
        %v4523 = vpop.f32.mrf.mxu0
        %4524 = vmatprep.mubr.f32.mxu0 0.0
        %4525 = vmatmul.mubr.f32.gmra.mxu0 %v4222
        %v4526 = vpop.f32.mrf.mxu0
        %v4527 = vadd.f32 %v4081, %v4526
        %v4528 = vpop.f32.mrf.mxu0
        %4529 = vmatprep.mubr.f32.mxu0 0.0
        %4530 = vmatmul.mubr.f32.gmra.mxu0 %v4225
        %v4531 = vpop.f32.mrf.mxu0
        %v4532 = vadd.f32 %v4081, %v4531
        %v4533 = vpop.f32.mrf.mxu0
        %4534 = vdwg.mxu0
        %4535 = vst [vmem:[%s190] sm:$0xff] %v4297
        %4536 = vst [vmem:[%s190 + $0x8] sm:$0xff] %v4302
        %4537 = vst [vmem:[%s190 + $0x10] sm:$0xff] %v4307
        %4538 = vst [vmem:[%s190 + $0x18] sm:$0xff] %v4312
        %4539 = vst [vmem:[%s190 + $0x20] sm:$0xff] %v4317
        %4540 = vst [vmem:[%s190 + $0x28] sm:$0xff] %v4322
        %4541 = vst [vmem:[%s190 + $0x30] sm:$0xff] %v4327
        %4542 = vst [vmem:[%s190 + $0x38] sm:$0xff] %v4332
        %4543 = vst [vmem:[%s190 + $0x40] sm:$0xff] %v4337
        %4544 = vst [vmem:[%s190 + $0x48] sm:$0xff] %v4342
        %4545 = vst [vmem:[%s190 + $0x50] sm:$0xff] %v4347
        %4546 = vst [vmem:[%s190 + $0x58] sm:$0xff] %v4352
        %4547 = vst [vmem:[%s190 + $0x60] sm:$0xff] %v4357
        %4548 = vst [vmem:[%s190 + $0x68] sm:$0xff] %v4362
        %4549 = vst [vmem:[%s190 + $0x70] sm:$0xff] %v4367
        %4550 = vst [vmem:[%s190 + $0x78] sm:$0xff] %v4372
        %4551 = vst [vmem:[%s190 + $0x80] sm:$0xff] %v4377
        %4552 = vst [vmem:[%s190 + $0x88] sm:$0xff] %v4382
        %4553 = vst [vmem:[%s190 + $0x90] sm:$0xff] %v4387
        %4554 = vst [vmem:[%s190 + $0x98] sm:$0xff] %v4392
        %4555 = vst [vmem:[%s190 + $0xa0] sm:$0xff] %v4397
        %4556 = vst [vmem:[%s190 + $0xa8] sm:$0xff] %v4402
        %4557 = vst [vmem:[%s190 + $0xb0] sm:$0xff] %v4407
        %4558 = vst [vmem:[%s190 + $0xb8] sm:$0xff] %v4412
        %4559 = vst [vmem:[%s190 + $0xc0] sm:$0xff] %v4417
        %4560 = vst [vmem:[%s190 + $0xc8] sm:$0xff] %v4422
        %4561 = vst [vmem:[%s190 + $0xd0] sm:$0xff] %v4427
        %4562 = vst [vmem:[%s190 + $0xd8] sm:$0xff] %v4432
        %4563 = vst [vmem:[%s190 + $0xe0] sm:$0xff] %v4437
        %4564 = vst [vmem:[%s190 + $0xe8] sm:$0xff] %v4442
        %4565 = vst [vmem:[%s190 + $0xf0] sm:$0xff] %v4447
        %4566 = vst [vmem:[%s190 + $0xf8] sm:$0xff] %v4452
        %4567 = vst [vmem:[%s190 + $0x100] sm:$0xff] %v4457
        %4568 = vst [vmem:[%s190 + $0x108] sm:$0xff] %v4462
        %4569 = vst [vmem:[%s190 + $0x110] sm:$0xff] %v4467
        %4570 = vst [vmem:[%s190 + $0x118] sm:$0xff] %v4472
        %4571 = vst [vmem:[%s190 + $0x120] sm:$0xff] %v4477
        %4572 = vst [vmem:[%s190 + $0x128] sm:$0xff] %v4482
        %4573 = vst [vmem:[%s190 + $0x130] sm:$0xff] %v4487
        %4574 = vst [vmem:[%s190 + $0x138] sm:$0xff] %v4492
        %4575 = vst [vmem:[%s190 + $0x140] sm:$0xff] %v4497
        %4576 = vst [vmem:[%s190 + $0x148] sm:$0xff] %v4502
        %4577 = vst [vmem:[%s190 + $0x150] sm:$0xff] %v4507
        %4578 = vst [vmem:[%s190 + $0x158] sm:$0xff] %v4512
        %4579 = vst [vmem:[%s190 + $0x160] sm:$0xff] %v4517
        %4580 = vst [vmem:[%s190 + $0x168] sm:$0xff] %v4522
        %4581 = vst [vmem:[%s190 + $0x170] sm:$0xff] %v4527
        %4582 = vst [vmem:[%s190 + $0x178] sm:$0xff] %v4532
        %s4583 = sand.u32 %s115, 1
        %s4584 = scalar_lea.sflag [#allocation3], %s4583
        %s4585 = sand.u32 %s115, 1
        %s4586 = smul.addr %s4585, 384
        %s4587 = scalar_lea.vmem [#allocation2], %s4586
        // Predicated region
        $region37: #{tpu_custom_call.1} parent=35 // pred_check
          %p4588 = pneg %p125
        $region38: #{tpu_custom_call.1} parent=35 // pred_check_branch
          %4590 = sbr.rel (%p4588) target = $region40
        $region39: #{tpu_custom_call.1} parent=35 // pred_region
          %s4592 = ssub.s32 6144, 6144
          %4593 = vsyncadd %s4584, %s4592
          %s4594 = smul.addr %s18, 48
          %s4595 = smul.addr %s4594, 128
          %s4596 = scalar_lea.hbm %s4, %s4595
          %s4597 = sshll.u32 %s4587, 4
          %s4598 = int_to_ptr.vmem [resolvable:$true] %s4597
          %4603 = dma.vmem_to_hbm [thread:$0]  %s4598, 6144, %s4596, %s4584, 128, 128, 8
        $region40: #{tpu_custom_call.1} parent=35 // pred_fallthru
          _
      $region36: #{tpu_custom_call.1} parent=5 // pred_fallthru
        _
      %p4604 = scmp.le.s32.totalorder 2, %s13
      // Predicated region
      $region41: #{tpu_custom_call.1} parent=5 // pred_check
        %p4605 = pneg %p4604
      $region42: #{tpu_custom_call.1} parent=5 // pred_check_branch
        %4607 = sbr.rel (%p4605) target = $region44
      $region43: #{tpu_custom_call.1} parent=5 // pred_region
        %s4608 = ssub.s32 %s13, 2
        // Predicated region
        $region45: #{tpu_custom_call.1} parent=43 // pred_check
          %p4609 = pneg %p131
        $region46: #{tpu_custom_call.1} parent=43 // pred_check_branch
          %4611 = sbr.rel (%p4609) target = $region48
        $region47: #{tpu_custom_call.1} parent=43 // pred_region
          %s4612 = sand.u32 %s116, 1
          %s4613 = scalar_lea.sflag [#allocation3], %s4612
          %s4614 = sand.u32 %s116, 1
          %s4615 = smul.addr %s4614, 384
          %s4616 = scalar_lea.vmem [#allocation2], %s4615
          %4617 = dma.done %s4613, 6144
        $region48: #{tpu_custom_call.1} parent=43 // pred_fallthru
          _
      $region44: #{tpu_custom_call.1} parent=5 // pred_fallthru
        _
    $region6: #{tpu_custom_call.1} parent=1 // loop_footer
      %s17 = sadd.s32 1, %s13
    $region7: #{tpu_custom_call.1} parent=1 // loop_footer_branch
      %12 = sbr.rel target = $region3
    $region8: #{tpu_custom_call.1} parent=1 // loop_exit
      _
    %4618 = vsyncpa [#allocation3], 1
    %s4619 = scalar_lea.sflag [#allocation3], 1
    %4620 = vsyncpa %s4619, 1

</llo_original>
